<compile_context>
chip_gen: v7x
topology: tpu7x:2x2x1
jax: 0.10.0
libtpu: 0.0.40
codegen_flags: <defaults>
</compile_context>

<pallas_src>
import functools
import math

import jax
import jax.numpy as jnp
from jax.experimental import pallas as pl
from jax.experimental.pallas import tpu as pltpu

LAYER = [3, 10, 10, 10, 3]

_LANE = 128                        # vreg lane width
_SUBLANE = 8                       # vreg sublane count
_VREG_ROWS = _LANE * _SUBLANE      # 1024 batch rows == one dense f32 vreg / feature
_CHUNK_SUBLANES = 16               # inner-loop chunk = 2 vregs per feature plane
_DEFAULT_BLOCK_ROWS = 131072       # ~6 MiB double-buffered in+out per grid step
_MAX_BLOCK_ROWS = 262144           # keeps 2*(in+out) < 16 MiB v5e scoped-VMEM default


def mlp_kernel(p_ref, x_ref, o_ref, *, layer_sizes, chunk_sublanes):
    """Fused MLP with batch on (sublane, lane).

    p_ref: (P,) f32 scalar-prefetch ref in SMEM
           packed as [W1 (in,out row-major), b1, W2, b2, ...]
    x_ref: (d_in, tile_r, 128) f32 in VMEM -- each feature = dense vreg planes
    o_ref: (d_out, tile_r, 128) f32 in VMEM
    """
    n_layers = len(layer_sizes) - 1
    d_in0 = layer_sizes[0]
    d_out_last = layer_sizes[-1]

    # Hoist ALL scalar parameter reads above the row-chunk loop: they are
    # loop-invariant, and re-issuing ~293 SMEM loads per chunk would make the
    # scalar slot the binding unit instead of the VALU.
    off = 0
    layers = []
    for li in range(n_layers):
        d_in, d_out = layer_sizes[li], layer_sizes[li + 1]
        w = [[p_ref[off + k * d_out + j] for k in range(d_in)] for j in range(d_out)]
        b = [p_ref[off + d_in * d_out + j] for j in range(d_out)]
        layers.append((d_in, d_out, w, b))
        off += d_in * d_out + d_out

    tile_r = x_ref.shape[1]
    n_chunks = tile_r // chunk_sublanes   # tile_r is a multiple of chunk_sublanes

    # Inner loop over 16-sublane chunks keeps peak live vregs at
    # ~(10 + 10) planes * 2 vregs ≈ 40 (< 64-entry vreg file) even for very
    # large grid blocks, while the weight scalars above are reused every chunk.
    @pl.loop(0, n_chunks)
    def _(c):
        r0 = pl.multiple_of(c * chunk_sublanes, chunk_sublanes)
        rows = pl.ds(r0, chunk_sublanes)

        # Dense (chunk_sublanes, 128) f32 planes, one per input feature.
        h = [x_ref[k, rows, :] for k in range(d_in0)]
        for li, (d_in, d_out, w, b) in enumerate(layers):
            new_h = []
            for j in range(d_out):
                # VPU broadcast-FMA: scalar weight (sreg) x dense plane.
                acc = h[0] * w[j][0]
                for k in range(1, d_in):
                    acc = acc + h[k] * w[j][k]
                acc = acc + b[j]
                if li < n_layers - 1:
                    acc = jnp.tanh(acc)       # EUP slot; overlaps VALU work
                new_h.append(acc)
            h = new_h

        for j in range(d_out_last):
            o_ref[j, rows, :] = h[j]          # lane-dense, aligned stores


def pack_params(params):
    """Flatten [(W (in,out), b (out,)), ...] into one 1-D f32 vector for SMEM."""
    flat = []
    for w, b in params:
        flat.append(jnp.asarray(w, jnp.float32).reshape(-1))
        flat.append(jnp.asarray(b, jnp.float32).reshape(-1))
    return jnp.concatenate(flat)


def _choose_blocking(n, block_rows):
    """Pick (num_blocks, block_units) with block_units in 1024-row units."""
    units = pl.cdiv(n, _VREG_ROWS)                       # padded 1024-row units
    block_rows = min(max(int(block_rows), _VREG_ROWS), _MAX_BLOCK_ROWS)
    tgt_units = max(1, block_rows // _VREG_ROWS)
    num_blocks = pl.cdiv(units, tgt_units)
    # v7x megacore balance: with ("parallel",) the grid is split across 2 TCs,
    # so keep the block count even whenever there is work for both cores.
    if units >= 2 and num_blocks % 2 == 1:
        num_blocks += 1
    block_units = pl.cdiv(units, num_blocks)
    # Inner loop works on 16-sublane (2-vreg) chunks -> even number of units.
    if block_units % 2 == 1:
        block_units += 1
    return num_blocks, block_units


def mlp_forward(x, params, *, block_rows=_DEFAULT_BLOCK_ROWS):
    """x: (N, d_in) float32. params: list of (W (in,out), b (out,)) per layer."""
    layer_sizes = [params[0][0].shape[0]] + [w.shape[1] for w, _ in params]
    n, d_in = x.shape
    assert d_in == layer_sizes[0]
    d_out = layer_sizes[-1]

    num_blocks, block_units = _choose_blocking(n, block_rows)
    tile_r = block_units * _SUBLANE
    n_pad = num_blocks * block_units * _VREG_ROWS

    # Lane-dense layout plumbing: batch on (sublane, lane), features leading.
    # TODO(synk): if the surrounding model can produce/consume the planar
    # (d, N) layout directly, move this pad/transpose there (saves an HBM pass).
    xt = jnp.pad(x.astype(jnp.float32), ((0, n_pad - n), (0, 0))).T    # (d_in, n_pad)
    x_planes = xt.reshape(d_in, n_pad // _LANE, _LANE)

    p = pack_params(params)

    kernel = functools.partial(mlp_kernel, layer_sizes=tuple(layer_sizes),
                               chunk_sublanes=_CHUNK_SUBLANES)
    out_planes = pl.pallas_call(
        kernel,
        out_shape=jax.ShapeDtypeStruct((d_out, n_pad // _LANE, _LANE), jnp.float32),
        grid_spec=pltpu.PrefetchScalarGridSpec(
            # Packed params DMA'd to SMEM once, before the grid runs.
            num_scalar_prefetch=1,
            grid=(num_blocks,),
            in_specs=[
                pl.BlockSpec((d_in, tile_r, _LANE), lambda i, p: (0, i, 0)),
            ],
            out_specs=pl.BlockSpec((d_out, tile_r, _LANE), lambda i, p: (0, i, 0)),
        ),
        compiler_params=pltpu.CompilerParams(
            dimension_semantics=("parallel",),
        ),
    )(p, x_planes)

    # Undo the layout plumbing: (d_out, R, 128) -> (N, d_out), drop padding.
    return out_planes.reshape(d_out, n_pad).T[:n]


def init_params(key, layer_sizes):
    """Deterministic init mimicking torch.nn.Linear default U(-1/sqrt(fan_in), +)."""
    params = []
    for d_in, d_out in zip(layer_sizes[:-1], layer_sizes[1:]):
        key, kw, kb = jax.random.split(key, 3)
        bound = 1.0 / math.sqrt(d_in)
        w = jax.random.uniform(kw, (d_in, d_out), jnp.float32, -bound, bound)
        b = jax.random.uniform(kb, (d_out,), jnp.float32, -bound, bound)
        params.append((w, b))
    return params


def reference_forward(x, params):
    h = x
    for i, (w, b) in enumerate(params):
        h = h @ w + b
        if i < len(params) - 1:
            h = jnp.tanh(h)
    return h


if __name__ == "__main__":
    key = jax.random.PRNGKey(0)
    key, kx = jax.random.split(key)

    # Not a multiple of 1024 -> exercises padding; blocking logic splits this
    # into 2 even grid blocks (v7x 2-TC balance) with a multi-chunk inner loop.
    n = 5000
    x = jax.random.normal(kx, (n, LAYER[0]), jnp.float32)
    params = init_params(key, LAYER)

    y = mlp_forward(x, params)
    y = jax.block_until_ready(y)

    y_ref = reference_forward(x, params)
    assert y.shape == (n, LAYER[-1])
    max_err = float(jnp.max(jnp.abs(y - y_ref)))
    assert jnp.allclose(y, y_ref, atol=1e-4, rtol=1e-4), max_err

    print("KERNEL_OK")
</pallas_src>

<mosaic_0001>
module attributes {stable_mosaic.version = 11 : i64} {
  func.func @mlp_kernel(%arg0: i32, %arg1: memref<293xf32, #tpu.memory_space<smem>>, %arg2: memref<3x32x128xf32, #tpu.memory_space<vmem>>, %arg3: memref<3x32x128xf32, #tpu.memory_space<vmem>>) attributes {dimension_semantics = [#tpu.dimension_semantics<parallel>], iteration_bounds = array<i64: 2>, scalar_prefetch = 1 : i64, scratch_operands = 0 : i64, tpu.core_type = #tpu.core_type<tc>, window_params = [{transform_indices = @transform_0, window_bounds = array<i64: 3, 32, 128>}, {transform_indices = @transform_1, window_bounds = array<i64: 3, 32, 128>}]} {
    %c0 = arith.constant 0 : index
    %0 = memref.load %arg1[%c0] : memref<293xf32, #tpu.memory_space<smem>>
    %c10 = arith.constant 10 : index
    %1 = memref.load %arg1[%c10] : memref<293xf32, #tpu.memory_space<smem>>
    %c20 = arith.constant 20 : index
    %2 = memref.load %arg1[%c20] : memref<293xf32, #tpu.memory_space<smem>>
    %c1 = arith.constant 1 : index
    %3 = memref.load %arg1[%c1] : memref<293xf32, #tpu.memory_space<smem>>
    %c11 = arith.constant 11 : index
    %4 = memref.load %arg1[%c11] : memref<293xf32, #tpu.memory_space<smem>>
    %c21 = arith.constant 21 : index
    %5 = memref.load %arg1[%c21] : memref<293xf32, #tpu.memory_space<smem>>
    %c2 = arith.constant 2 : index
    %6 = memref.load %arg1[%c2] : memref<293xf32, #tpu.memory_space<smem>>
    %c12 = arith.constant 12 : index
    %7 = memref.load %arg1[%c12] : memref<293xf32, #tpu.memory_space<smem>>
    %c22 = arith.constant 22 : index
    %8 = memref.load %arg1[%c22] : memref<293xf32, #tpu.memory_space<smem>>
    %c3 = arith.constant 3 : index
    %9 = memref.load %arg1[%c3] : memref<293xf32, #tpu.memory_space<smem>>
    %c13 = arith.constant 13 : index
    %10 = memref.load %arg1[%c13] : memref<293xf32, #tpu.memory_space<smem>>
    %c23 = arith.constant 23 : index
    %11 = memref.load %arg1[%c23] : memref<293xf32, #tpu.memory_space<smem>>
    %c4 = arith.constant 4 : index
    %12 = memref.load %arg1[%c4] : memref<293xf32, #tpu.memory_space<smem>>
    %c14 = arith.constant 14 : index
    %13 = memref.load %arg1[%c14] : memref<293xf32, #tpu.memory_space<smem>>
    %c24 = arith.constant 24 : index
    %14 = memref.load %arg1[%c24] : memref<293xf32, #tpu.memory_space<smem>>
    %c5 = arith.constant 5 : index
    %15 = memref.load %arg1[%c5] : memref<293xf32, #tpu.memory_space<smem>>
    %c15 = arith.constant 15 : index
    %16 = memref.load %arg1[%c15] : memref<293xf32, #tpu.memory_space<smem>>
    %c25 = arith.constant 25 : index
    %17 = memref.load %arg1[%c25] : memref<293xf32, #tpu.memory_space<smem>>
    %c6 = arith.constant 6 : index
    %18 = memref.load %arg1[%c6] : memref<293xf32, #tpu.memory_space<smem>>
    %c16 = arith.constant 16 : index
    %19 = memref.load %arg1[%c16] : memref<293xf32, #tpu.memory_space<smem>>
    %c26 = arith.constant 26 : index
    %20 = memref.load %arg1[%c26] : memref<293xf32, #tpu.memory_space<smem>>
    %c7 = arith.constant 7 : index
    %21 = memref.load %arg1[%c7] : memref<293xf32, #tpu.memory_space<smem>>
    %c17 = arith.constant 17 : index
    %22 = memref.load %arg1[%c17] : memref<293xf32, #tpu.memory_space<smem>>
    %c27 = arith.constant 27 : index
    %23 = memref.load %arg1[%c27] : memref<293xf32, #tpu.memory_space<smem>>
    %c8 = arith.constant 8 : index
    %24 = memref.load %arg1[%c8] : memref<293xf32, #tpu.memory_space<smem>>
    %c18 = arith.constant 18 : index
    %25 = memref.load %arg1[%c18] : memref<293xf32, #tpu.memory_space<smem>>
    %c28 = arith.constant 28 : index
    %26 = memref.load %arg1[%c28] : memref<293xf32, #tpu.memory_space<smem>>
    %c9 = arith.constant 9 : index
    %27 = memref.load %arg1[%c9] : memref<293xf32, #tpu.memory_space<smem>>
    %c19 = arith.constant 19 : index
    %28 = memref.load %arg1[%c19] : memref<293xf32, #tpu.memory_space<smem>>
    %c29 = arith.constant 29 : index
    %29 = memref.load %arg1[%c29] : memref<293xf32, #tpu.memory_space<smem>>
    %c30 = arith.constant 30 : index
    %30 = memref.load %arg1[%c30] : memref<293xf32, #tpu.memory_space<smem>>
    %c31 = arith.constant 31 : index
    %31 = memref.load %arg1[%c31] : memref<293xf32, #tpu.memory_space<smem>>
    %c32 = arith.constant 32 : index
    %32 = memref.load %arg1[%c32] : memref<293xf32, #tpu.memory_space<smem>>
    %c33 = arith.constant 33 : index
    %33 = memref.load %arg1[%c33] : memref<293xf32, #tpu.memory_space<smem>>
    %c34 = arith.constant 34 : index
    %34 = memref.load %arg1[%c34] : memref<293xf32, #tpu.memory_space<smem>>
    %c35 = arith.constant 35 : index
    %35 = memref.load %arg1[%c35] : memref<293xf32, #tpu.memory_space<smem>>
    %c36 = arith.constant 36 : index
    %36 = memref.load %arg1[%c36] : memref<293xf32, #tpu.memory_space<smem>>
    %c37 = arith.constant 37 : index
    %37 = memref.load %arg1[%c37] : memref<293xf32, #tpu.memory_space<smem>>
    %c38 = arith.constant 38 : index
    %38 = memref.load %arg1[%c38] : memref<293xf32, #tpu.memory_space<smem>>
    %c39 = arith.constant 39 : index
    %39 = memref.load %arg1[%c39] : memref<293xf32, #tpu.memory_space<smem>>
    %c40 = arith.constant 40 : index
    %40 = memref.load %arg1[%c40] : memref<293xf32, #tpu.memory_space<smem>>
    %c50 = arith.constant 50 : index
    %41 = memref.load %arg1[%c50] : memref<293xf32, #tpu.memory_space<smem>>
    %c60 = arith.constant 60 : index
    %42 = memref.load %arg1[%c60] : memref<293xf32, #tpu.memory_space<smem>>
    %c70 = arith.constant 70 : index
    %43 = memref.load %arg1[%c70] : memref<293xf32, #tpu.memory_space<smem>>
    %c80 = arith.constant 80 : index
    %44 = memref.load %arg1[%c80] : memref<293xf32, #tpu.memory_space<smem>>
    %c90 = arith.constant 90 : index
    %45 = memref.load %arg1[%c90] : memref<293xf32, #tpu.memory_space<smem>>
    %c100 = arith.constant 100 : index
    %46 = memref.load %arg1[%c100] : memref<293xf32, #tpu.memory_space<smem>>
    %c110 = arith.constant 110 : index
    %47 = memref.load %arg1[%c110] : memref<293xf32, #tpu.memory_space<smem>>
    %c120 = arith.constant 120 : index
    %48 = memref.load %arg1[%c120] : memref<293xf32, #tpu.memory_space<smem>>
    %c130 = arith.constant 130 : index
    %49 = memref.load %arg1[%c130] : memref<293xf32, #tpu.memory_space<smem>>
    %c41 = arith.constant 41 : index
    %50 = memref.load %arg1[%c41] : memref<293xf32, #tpu.memory_space<smem>>
    %c51 = arith.constant 51 : index
    %51 = memref.load %arg1[%c51] : memref<293xf32, #tpu.memory_space<smem>>
    %c61 = arith.constant 61 : index
    %52 = memref.load %arg1[%c61] : memref<293xf32, #tpu.memory_space<smem>>
    %c71 = arith.constant 71 : index
    %53 = memref.load %arg1[%c71] : memref<293xf32, #tpu.memory_space<smem>>
    %c81 = arith.constant 81 : index
    %54 = memref.load %arg1[%c81] : memref<293xf32, #tpu.memory_space<smem>>
    %c91 = arith.constant 91 : index
    %55 = memref.load %arg1[%c91] : memref<293xf32, #tpu.memory_space<smem>>
    %c101 = arith.constant 101 : index
    %56 = memref.load %arg1[%c101] : memref<293xf32, #tpu.memory_space<smem>>
    %c111 = arith.constant 111 : index
    %57 = memref.load %arg1[%c111] : memref<293xf32, #tpu.memory_space<smem>>
    %c121 = arith.constant 121 : index
    %58 = memref.load %arg1[%c121] : memref<293xf32, #tpu.memory_space<smem>>
    %c131 = arith.constant 131 : index
    %59 = memref.load %arg1[%c131] : memref<293xf32, #tpu.memory_space<smem>>
    %c42 = arith.constant 42 : index
    %60 = memref.load %arg1[%c42] : memref<293xf32, #tpu.memory_space<smem>>
    %c52 = arith.constant 52 : index
    %61 = memref.load %arg1[%c52] : memref<293xf32, #tpu.memory_space<smem>>
    %c62 = arith.constant 62 : index
    %62 = memref.load %arg1[%c62] : memref<293xf32, #tpu.memory_space<smem>>
    %c72 = arith.constant 72 : index
    %63 = memref.load %arg1[%c72] : memref<293xf32, #tpu.memory_space<smem>>
    %c82 = arith.constant 82 : index
    %64 = memref.load %arg1[%c82] : memref<293xf32, #tpu.memory_space<smem>>
    %c92 = arith.constant 92 : index
    %65 = memref.load %arg1[%c92] : memref<293xf32, #tpu.memory_space<smem>>
    %c102 = arith.constant 102 : index
    %66 = memref.load %arg1[%c102] : memref<293xf32, #tpu.memory_space<smem>>
    %c112 = arith.constant 112 : index
    %67 = memref.load %arg1[%c112] : memref<293xf32, #tpu.memory_space<smem>>
    %c122 = arith.constant 122 : index
    %68 = memref.load %arg1[%c122] : memref<293xf32, #tpu.memory_space<smem>>
    %c132 = arith.constant 132 : index
    %69 = memref.load %arg1[%c132] : memref<293xf32, #tpu.memory_space<smem>>
    %c43 = arith.constant 43 : index
    %70 = memref.load %arg1[%c43] : memref<293xf32, #tpu.memory_space<smem>>
    %c53 = arith.constant 53 : index
    %71 = memref.load %arg1[%c53] : memref<293xf32, #tpu.memory_space<smem>>
    %c63 = arith.constant 63 : index
    %72 = memref.load %arg1[%c63] : memref<293xf32, #tpu.memory_space<smem>>
    %c73 = arith.constant 73 : index
    %73 = memref.load %arg1[%c73] : memref<293xf32, #tpu.memory_space<smem>>
    %c83 = arith.constant 83 : index
    %74 = memref.load %arg1[%c83] : memref<293xf32, #tpu.memory_space<smem>>
    %c93 = arith.constant 93 : index
    %75 = memref.load %arg1[%c93] : memref<293xf32, #tpu.memory_space<smem>>
    %c103 = arith.constant 103 : index
    %76 = memref.load %arg1[%c103] : memref<293xf32, #tpu.memory_space<smem>>
    %c113 = arith.constant 113 : index
    %77 = memref.load %arg1[%c113] : memref<293xf32, #tpu.memory_space<smem>>
    %c123 = arith.constant 123 : index
    %78 = memref.load %arg1[%c123] : memref<293xf32, #tpu.memory_space<smem>>
    %c133 = arith.constant 133 : index
    %79 = memref.load %arg1[%c133] : memref<293xf32, #tpu.memory_space<smem>>
    %c44 = arith.constant 44 : index
    %80 = memref.load %arg1[%c44] : memref<293xf32, #tpu.memory_space<smem>>
    %c54 = arith.constant 54 : index
    %81 = memref.load %arg1[%c54] : memref<293xf32, #tpu.memory_space<smem>>
    %c64 = arith.constant 64 : index
    %82 = memref.load %arg1[%c64] : memref<293xf32, #tpu.memory_space<smem>>
    %c74 = arith.constant 74 : index
    %83 = memref.load %arg1[%c74] : memref<293xf32, #tpu.memory_space<smem>>
    %c84 = arith.constant 84 : index
    %84 = memref.load %arg1[%c84] : memref<293xf32, #tpu.memory_space<smem>>
    %c94 = arith.constant 94 : index
    %85 = memref.load %arg1[%c94] : memref<293xf32, #tpu.memory_space<smem>>
    %c104 = arith.constant 104 : index
    %86 = memref.load %arg1[%c104] : memref<293xf32, #tpu.memory_space<smem>>
    %c114 = arith.constant 114 : index
    %87 = memref.load %arg1[%c114] : memref<293xf32, #tpu.memory_space<smem>>
    %c124 = arith.constant 124 : index
    %88 = memref.load %arg1[%c124] : memref<293xf32, #tpu.memory_space<smem>>
    %c134 = arith.constant 134 : index
    %89 = memref.load %arg1[%c134] : memref<293xf32, #tpu.memory_space<smem>>
    %c45 = arith.constant 45 : index
    %90 = memref.load %arg1[%c45] : memref<293xf32, #tpu.memory_space<smem>>
    %c55 = arith.constant 55 : index
    %91 = memref.load %arg1[%c55] : memref<293xf32, #tpu.memory_space<smem>>
    %c65 = arith.constant 65 : index
    %92 = memref.load %arg1[%c65] : memref<293xf32, #tpu.memory_space<smem>>
    %c75 = arith.constant 75 : index
    %93 = memref.load %arg1[%c75] : memref<293xf32, #tpu.memory_space<smem>>
    %c85 = arith.constant 85 : index
    %94 = memref.load %arg1[%c85] : memref<293xf32, #tpu.memory_space<smem>>
    %c95 = arith.constant 95 : index
    %95 = memref.load %arg1[%c95] : memref<293xf32, #tpu.memory_space<smem>>
    %c105 = arith.constant 105 : index
    %96 = memref.load %arg1[%c105] : memref<293xf32, #tpu.memory_space<smem>>
    %c115 = arith.constant 115 : index
    %97 = memref.load %arg1[%c115] : memref<293xf32, #tpu.memory_space<smem>>
    %c125 = arith.constant 125 : index
    %98 = memref.load %arg1[%c125] : memref<293xf32, #tpu.memory_space<smem>>
    %c135 = arith.constant 135 : index
    %99 = memref.load %arg1[%c135] : memref<293xf32, #tpu.memory_space<smem>>
    %c46 = arith.constant 46 : index
    %100 = memref.load %arg1[%c46] : memref<293xf32, #tpu.memory_space<smem>>
    %c56 = arith.constant 56 : index
    %101 = memref.load %arg1[%c56] : memref<293xf32, #tpu.memory_space<smem>>
    %c66 = arith.constant 66 : index
    %102 = memref.load %arg1[%c66] : memref<293xf32, #tpu.memory_space<smem>>
    %c76 = arith.constant 76 : index
    %103 = memref.load %arg1[%c76] : memref<293xf32, #tpu.memory_space<smem>>
    %c86 = arith.constant 86 : index
    %104 = memref.load %arg1[%c86] : memref<293xf32, #tpu.memory_space<smem>>
    %c96 = arith.constant 96 : index
    %105 = memref.load %arg1[%c96] : memref<293xf32, #tpu.memory_space<smem>>
    %c106 = arith.constant 106 : index
    %106 = memref.load %arg1[%c106] : memref<293xf32, #tpu.memory_space<smem>>
    %c116 = arith.constant 116 : index
    %107 = memref.load %arg1[%c116] : memref<293xf32, #tpu.memory_space<smem>>
    %c126 = arith.constant 126 : index
    %108 = memref.load %arg1[%c126] : memref<293xf32, #tpu.memory_space<smem>>
    %c136 = arith.constant 136 : index
    %109 = memref.load %arg1[%c136] : memref<293xf32, #tpu.memory_space<smem>>
    %c47 = arith.constant 47 : index
    %110 = memref.load %arg1[%c47] : memref<293xf32, #tpu.memory_space<smem>>
    %c57 = arith.constant 57 : index
    %111 = memref.load %arg1[%c57] : memref<293xf32, #tpu.memory_space<smem>>
    %c67 = arith.constant 67 : index
    %112 = memref.load %arg1[%c67] : memref<293xf32, #tpu.memory_space<smem>>
    %c77 = arith.constant 77 : index
    %113 = memref.load %arg1[%c77] : memref<293xf32, #tpu.memory_space<smem>>
    %c87 = arith.constant 87 : index
    %114 = memref.load %arg1[%c87] : memref<293xf32, #tpu.memory_space<smem>>
    %c97 = arith.constant 97 : index
    %115 = memref.load %arg1[%c97] : memref<293xf32, #tpu.memory_space<smem>>
    %c107 = arith.constant 107 : index
    %116 = memref.load %arg1[%c107] : memref<293xf32, #tpu.memory_space<smem>>
    %c117 = arith.constant 117 : index
    %117 = memref.load %arg1[%c117] : memref<293xf32, #tpu.memory_space<smem>>
    %c127 = arith.constant 127 : index
    %118 = memref.load %arg1[%c127] : memref<293xf32, #tpu.memory_space<smem>>
    %c137 = arith.constant 137 : index
    %119 = memref.load %arg1[%c137] : memref<293xf32, #tpu.memory_space<smem>>
    %c48 = arith.constant 48 : index
    %120 = memref.load %arg1[%c48] : memref<293xf32, #tpu.memory_space<smem>>
    %c58 = arith.constant 58 : index
    %121 = memref.load %arg1[%c58] : memref<293xf32, #tpu.memory_space<smem>>
    %c68 = arith.constant 68 : index
    %122 = memref.load %arg1[%c68] : memref<293xf32, #tpu.memory_space<smem>>
    %c78 = arith.constant 78 : index
    %123 = memref.load %arg1[%c78] : memref<293xf32, #tpu.memory_space<smem>>
    %c88 = arith.constant 88 : index
    %124 = memref.load %arg1[%c88] : memref<293xf32, #tpu.memory_space<smem>>
    %c98 = arith.constant 98 : index
    %125 = memref.load %arg1[%c98] : memref<293xf32, #tpu.memory_space<smem>>
    %c108 = arith.constant 108 : index
    %126 = memref.load %arg1[%c108] : memref<293xf32, #tpu.memory_space<smem>>
    %c118 = arith.constant 118 : index
    %127 = memref.load %arg1[%c118] : memref<293xf32, #tpu.memory_space<smem>>
    %c128 = arith.constant 128 : index
    %128 = memref.load %arg1[%c128] : memref<293xf32, #tpu.memory_space<smem>>
    %c138 = arith.constant 138 : index
    %129 = memref.load %arg1[%c138] : memref<293xf32, #tpu.memory_space<smem>>
    %c49 = arith.constant 49 : index
    %130 = memref.load %arg1[%c49] : memref<293xf32, #tpu.memory_space<smem>>
    %c59 = arith.constant 59 : index
    %131 = memref.load %arg1[%c59] : memref<293xf32, #tpu.memory_space<smem>>
    %c69 = arith.constant 69 : index
    %132 = memref.load %arg1[%c69] : memref<293xf32, #tpu.memory_space<smem>>
    %c79 = arith.constant 79 : index
    %133 = memref.load %arg1[%c79] : memref<293xf32, #tpu.memory_space<smem>>
    %c89 = arith.constant 89 : index
    %134 = memref.load %arg1[%c89] : memref<293xf32, #tpu.memory_space<smem>>
    %c99 = arith.constant 99 : index
    %135 = memref.load %arg1[%c99] : memref<293xf32, #tpu.memory_space<smem>>
    %c109 = arith.constant 109 : index
    %136 = memref.load %arg1[%c109] : memref<293xf32, #tpu.memory_space<smem>>
    %c119 = arith.constant 119 : index
    %137 = memref.load %arg1[%c119] : memref<293xf32, #tpu.memory_space<smem>>
    %c129 = arith.constant 129 : index
    %138 = memref.load %arg1[%c129] : memref<293xf32, #tpu.memory_space<smem>>
    %c139 = arith.constant 139 : index
    %139 = memref.load %arg1[%c139] : memref<293xf32, #tpu.memory_space<smem>>
    %c140 = arith.constant 140 : index
    %140 = memref.load %arg1[%c140] : memref<293xf32, #tpu.memory_space<smem>>
    %c141 = arith.constant 141 : index
    %141 = memref.load %arg1[%c141] : memref<293xf32, #tpu.memory_space<smem>>
    %c142 = arith.constant 142 : index
    %142 = memref.load %arg1[%c142] : memref<293xf32, #tpu.memory_space<smem>>
    %c143 = arith.constant 143 : index
    %143 = memref.load %arg1[%c143] : memref<293xf32, #tpu.memory_space<smem>>
    %c144 = arith.constant 144 : index
    %144 = memref.load %arg1[%c144] : memref<293xf32, #tpu.memory_space<smem>>
    %c145 = arith.constant 145 : index
    %145 = memref.load %arg1[%c145] : memref<293xf32, #tpu.memory_space<smem>>
    %c146 = arith.constant 146 : index
    %146 = memref.load %arg1[%c146] : memref<293xf32, #tpu.memory_space<smem>>
    %c147 = arith.constant 147 : index
    %147 = memref.load %arg1[%c147] : memref<293xf32, #tpu.memory_space<smem>>
    %c148 = arith.constant 148 : index
    %148 = memref.load %arg1[%c148] : memref<293xf32, #tpu.memory_space<smem>>
    %c149 = arith.constant 149 : index
    %149 = memref.load %arg1[%c149] : memref<293xf32, #tpu.memory_space<smem>>
    %c150 = arith.constant 150 : index
    %150 = memref.load %arg1[%c150] : memref<293xf32, #tpu.memory_space<smem>>
    %c160 = arith.constant 160 : index
    %151 = memref.load %arg1[%c160] : memref<293xf32, #tpu.memory_space<smem>>
    %c170 = arith.constant 170 : index
    %152 = memref.load %arg1[%c170] : memref<293xf32, #tpu.memory_space<smem>>
    %c180 = arith.constant 180 : index
    %153 = memref.load %arg1[%c180] : memref<293xf32, #tpu.memory_space<smem>>
    %c190 = arith.constant 190 : index
    %154 = memref.load %arg1[%c190] : memref<293xf32, #tpu.memory_space<smem>>
    %c200 = arith.constant 200 : index
    %155 = memref.load %arg1[%c200] : memref<293xf32, #tpu.memory_space<smem>>
    %c210 = arith.constant 210 : index
    %156 = memref.load %arg1[%c210] : memref<293xf32, #tpu.memory_space<smem>>
    %c220 = arith.constant 220 : index
    %157 = memref.load %arg1[%c220] : memref<293xf32, #tpu.memory_space<smem>>
    %c230 = arith.constant 230 : index
    %158 = memref.load %arg1[%c230] : memref<293xf32, #tpu.memory_space<smem>>
    %c240 = arith.constant 240 : index
    %159 = memref.load %arg1[%c240] : memref<293xf32, #tpu.memory_space<smem>>
    %c151 = arith.constant 151 : index
    %160 = memref.load %arg1[%c151] : memref<293xf32, #tpu.memory_space<smem>>
    %c161 = arith.constant 161 : index
    %161 = memref.load %arg1[%c161] : memref<293xf32, #tpu.memory_space<smem>>
    %c171 = arith.constant 171 : index
    %162 = memref.load %arg1[%c171] : memref<293xf32, #tpu.memory_space<smem>>
    %c181 = arith.constant 181 : index
    %163 = memref.load %arg1[%c181] : memref<293xf32, #tpu.memory_space<smem>>
    %c191 = arith.constant 191 : index
    %164 = memref.load %arg1[%c191] : memref<293xf32, #tpu.memory_space<smem>>
    %c201 = arith.constant 201 : index
    %165 = memref.load %arg1[%c201] : memref<293xf32, #tpu.memory_space<smem>>
    %c211 = arith.constant 211 : index
    %166 = memref.load %arg1[%c211] : memref<293xf32, #tpu.memory_space<smem>>
    %c221 = arith.constant 221 : index
    %167 = memref.load %arg1[%c221] : memref<293xf32, #tpu.memory_space<smem>>
    %c231 = arith.constant 231 : index
    %168 = memref.load %arg1[%c231] : memref<293xf32, #tpu.memory_space<smem>>
    %c241 = arith.constant 241 : index
    %169 = memref.load %arg1[%c241] : memref<293xf32, #tpu.memory_space<smem>>
    %c152 = arith.constant 152 : index
    %170 = memref.load %arg1[%c152] : memref<293xf32, #tpu.memory_space<smem>>
    %c162 = arith.constant 162 : index
    %171 = memref.load %arg1[%c162] : memref<293xf32, #tpu.memory_space<smem>>
    %c172 = arith.constant 172 : index
    %172 = memref.load %arg1[%c172] : memref<293xf32, #tpu.memory_space<smem>>
    %c182 = arith.constant 182 : index
    %173 = memref.load %arg1[%c182] : memref<293xf32, #tpu.memory_space<smem>>
    %c192 = arith.constant 192 : index
    %174 = memref.load %arg1[%c192] : memref<293xf32, #tpu.memory_space<smem>>
    %c202 = arith.constant 202 : index
    %175 = memref.load %arg1[%c202] : memref<293xf32, #tpu.memory_space<smem>>
    %c212 = arith.constant 212 : index
    %176 = memref.load %arg1[%c212] : memref<293xf32, #tpu.memory_space<smem>>
    %c222 = arith.constant 222 : index
    %177 = memref.load %arg1[%c222] : memref<293xf32, #tpu.memory_space<smem>>
    %c232 = arith.constant 232 : index
    %178 = memref.load %arg1[%c232] : memref<293xf32, #tpu.memory_space<smem>>
    %c242 = arith.constant 242 : index
    %179 = memref.load %arg1[%c242] : memref<293xf32, #tpu.memory_space<smem>>
    %c153 = arith.constant 153 : index
    %180 = memref.load %arg1[%c153] : memref<293xf32, #tpu.memory_space<smem>>
    %c163 = arith.constant 163 : index
    %181 = memref.load %arg1[%c163] : memref<293xf32, #tpu.memory_space<smem>>
    %c173 = arith.constant 173 : index
    %182 = memref.load %arg1[%c173] : memref<293xf32, #tpu.memory_space<smem>>
    %c183 = arith.constant 183 : index
    %183 = memref.load %arg1[%c183] : memref<293xf32, #tpu.memory_space<smem>>
    %c193 = arith.constant 193 : index
    %184 = memref.load %arg1[%c193] : memref<293xf32, #tpu.memory_space<smem>>
    %c203 = arith.constant 203 : index
    %185 = memref.load %arg1[%c203] : memref<293xf32, #tpu.memory_space<smem>>
    %c213 = arith.constant 213 : index
    %186 = memref.load %arg1[%c213] : memref<293xf32, #tpu.memory_space<smem>>
    %c223 = arith.constant 223 : index
    %187 = memref.load %arg1[%c223] : memref<293xf32, #tpu.memory_space<smem>>
    %c233 = arith.constant 233 : index
    %188 = memref.load %arg1[%c233] : memref<293xf32, #tpu.memory_space<smem>>
    %c243 = arith.constant 243 : index
    %189 = memref.load %arg1[%c243] : memref<293xf32, #tpu.memory_space<smem>>
    %c154 = arith.constant 154 : index
    %190 = memref.load %arg1[%c154] : memref<293xf32, #tpu.memory_space<smem>>
    %c164 = arith.constant 164 : index
    %191 = memref.load %arg1[%c164] : memref<293xf32, #tpu.memory_space<smem>>
    %c174 = arith.constant 174 : index
    %192 = memref.load %arg1[%c174] : memref<293xf32, #tpu.memory_space<smem>>
    %c184 = arith.constant 184 : index
    %193 = memref.load %arg1[%c184] : memref<293xf32, #tpu.memory_space<smem>>
    %c194 = arith.constant 194 : index
    %194 = memref.load %arg1[%c194] : memref<293xf32, #tpu.memory_space<smem>>
    %c204 = arith.constant 204 : index
    %195 = memref.load %arg1[%c204] : memref<293xf32, #tpu.memory_space<smem>>
    %c214 = arith.constant 214 : index
    %196 = memref.load %arg1[%c214] : memref<293xf32, #tpu.memory_space<smem>>
    %c224 = arith.constant 224 : index
    %197 = memref.load %arg1[%c224] : memref<293xf32, #tpu.memory_space<smem>>
    %c234 = arith.constant 234 : index
    %198 = memref.load %arg1[%c234] : memref<293xf32, #tpu.memory_space<smem>>
    %c244 = arith.constant 244 : index
    %199 = memref.load %arg1[%c244] : memref<293xf32, #tpu.memory_space<smem>>
    %c155 = arith.constant 155 : index
    %200 = memref.load %arg1[%c155] : memref<293xf32, #tpu.memory_space<smem>>
    %c165 = arith.constant 165 : index
    %201 = memref.load %arg1[%c165] : memref<293xf32, #tpu.memory_space<smem>>
    %c175 = arith.constant 175 : index
    %202 = memref.load %arg1[%c175] : memref<293xf32, #tpu.memory_space<smem>>
    %c185 = arith.constant 185 : index
    %203 = memref.load %arg1[%c185] : memref<293xf32, #tpu.memory_space<smem>>
    %c195 = arith.constant 195 : index
    %204 = memref.load %arg1[%c195] : memref<293xf32, #tpu.memory_space<smem>>
    %c205 = arith.constant 205 : index
    %205 = memref.load %arg1[%c205] : memref<293xf32, #tpu.memory_space<smem>>
    %c215 = arith.constant 215 : index
    %206 = memref.load %arg1[%c215] : memref<293xf32, #tpu.memory_space<smem>>
    %c225 = arith.constant 225 : index
    %207 = memref.load %arg1[%c225] : memref<293xf32, #tpu.memory_space<smem>>
    %c235 = arith.constant 235 : index
    %208 = memref.load %arg1[%c235] : memref<293xf32, #tpu.memory_space<smem>>
    %c245 = arith.constant 245 : index
    %209 = memref.load %arg1[%c245] : memref<293xf32, #tpu.memory_space<smem>>
    %c156 = arith.constant 156 : index
    %210 = memref.load %arg1[%c156] : memref<293xf32, #tpu.memory_space<smem>>
    %c166 = arith.constant 166 : index
    %211 = memref.load %arg1[%c166] : memref<293xf32, #tpu.memory_space<smem>>
    %c176 = arith.constant 176 : index
    %212 = memref.load %arg1[%c176] : memref<293xf32, #tpu.memory_space<smem>>
    %c186 = arith.constant 186 : index
    %213 = memref.load %arg1[%c186] : memref<293xf32, #tpu.memory_space<smem>>
    %c196 = arith.constant 196 : index
    %214 = memref.load %arg1[%c196] : memref<293xf32, #tpu.memory_space<smem>>
    %c206 = arith.constant 206 : index
    %215 = memref.load %arg1[%c206] : memref<293xf32, #tpu.memory_space<smem>>
    %c216 = arith.constant 216 : index
    %216 = memref.load %arg1[%c216] : memref<293xf32, #tpu.memory_space<smem>>
    %c226 = arith.constant 226 : index
    %217 = memref.load %arg1[%c226] : memref<293xf32, #tpu.memory_space<smem>>
    %c236 = arith.constant 236 : index
    %218 = memref.load %arg1[%c236] : memref<293xf32, #tpu.memory_space<smem>>
    %c246 = arith.constant 246 : index
    %219 = memref.load %arg1[%c246] : memref<293xf32, #tpu.memory_space<smem>>
    %c157 = arith.constant 157 : index
    %220 = memref.load %arg1[%c157] : memref<293xf32, #tpu.memory_space<smem>>
    %c167 = arith.constant 167 : index
    %221 = memref.load %arg1[%c167] : memref<293xf32, #tpu.memory_space<smem>>
    %c177 = arith.constant 177 : index
    %222 = memref.load %arg1[%c177] : memref<293xf32, #tpu.memory_space<smem>>
    %c187 = arith.constant 187 : index
    %223 = memref.load %arg1[%c187] : memref<293xf32, #tpu.memory_space<smem>>
    %c197 = arith.constant 197 : index
    %224 = memref.load %arg1[%c197] : memref<293xf32, #tpu.memory_space<smem>>
    %c207 = arith.constant 207 : index
    %225 = memref.load %arg1[%c207] : memref<293xf32, #tpu.memory_space<smem>>
    %c217 = arith.constant 217 : index
    %226 = memref.load %arg1[%c217] : memref<293xf32, #tpu.memory_space<smem>>
    %c227 = arith.constant 227 : index
    %227 = memref.load %arg1[%c227] : memref<293xf32, #tpu.memory_space<smem>>
    %c237 = arith.constant 237 : index
    %228 = memref.load %arg1[%c237] : memref<293xf32, #tpu.memory_space<smem>>
    %c247 = arith.constant 247 : index
    %229 = memref.load %arg1[%c247] : memref<293xf32, #tpu.memory_space<smem>>
    %c158 = arith.constant 158 : index
    %230 = memref.load %arg1[%c158] : memref<293xf32, #tpu.memory_space<smem>>
    %c168 = arith.constant 168 : index
    %231 = memref.load %arg1[%c168] : memref<293xf32, #tpu.memory_space<smem>>
    %c178 = arith.constant 178 : index
    %232 = memref.load %arg1[%c178] : memref<293xf32, #tpu.memory_space<smem>>
    %c188 = arith.constant 188 : index
    %233 = memref.load %arg1[%c188] : memref<293xf32, #tpu.memory_space<smem>>
    %c198 = arith.constant 198 : index
    %234 = memref.load %arg1[%c198] : memref<293xf32, #tpu.memory_space<smem>>
    %c208 = arith.constant 208 : index
    %235 = memref.load %arg1[%c208] : memref<293xf32, #tpu.memory_space<smem>>
    %c218 = arith.constant 218 : index
    %236 = memref.load %arg1[%c218] : memref<293xf32, #tpu.memory_space<smem>>
    %c228 = arith.constant 228 : index
    %237 = memref.load %arg1[%c228] : memref<293xf32, #tpu.memory_space<smem>>
    %c238 = arith.constant 238 : index
    %238 = memref.load %arg1[%c238] : memref<293xf32, #tpu.memory_space<smem>>
    %c248 = arith.constant 248 : index
    %239 = memref.load %arg1[%c248] : memref<293xf32, #tpu.memory_space<smem>>
    %c159 = arith.constant 159 : index
    %240 = memref.load %arg1[%c159] : memref<293xf32, #tpu.memory_space<smem>>
    %c169 = arith.constant 169 : index
    %241 = memref.load %arg1[%c169] : memref<293xf32, #tpu.memory_space<smem>>
    %c179 = arith.constant 179 : index
    %242 = memref.load %arg1[%c179] : memref<293xf32, #tpu.memory_space<smem>>
    %c189 = arith.constant 189 : index
    %243 = memref.load %arg1[%c189] : memref<293xf32, #tpu.memory_space<smem>>
    %c199 = arith.constant 199 : index
    %244 = memref.load %arg1[%c199] : memref<293xf32, #tpu.memory_space<smem>>
    %c209 = arith.constant 209 : index
    %245 = memref.load %arg1[%c209] : memref<293xf32, #tpu.memory_space<smem>>
    %c219 = arith.constant 219 : index
    %246 = memref.load %arg1[%c219] : memref<293xf32, #tpu.memory_space<smem>>
    %c229 = arith.constant 229 : index
    %247 = memref.load %arg1[%c229] : memref<293xf32, #tpu.memory_space<smem>>
    %c239 = arith.constant 239 : index
    %248 = memref.load %arg1[%c239] : memref<293xf32, #tpu.memory_space<smem>>
    %c249 = arith.constant 249 : index
    %249 = memref.load %arg1[%c249] : memref<293xf32, #tpu.memory_space<smem>>
    %c250 = arith.constant 250 : index
    %250 = memref.load %arg1[%c250] : memref<293xf32, #tpu.memory_space<smem>>
    %c251 = arith.constant 251 : index
    %251 = memref.load %arg1[%c251] : memref<293xf32, #tpu.memory_space<smem>>
    %c252 = arith.constant 252 : index
    %252 = memref.load %arg1[%c252] : memref<293xf32, #tpu.memory_space<smem>>
    %c253 = arith.constant 253 : index
    %253 = memref.load %arg1[%c253] : memref<293xf32, #tpu.memory_space<smem>>
    %c254 = arith.constant 254 : index
    %254 = memref.load %arg1[%c254] : memref<293xf32, #tpu.memory_space<smem>>
    %c255 = arith.constant 255 : index
    %255 = memref.load %arg1[%c255] : memref<293xf32, #tpu.memory_space<smem>>
    %c256 = arith.constant 256 : index
    %256 = memref.load %arg1[%c256] : memref<293xf32, #tpu.memory_space<smem>>
    %c257 = arith.constant 257 : index
    %257 = memref.load %arg1[%c257] : memref<293xf32, #tpu.memory_space<smem>>
    %c258 = arith.constant 258 : index
    %258 = memref.load %arg1[%c258] : memref<293xf32, #tpu.memory_space<smem>>
    %c259 = arith.constant 259 : index
    %259 = memref.load %arg1[%c259] : memref<293xf32, #tpu.memory_space<smem>>
    %c260 = arith.constant 260 : index
    %260 = memref.load %arg1[%c260] : memref<293xf32, #tpu.memory_space<smem>>
    %c263 = arith.constant 263 : index
    %261 = memref.load %arg1[%c263] : memref<293xf32, #tpu.memory_space<smem>>
    %c266 = arith.constant 266 : index
    %262 = memref.load %arg1[%c266] : memref<293xf32, #tpu.memory_space<smem>>
    %c269 = arith.constant 269 : index
    %263 = memref.load %arg1[%c269] : memref<293xf32, #tpu.memory_space<smem>>
    %c272 = arith.constant 272 : index
    %264 = memref.load %arg1[%c272] : memref<293xf32, #tpu.memory_space<smem>>
    %c275 = arith.constant 275 : index
    %265 = memref.load %arg1[%c275] : memref<293xf32, #tpu.memory_space<smem>>
    %c278 = arith.constant 278 : index
    %266 = memref.load %arg1[%c278] : memref<293xf32, #tpu.memory_space<smem>>
    %c281 = arith.constant 281 : index
    %267 = memref.load %arg1[%c281] : memref<293xf32, #tpu.memory_space<smem>>
    %c284 = arith.constant 284 : index
    %268 = memref.load %arg1[%c284] : memref<293xf32, #tpu.memory_space<smem>>
    %c287 = arith.constant 287 : index
    %269 = memref.load %arg1[%c287] : memref<293xf32, #tpu.memory_space<smem>>
    %c261 = arith.constant 261 : index
    %270 = memref.load %arg1[%c261] : memref<293xf32, #tpu.memory_space<smem>>
    %c264 = arith.constant 264 : index
    %271 = memref.load %arg1[%c264] : memref<293xf32, #tpu.memory_space<smem>>
    %c267 = arith.constant 267 : index
    %272 = memref.load %arg1[%c267] : memref<293xf32, #tpu.memory_space<smem>>
    %c270 = arith.constant 270 : index
    %273 = memref.load %arg1[%c270] : memref<293xf32, #tpu.memory_space<smem>>
    %c273 = arith.constant 273 : index
    %274 = memref.load %arg1[%c273] : memref<293xf32, #tpu.memory_space<smem>>
    %c276 = arith.constant 276 : index
    %275 = memref.load %arg1[%c276] : memref<293xf32, #tpu.memory_space<smem>>
    %c279 = arith.constant 279 : index
    %276 = memref.load %arg1[%c279] : memref<293xf32, #tpu.memory_space<smem>>
    %c282 = arith.constant 282 : index
    %277 = memref.load %arg1[%c282] : memref<293xf32, #tpu.memory_space<smem>>
    %c285 = arith.constant 285 : index
    %278 = memref.load %arg1[%c285] : memref<293xf32, #tpu.memory_space<smem>>
    %c288 = arith.constant 288 : index
    %279 = memref.load %arg1[%c288] : memref<293xf32, #tpu.memory_space<smem>>
    %c262 = arith.constant 262 : index
    %280 = memref.load %arg1[%c262] : memref<293xf32, #tpu.memory_space<smem>>
    %c265 = arith.constant 265 : index
    %281 = memref.load %arg1[%c265] : memref<293xf32, #tpu.memory_space<smem>>
    %c268 = arith.constant 268 : index
    %282 = memref.load %arg1[%c268] : memref<293xf32, #tpu.memory_space<smem>>
    %c271 = arith.constant 271 : index
    %283 = memref.load %arg1[%c271] : memref<293xf32, #tpu.memory_space<smem>>
    %c274 = arith.constant 274 : index
    %284 = memref.load %arg1[%c274] : memref<293xf32, #tpu.memory_space<smem>>
    %c277 = arith.constant 277 : index
    %285 = memref.load %arg1[%c277] : memref<293xf32, #tpu.memory_space<smem>>
    %c280 = arith.constant 280 : index
    %286 = memref.load %arg1[%c280] : memref<293xf32, #tpu.memory_space<smem>>
    %c283 = arith.constant 283 : index
    %287 = memref.load %arg1[%c283] : memref<293xf32, #tpu.memory_space<smem>>
    %c286 = arith.constant 286 : index
    %288 = memref.load %arg1[%c286] : memref<293xf32, #tpu.memory_space<smem>>
    %c289 = arith.constant 289 : index
    %289 = memref.load %arg1[%c289] : memref<293xf32, #tpu.memory_space<smem>>
    %c290 = arith.constant 290 : index
    %290 = memref.load %arg1[%c290] : memref<293xf32, #tpu.memory_space<smem>>
    %c291 = arith.constant 291 : index
    %291 = memref.load %arg1[%c291] : memref<293xf32, #tpu.memory_space<smem>>
    %c292 = arith.constant 292 : index
    %292 = memref.load %arg1[%c292] : memref<293xf32, #tpu.memory_space<smem>>
    %c0_i32 = arith.constant 0 : i32
    %c2_i32 = arith.constant 2 : i32
    %293 = arith.addi %c0_i32, %c2_i32 : i32
    %c1_i32 = arith.constant 1 : i32
    scf.for %arg4 = %c0_i32 to %293 step %c1_i32  : i32 {
      %c1_i32_1 = arith.constant 1 : i32
      %294 = arith.muli %arg4, %c1_i32_1 : i32
      %c0_i32_2 = arith.constant 0 : i32
      %295 = arith.addi %c0_i32_2, %294 : i32
      %c16_i32 = arith.constant 16 : i32
      %296 = arith.muli %295, %c16_i32 : i32
      %297 = tpu.assume_multiple %296, 16 : i32
      %c0_3 = arith.constant 0 : index
      %298 = arith.index_cast %297 : i32 to index
      %c0_4 = arith.constant 0 : index
      %299 = vector.load %arg2[%c0_3, %298, %c0_4] : memref<3x32x128xf32, #tpu.memory_space<vmem>>, vector<1x16x128xf32>
      %300 = vector.shape_cast %299 : vector<1x16x128xf32> to vector<16x128xf32>
      %c1_5 = arith.constant 1 : index
      %301 = arith.index_cast %297 : i32 to index
      %c0_6 = arith.constant 0 : index
      %302 = vector.load %arg2[%c1_5, %301, %c0_6] : memref<3x32x128xf32, #tpu.memory_space<vmem>>, vector<1x16x128xf32>
      %303 = vector.shape_cast %302 : vector<1x16x128xf32> to vector<16x128xf32>
      %c2_7 = arith.constant 2 : index
      %304 = arith.index_cast %297 : i32 to index
      %c0_8 = arith.constant 0 : index
      %305 = vector.load %arg2[%c2_7, %304, %c0_8] : memref<3x32x128xf32, #tpu.memory_space<vmem>>, vector<1x16x128xf32>
      %306 = vector.shape_cast %305 : vector<1x16x128xf32> to vector<16x128xf32>
      %307 = vector.broadcast %0 : f32 to vector<16x128xf32>
      %308 = arith.mulf %300, %307 : vector<16x128xf32>
      %309 = vector.broadcast %1 : f32 to vector<16x128xf32>
      %310 = arith.mulf %303, %309 : vector<16x128xf32>
      %311 = arith.addf %308, %310 : vector<16x128xf32>
      %312 = vector.broadcast %2 : f32 to vector<16x128xf32>
      %313 = arith.mulf %306, %312 : vector<16x128xf32>
      %314 = arith.addf %311, %313 : vector<16x128xf32>
      %315 = vector.broadcast %30 : f32 to vector<16x128xf32>
      %316 = arith.addf %314, %315 : vector<16x128xf32>
      %317 = math.tanh %316 : vector<16x128xf32>
      %318 = vector.broadcast %3 : f32 to vector<16x128xf32>
      %319 = arith.mulf %300, %318 : vector<16x128xf32>
      %320 = vector.broadcast %4 : f32 to vector<16x128xf32>
      %321 = arith.mulf %303, %320 : vector<16x128xf32>
      %322 = arith.addf %319, %321 : vector<16x128xf32>
      %323 = vector.broadcast %5 : f32 to vector<16x128xf32>
      %324 = arith.mulf %306, %323 : vector<16x128xf32>
      %325 = arith.addf %322, %324 : vector<16x128xf32>
      %326 = vector.broadcast %31 : f32 to vector<16x128xf32>
      %327 = arith.addf %325, %326 : vector<16x128xf32>
      %328 = math.tanh %327 : vector<16x128xf32>
      %329 = vector.broadcast %6 : f32 to vector<16x128xf32>
      %330 = arith.mulf %300, %329 : vector<16x128xf32>
      %331 = vector.broadcast %7 : f32 to vector<16x128xf32>
      %332 = arith.mulf %303, %331 : vector<16x128xf32>
      %333 = arith.addf %330, %332 : vector<16x128xf32>
      %334 = vector.broadcast %8 : f32 to vector<16x128xf32>
      %335 = arith.mulf %306, %334 : vector<16x128xf32>
      %336 = arith.addf %333, %335 : vector<16x128xf32>
      %337 = vector.broadcast %32 : f32 to vector<16x128xf32>
      %338 = arith.addf %336, %337 : vector<16x128xf32>
      %339 = math.tanh %338 : vector<16x128xf32>
      %340 = vector.broadcast %9 : f32 to vector<16x128xf32>
      %341 = arith.mulf %300, %340 : vector<16x128xf32>
      %342 = vector.broadcast %10 : f32 to vector<16x128xf32>
      %343 = arith.mulf %303, %342 : vector<16x128xf32>
      %344 = arith.addf %341, %343 : vector<16x128xf32>
      %345 = vector.broadcast %11 : f32 to vector<16x128xf32>
      %346 = arith.mulf %306, %345 : vector<16x128xf32>
      %347 = arith.addf %344, %346 : vector<16x128xf32>
      %348 = vector.broadcast %33 : f32 to vector<16x128xf32>
      %349 = arith.addf %347, %348 : vector<16x128xf32>
      %350 = math.tanh %349 : vector<16x128xf32>
      %351 = vector.broadcast %12 : f32 to vector<16x128xf32>
      %352 = arith.mulf %300, %351 : vector<16x128xf32>
      %353 = vector.broadcast %13 : f32 to vector<16x128xf32>
      %354 = arith.mulf %303, %353 : vector<16x128xf32>
      %355 = arith.addf %352, %354 : vector<16x128xf32>
      %356 = vector.broadcast %14 : f32 to vector<16x128xf32>
      %357 = arith.mulf %306, %356 : vector<16x128xf32>
      %358 = arith.addf %355, %357 : vector<16x128xf32>
      %359 = vector.broadcast %34 : f32 to vector<16x128xf32>
      %360 = arith.addf %358, %359 : vector<16x128xf32>
      %361 = math.tanh %360 : vector<16x128xf32>
      %362 = vector.broadcast %15 : f32 to vector<16x128xf32>
      %363 = arith.mulf %300, %362 : vector<16x128xf32>
      %364 = vector.broadcast %16 : f32 to vector<16x128xf32>
      %365 = arith.mulf %303, %364 : vector<16x128xf32>
      %366 = arith.addf %363, %365 : vector<16x128xf32>
      %367 = vector.broadcast %17 : f32 to vector<16x128xf32>
      %368 = arith.mulf %306, %367 : vector<16x128xf32>
      %369 = arith.addf %366, %368 : vector<16x128xf32>
      %370 = vector.broadcast %35 : f32 to vector<16x128xf32>
      %371 = arith.addf %369, %370 : vector<16x128xf32>
      %372 = math.tanh %371 : vector<16x128xf32>
      %373 = vector.broadcast %18 : f32 to vector<16x128xf32>
      %374 = arith.mulf %300, %373 : vector<16x128xf32>
      %375 = vector.broadcast %19 : f32 to vector<16x128xf32>
      %376 = arith.mulf %303, %375 : vector<16x128xf32>
      %377 = arith.addf %374, %376 : vector<16x128xf32>
      %378 = vector.broadcast %20 : f32 to vector<16x128xf32>
      %379 = arith.mulf %306, %378 : vector<16x128xf32>
      %380 = arith.addf %377, %379 : vector<16x128xf32>
      %381 = vector.broadcast %36 : f32 to vector<16x128xf32>
      %382 = arith.addf %380, %381 : vector<16x128xf32>
      %383 = math.tanh %382 : vector<16x128xf32>
      %384 = vector.broadcast %21 : f32 to vector<16x128xf32>
      %385 = arith.mulf %300, %384 : vector<16x128xf32>
      %386 = vector.broadcast %22 : f32 to vector<16x128xf32>
      %387 = arith.mulf %303, %386 : vector<16x128xf32>
      %388 = arith.addf %385, %387 : vector<16x128xf32>
      %389 = vector.broadcast %23 : f32 to vector<16x128xf32>
      %390 = arith.mulf %306, %389 : vector<16x128xf32>
      %391 = arith.addf %388, %390 : vector<16x128xf32>
      %392 = vector.broadcast %37 : f32 to vector<16x128xf32>
      %393 = arith.addf %391, %392 : vector<16x128xf32>
      %394 = math.tanh %393 : vector<16x128xf32>
      %395 = vector.broadcast %24 : f32 to vector<16x128xf32>
      %396 = arith.mulf %300, %395 : vector<16x128xf32>
      %397 = vector.broadcast %25 : f32 to vector<16x128xf32>
      %398 = arith.mulf %303, %397 : vector<16x128xf32>
      %399 = arith.addf %396, %398 : vector<16x128xf32>
      %400 = vector.broadcast %26 : f32 to vector<16x128xf32>
      %401 = arith.mulf %306, %400 : vector<16x128xf32>
      %402 = arith.addf %399, %401 : vector<16x128xf32>
      %403 = vector.broadcast %38 : f32 to vector<16x128xf32>
      %404 = arith.addf %402, %403 : vector<16x128xf32>
      %405 = math.tanh %404 : vector<16x128xf32>
      %406 = vector.broadcast %27 : f32 to vector<16x128xf32>
      %407 = arith.mulf %300, %406 : vector<16x128xf32>
      %408 = vector.broadcast %28 : f32 to vector<16x128xf32>
      %409 = arith.mulf %303, %408 : vector<16x128xf32>
      %410 = arith.addf %407, %409 : vector<16x128xf32>
      %411 = vector.broadcast %29 : f32 to vector<16x128xf32>
      %412 = arith.mulf %306, %411 : vector<16x128xf32>
      %413 = arith.addf %410, %412 : vector<16x128xf32>
      %414 = vector.broadcast %39 : f32 to vector<16x128xf32>
      %415 = arith.addf %413, %414 : vector<16x128xf32>
      %416 = math.tanh %415 : vector<16x128xf32>
      %417 = vector.broadcast %40 : f32 to vector<16x128xf32>
      %418 = arith.mulf %317, %417 : vector<16x128xf32>
      %419 = vector.broadcast %41 : f32 to vector<16x128xf32>
      %420 = arith.mulf %328, %419 : vector<16x128xf32>
      %421 = arith.addf %418, %420 : vector<16x128xf32>
      %422 = vector.broadcast %42 : f32 to vector<16x128xf32>
      %423 = arith.mulf %339, %422 : vector<16x128xf32>
      %424 = arith.addf %421, %423 : vector<16x128xf32>
      %425 = vector.broadcast %43 : f32 to vector<16x128xf32>
      %426 = arith.mulf %350, %425 : vector<16x128xf32>
      %427 = arith.addf %424, %426 : vector<16x128xf32>
      %428 = vector.broadcast %44 : f32 to vector<16x128xf32>
      %429 = arith.mulf %361, %428 : vector<16x128xf32>
      %430 = arith.addf %427, %429 : vector<16x128xf32>
      %431 = vector.broadcast %45 : f32 to vector<16x128xf32>
      %432 = arith.mulf %372, %431 : vector<16x128xf32>
      %433 = arith.addf %430, %432 : vector<16x128xf32>
      %434 = vector.broadcast %46 : f32 to vector<16x128xf32>
      %435 = arith.mulf %383, %434 : vector<16x128xf32>
      %436 = arith.addf %433, %435 : vector<16x128xf32>
      %437 = vector.broadcast %47 : f32 to vector<16x128xf32>
      %438 = arith.mulf %394, %437 : vector<16x128xf32>
      %439 = arith.addf %436, %438 : vector<16x128xf32>
      %440 = vector.broadcast %48 : f32 to vector<16x128xf32>
      %441 = arith.mulf %405, %440 : vector<16x128xf32>
      %442 = arith.addf %439, %441 : vector<16x128xf32>
      %443 = vector.broadcast %49 : f32 to vector<16x128xf32>
      %444 = arith.mulf %416, %443 : vector<16x128xf32>
      %445 = arith.addf %442, %444 : vector<16x128xf32>
      %446 = vector.broadcast %140 : f32 to vector<16x128xf32>
      %447 = arith.addf %445, %446 : vector<16x128xf32>
      %448 = math.tanh %447 : vector<16x128xf32>
      %449 = vector.broadcast %50 : f32 to vector<16x128xf32>
      %450 = arith.mulf %317, %449 : vector<16x128xf32>
      %451 = vector.broadcast %51 : f32 to vector<16x128xf32>
      %452 = arith.mulf %328, %451 : vector<16x128xf32>
      %453 = arith.addf %450, %452 : vector<16x128xf32>
      %454 = vector.broadcast %52 : f32 to vector<16x128xf32>
      %455 = arith.mulf %339, %454 : vector<16x128xf32>
      %456 = arith.addf %453, %455 : vector<16x128xf32>
      %457 = vector.broadcast %53 : f32 to vector<16x128xf32>
      %458 = arith.mulf %350, %457 : vector<16x128xf32>
      %459 = arith.addf %456, %458 : vector<16x128xf32>
      %460 = vector.broadcast %54 : f32 to vector<16x128xf32>
      %461 = arith.mulf %361, %460 : vector<16x128xf32>
      %462 = arith.addf %459, %461 : vector<16x128xf32>
      %463 = vector.broadcast %55 : f32 to vector<16x128xf32>
      %464 = arith.mulf %372, %463 : vector<16x128xf32>
      %465 = arith.addf %462, %464 : vector<16x128xf32>
      %466 = vector.broadcast %56 : f32 to vector<16x128xf32>
      %467 = arith.mulf %383, %466 : vector<16x128xf32>
      %468 = arith.addf %465, %467 : vector<16x128xf32>
      %469 = vector.broadcast %57 : f32 to vector<16x128xf32>
      %470 = arith.mulf %394, %469 : vector<16x128xf32>
      %471 = arith.addf %468, %470 : vector<16x128xf32>
      %472 = vector.broadcast %58 : f32 to vector<16x128xf32>
      %473 = arith.mulf %405, %472 : vector<16x128xf32>
      %474 = arith.addf %471, %473 : vector<16x128xf32>
      %475 = vector.broadcast %59 : f32 to vector<16x128xf32>
      %476 = arith.mulf %416, %475 : vector<16x128xf32>
      %477 = arith.addf %474, %476 : vector<16x128xf32>
      %478 = vector.broadcast %141 : f32 to vector<16x128xf32>
      %479 = arith.addf %477, %478 : vector<16x128xf32>
      %480 = math.tanh %479 : vector<16x128xf32>
      %481 = vector.broadcast %60 : f32 to vector<16x128xf32>
      %482 = arith.mulf %317, %481 : vector<16x128xf32>
      %483 = vector.broadcast %61 : f32 to vector<16x128xf32>
      %484 = arith.mulf %328, %483 : vector<16x128xf32>
      %485 = arith.addf %482, %484 : vector<16x128xf32>
      %486 = vector.broadcast %62 : f32 to vector<16x128xf32>
      %487 = arith.mulf %339, %486 : vector<16x128xf32>
      %488 = arith.addf %485, %487 : vector<16x128xf32>
      %489 = vector.broadcast %63 : f32 to vector<16x128xf32>
      %490 = arith.mulf %350, %489 : vector<16x128xf32>
      %491 = arith.addf %488, %490 : vector<16x128xf32>
      %492 = vector.broadcast %64 : f32 to vector<16x128xf32>
      %493 = arith.mulf %361, %492 : vector<16x128xf32>
      %494 = arith.addf %491, %493 : vector<16x128xf32>
      %495 = vector.broadcast %65 : f32 to vector<16x128xf32>
      %496 = arith.mulf %372, %495 : vector<16x128xf32>
      %497 = arith.addf %494, %496 : vector<16x128xf32>
      %498 = vector.broadcast %66 : f32 to vector<16x128xf32>
      %499 = arith.mulf %383, %498 : vector<16x128xf32>
      %500 = arith.addf %497, %499 : vector<16x128xf32>
      %501 = vector.broadcast %67 : f32 to vector<16x128xf32>
      %502 = arith.mulf %394, %501 : vector<16x128xf32>
      %503 = arith.addf %500, %502 : vector<16x128xf32>
      %504 = vector.broadcast %68 : f32 to vector<16x128xf32>
      %505 = arith.mulf %405, %504 : vector<16x128xf32>
      %506 = arith.addf %503, %505 : vector<16x128xf32>
      %507 = vector.broadcast %69 : f32 to vector<16x128xf32>
      %508 = arith.mulf %416, %507 : vector<16x128xf32>
      %509 = arith.addf %506, %508 : vector<16x128xf32>
      %510 = vector.broadcast %142 : f32 to vector<16x128xf32>
      %511 = arith.addf %509, %510 : vector<16x128xf32>
      %512 = math.tanh %511 : vector<16x128xf32>
      %513 = vector.broadcast %70 : f32 to vector<16x128xf32>
      %514 = arith.mulf %317, %513 : vector<16x128xf32>
      %515 = vector.broadcast %71 : f32 to vector<16x128xf32>
      %516 = arith.mulf %328, %515 : vector<16x128xf32>
      %517 = arith.addf %514, %516 : vector<16x128xf32>
      %518 = vector.broadcast %72 : f32 to vector<16x128xf32>
      %519 = arith.mulf %339, %518 : vector<16x128xf32>
      %520 = arith.addf %517, %519 : vector<16x128xf32>
      %521 = vector.broadcast %73 : f32 to vector<16x128xf32>
      %522 = arith.mulf %350, %521 : vector<16x128xf32>
      %523 = arith.addf %520, %522 : vector<16x128xf32>
      %524 = vector.broadcast %74 : f32 to vector<16x128xf32>
      %525 = arith.mulf %361, %524 : vector<16x128xf32>
      %526 = arith.addf %523, %525 : vector<16x128xf32>
      %527 = vector.broadcast %75 : f32 to vector<16x128xf32>
      %528 = arith.mulf %372, %527 : vector<16x128xf32>
      %529 = arith.addf %526, %528 : vector<16x128xf32>
      %530 = vector.broadcast %76 : f32 to vector<16x128xf32>
      %531 = arith.mulf %383, %530 : vector<16x128xf32>
      %532 = arith.addf %529, %531 : vector<16x128xf32>
      %533 = vector.broadcast %77 : f32 to vector<16x128xf32>
      %534 = arith.mulf %394, %533 : vector<16x128xf32>
      %535 = arith.addf %532, %534 : vector<16x128xf32>
      %536 = vector.broadcast %78 : f32 to vector<16x128xf32>
      %537 = arith.mulf %405, %536 : vector<16x128xf32>
      %538 = arith.addf %535, %537 : vector<16x128xf32>
      %539 = vector.broadcast %79 : f32 to vector<16x128xf32>
      %540 = arith.mulf %416, %539 : vector<16x128xf32>
      %541 = arith.addf %538, %540 : vector<16x128xf32>
      %542 = vector.broadcast %143 : f32 to vector<16x128xf32>
      %543 = arith.addf %541, %542 : vector<16x128xf32>
      %544 = math.tanh %543 : vector<16x128xf32>
      %545 = vector.broadcast %80 : f32 to vector<16x128xf32>
      %546 = arith.mulf %317, %545 : vector<16x128xf32>
      %547 = vector.broadcast %81 : f32 to vector<16x128xf32>
      %548 = arith.mulf %328, %547 : vector<16x128xf32>
      %549 = arith.addf %546, %548 : vector<16x128xf32>
      %550 = vector.broadcast %82 : f32 to vector<16x128xf32>
      %551 = arith.mulf %339, %550 : vector<16x128xf32>
      %552 = arith.addf %549, %551 : vector<16x128xf32>
      %553 = vector.broadcast %83 : f32 to vector<16x128xf32>
      %554 = arith.mulf %350, %553 : vector<16x128xf32>
      %555 = arith.addf %552, %554 : vector<16x128xf32>
      %556 = vector.broadcast %84 : f32 to vector<16x128xf32>
      %557 = arith.mulf %361, %556 : vector<16x128xf32>
      %558 = arith.addf %555, %557 : vector<16x128xf32>
      %559 = vector.broadcast %85 : f32 to vector<16x128xf32>
      %560 = arith.mulf %372, %559 : vector<16x128xf32>
      %561 = arith.addf %558, %560 : vector<16x128xf32>
      %562 = vector.broadcast %86 : f32 to vector<16x128xf32>
      %563 = arith.mulf %383, %562 : vector<16x128xf32>
      %564 = arith.addf %561, %563 : vector<16x128xf32>
      %565 = vector.broadcast %87 : f32 to vector<16x128xf32>
      %566 = arith.mulf %394, %565 : vector<16x128xf32>
      %567 = arith.addf %564, %566 : vector<16x128xf32>
      %568 = vector.broadcast %88 : f32 to vector<16x128xf32>
      %569 = arith.mulf %405, %568 : vector<16x128xf32>
      %570 = arith.addf %567, %569 : vector<16x128xf32>
      %571 = vector.broadcast %89 : f32 to vector<16x128xf32>
      %572 = arith.mulf %416, %571 : vector<16x128xf32>
      %573 = arith.addf %570, %572 : vector<16x128xf32>
      %574 = vector.broadcast %144 : f32 to vector<16x128xf32>
      %575 = arith.addf %573, %574 : vector<16x128xf32>
      %576 = math.tanh %575 : vector<16x128xf32>
      %577 = vector.broadcast %90 : f32 to vector<16x128xf32>
      %578 = arith.mulf %317, %577 : vector<16x128xf32>
      %579 = vector.broadcast %91 : f32 to vector<16x128xf32>
      %580 = arith.mulf %328, %579 : vector<16x128xf32>
      %581 = arith.addf %578, %580 : vector<16x128xf32>
      %582 = vector.broadcast %92 : f32 to vector<16x128xf32>
      %583 = arith.mulf %339, %582 : vector<16x128xf32>
      %584 = arith.addf %581, %583 : vector<16x128xf32>
      %585 = vector.broadcast %93 : f32 to vector<16x128xf32>
      %586 = arith.mulf %350, %585 : vector<16x128xf32>
      %587 = arith.addf %584, %586 : vector<16x128xf32>
      %588 = vector.broadcast %94 : f32 to vector<16x128xf32>
      %589 = arith.mulf %361, %588 : vector<16x128xf32>
      %590 = arith.addf %587, %589 : vector<16x128xf32>
      %591 = vector.broadcast %95 : f32 to vector<16x128xf32>
      %592 = arith.mulf %372, %591 : vector<16x128xf32>
      %593 = arith.addf %590, %592 : vector<16x128xf32>
      %594 = vector.broadcast %96 : f32 to vector<16x128xf32>
      %595 = arith.mulf %383, %594 : vector<16x128xf32>
      %596 = arith.addf %593, %595 : vector<16x128xf32>
      %597 = vector.broadcast %97 : f32 to vector<16x128xf32>
      %598 = arith.mulf %394, %597 : vector<16x128xf32>
      %599 = arith.addf %596, %598 : vector<16x128xf32>
      %600 = vector.broadcast %98 : f32 to vector<16x128xf32>
      %601 = arith.mulf %405, %600 : vector<16x128xf32>
      %602 = arith.addf %599, %601 : vector<16x128xf32>
      %603 = vector.broadcast %99 : f32 to vector<16x128xf32>
      %604 = arith.mulf %416, %603 : vector<16x128xf32>
      %605 = arith.addf %602, %604 : vector<16x128xf32>
      %606 = vector.broadcast %145 : f32 to vector<16x128xf32>
      %607 = arith.addf %605, %606 : vector<16x128xf32>
      %608 = math.tanh %607 : vector<16x128xf32>
      %609 = vector.broadcast %100 : f32 to vector<16x128xf32>
      %610 = arith.mulf %317, %609 : vector<16x128xf32>
      %611 = vector.broadcast %101 : f32 to vector<16x128xf32>
      %612 = arith.mulf %328, %611 : vector<16x128xf32>
      %613 = arith.addf %610, %612 : vector<16x128xf32>
      %614 = vector.broadcast %102 : f32 to vector<16x128xf32>
      %615 = arith.mulf %339, %614 : vector<16x128xf32>
      %616 = arith.addf %613, %615 : vector<16x128xf32>
      %617 = vector.broadcast %103 : f32 to vector<16x128xf32>
      %618 = arith.mulf %350, %617 : vector<16x128xf32>
      %619 = arith.addf %616, %618 : vector<16x128xf32>
      %620 = vector.broadcast %104 : f32 to vector<16x128xf32>
      %621 = arith.mulf %361, %620 : vector<16x128xf32>
      %622 = arith.addf %619, %621 : vector<16x128xf32>
      %623 = vector.broadcast %105 : f32 to vector<16x128xf32>
      %624 = arith.mulf %372, %623 : vector<16x128xf32>
      %625 = arith.addf %622, %624 : vector<16x128xf32>
      %626 = vector.broadcast %106 : f32 to vector<16x128xf32>
      %627 = arith.mulf %383, %626 : vector<16x128xf32>
      %628 = arith.addf %625, %627 : vector<16x128xf32>
      %629 = vector.broadcast %107 : f32 to vector<16x128xf32>
      %630 = arith.mulf %394, %629 : vector<16x128xf32>
      %631 = arith.addf %628, %630 : vector<16x128xf32>
      %632 = vector.broadcast %108 : f32 to vector<16x128xf32>
      %633 = arith.mulf %405, %632 : vector<16x128xf32>
      %634 = arith.addf %631, %633 : vector<16x128xf32>
      %635 = vector.broadcast %109 : f32 to vector<16x128xf32>
      %636 = arith.mulf %416, %635 : vector<16x128xf32>
      %637 = arith.addf %634, %636 : vector<16x128xf32>
      %638 = vector.broadcast %146 : f32 to vector<16x128xf32>
      %639 = arith.addf %637, %638 : vector<16x128xf32>
      %640 = math.tanh %639 : vector<16x128xf32>
      %641 = vector.broadcast %110 : f32 to vector<16x128xf32>
      %642 = arith.mulf %317, %641 : vector<16x128xf32>
      %643 = vector.broadcast %111 : f32 to vector<16x128xf32>
      %644 = arith.mulf %328, %643 : vector<16x128xf32>
      %645 = arith.addf %642, %644 : vector<16x128xf32>
      %646 = vector.broadcast %112 : f32 to vector<16x128xf32>
      %647 = arith.mulf %339, %646 : vector<16x128xf32>
      %648 = arith.addf %645, %647 : vector<16x128xf32>
      %649 = vector.broadcast %113 : f32 to vector<16x128xf32>
      %650 = arith.mulf %350, %649 : vector<16x128xf32>
      %651 = arith.addf %648, %650 : vector<16x128xf32>
      %652 = vector.broadcast %114 : f32 to vector<16x128xf32>
      %653 = arith.mulf %361, %652 : vector<16x128xf32>
      %654 = arith.addf %651, %653 : vector<16x128xf32>
      %655 = vector.broadcast %115 : f32 to vector<16x128xf32>
      %656 = arith.mulf %372, %655 : vector<16x128xf32>
      %657 = arith.addf %654, %656 : vector<16x128xf32>
      %658 = vector.broadcast %116 : f32 to vector<16x128xf32>
      %659 = arith.mulf %383, %658 : vector<16x128xf32>
      %660 = arith.addf %657, %659 : vector<16x128xf32>
      %661 = vector.broadcast %117 : f32 to vector<16x128xf32>
      %662 = arith.mulf %394, %661 : vector<16x128xf32>
      %663 = arith.addf %660, %662 : vector<16x128xf32>
      %664 = vector.broadcast %118 : f32 to vector<16x128xf32>
      %665 = arith.mulf %405, %664 : vector<16x128xf32>
      %666 = arith.addf %663, %665 : vector<16x128xf32>
      %667 = vector.broadcast %119 : f32 to vector<16x128xf32>
      %668 = arith.mulf %416, %667 : vector<16x128xf32>
      %669 = arith.addf %666, %668 : vector<16x128xf32>
      %670 = vector.broadcast %147 : f32 to vector<16x128xf32>
      %671 = arith.addf %669, %670 : vector<16x128xf32>
      %672 = math.tanh %671 : vector<16x128xf32>
      %673 = vector.broadcast %120 : f32 to vector<16x128xf32>
      %674 = arith.mulf %317, %673 : vector<16x128xf32>
      %675 = vector.broadcast %121 : f32 to vector<16x128xf32>
      %676 = arith.mulf %328, %675 : vector<16x128xf32>
      %677 = arith.addf %674, %676 : vector<16x128xf32>
      %678 = vector.broadcast %122 : f32 to vector<16x128xf32>
      %679 = arith.mulf %339, %678 : vector<16x128xf32>
      %680 = arith.addf %677, %679 : vector<16x128xf32>
      %681 = vector.broadcast %123 : f32 to vector<16x128xf32>
      %682 = arith.mulf %350, %681 : vector<16x128xf32>
      %683 = arith.addf %680, %682 : vector<16x128xf32>
      %684 = vector.broadcast %124 : f32 to vector<16x128xf32>
      %685 = arith.mulf %361, %684 : vector<16x128xf32>
      %686 = arith.addf %683, %685 : vector<16x128xf32>
      %687 = vector.broadcast %125 : f32 to vector<16x128xf32>
      %688 = arith.mulf %372, %687 : vector<16x128xf32>
      %689 = arith.addf %686, %688 : vector<16x128xf32>
      %690 = vector.broadcast %126 : f32 to vector<16x128xf32>
      %691 = arith.mulf %383, %690 : vector<16x128xf32>
      %692 = arith.addf %689, %691 : vector<16x128xf32>
      %693 = vector.broadcast %127 : f32 to vector<16x128xf32>
      %694 = arith.mulf %394, %693 : vector<16x128xf32>
      %695 = arith.addf %692, %694 : vector<16x128xf32>
      %696 = vector.broadcast %128 : f32 to vector<16x128xf32>
      %697 = arith.mulf %405, %696 : vector<16x128xf32>
      %698 = arith.addf %695, %697 : vector<16x128xf32>
      %699 = vector.broadcast %129 : f32 to vector<16x128xf32>
      %700 = arith.mulf %416, %699 : vector<16x128xf32>
      %701 = arith.addf %698, %700 : vector<16x128xf32>
      %702 = vector.broadcast %148 : f32 to vector<16x128xf32>
      %703 = arith.addf %701, %702 : vector<16x128xf32>
      %704 = math.tanh %703 : vector<16x128xf32>
      %705 = vector.broadcast %130 : f32 to vector<16x128xf32>
      %706 = arith.mulf %317, %705 : vector<16x128xf32>
      %707 = vector.broadcast %131 : f32 to vector<16x128xf32>
      %708 = arith.mulf %328, %707 : vector<16x128xf32>
      %709 = arith.addf %706, %708 : vector<16x128xf32>
      %710 = vector.broadcast %132 : f32 to vector<16x128xf32>
      %711 = arith.mulf %339, %710 : vector<16x128xf32>
      %712 = arith.addf %709, %711 : vector<16x128xf32>
      %713 = vector.broadcast %133 : f32 to vector<16x128xf32>
      %714 = arith.mulf %350, %713 : vector<16x128xf32>
      %715 = arith.addf %712, %714 : vector<16x128xf32>
      %716 = vector.broadcast %134 : f32 to vector<16x128xf32>
      %717 = arith.mulf %361, %716 : vector<16x128xf32>
      %718 = arith.addf %715, %717 : vector<16x128xf32>
      %719 = vector.broadcast %135 : f32 to vector<16x128xf32>
      %720 = arith.mulf %372, %719 : vector<16x128xf32>
      %721 = arith.addf %718, %720 : vector<16x128xf32>
      %722 = vector.broadcast %136 : f32 to vector<16x128xf32>
      %723 = arith.mulf %383, %722 : vector<16x128xf32>
      %724 = arith.addf %721, %723 : vector<16x128xf32>
      %725 = vector.broadcast %137 : f32 to vector<16x128xf32>
      %726 = arith.mulf %394, %725 : vector<16x128xf32>
      %727 = arith.addf %724, %726 : vector<16x128xf32>
      %728 = vector.broadcast %138 : f32 to vector<16x128xf32>
      %729 = arith.mulf %405, %728 : vector<16x128xf32>
      %730 = arith.addf %727, %729 : vector<16x128xf32>
      %731 = vector.broadcast %139 : f32 to vector<16x128xf32>
      %732 = arith.mulf %416, %731 : vector<16x128xf32>
      %733 = arith.addf %730, %732 : vector<16x128xf32>
      %734 = vector.broadcast %149 : f32 to vector<16x128xf32>
      %735 = arith.addf %733, %734 : vector<16x128xf32>
      %736 = math.tanh %735 : vector<16x128xf32>
      %737 = vector.broadcast %150 : f32 to vector<16x128xf32>
      %738 = arith.mulf %448, %737 : vector<16x128xf32>
      %739 = vector.broadcast %151 : f32 to vector<16x128xf32>
      %740 = arith.mulf %480, %739 : vector<16x128xf32>
      %741 = arith.addf %738, %740 : vector<16x128xf32>
      %742 = vector.broadcast %152 : f32 to vector<16x128xf32>
      %743 = arith.mulf %512, %742 : vector<16x128xf32>
      %744 = arith.addf %741, %743 : vector<16x128xf32>
      %745 = vector.broadcast %153 : f32 to vector<16x128xf32>
      %746 = arith.mulf %544, %745 : vector<16x128xf32>
      %747 = arith.addf %744, %746 : vector<16x128xf32>
      %748 = vector.broadcast %154 : f32 to vector<16x128xf32>
      %749 = arith.mulf %576, %748 : vector<16x128xf32>
      %750 = arith.addf %747, %749 : vector<16x128xf32>
      %751 = vector.broadcast %155 : f32 to vector<16x128xf32>
      %752 = arith.mulf %608, %751 : vector<16x128xf32>
      %753 = arith.addf %750, %752 : vector<16x128xf32>
      %754 = vector.broadcast %156 : f32 to vector<16x128xf32>
      %755 = arith.mulf %640, %754 : vector<16x128xf32>
      %756 = arith.addf %753, %755 : vector<16x128xf32>
      %757 = vector.broadcast %157 : f32 to vector<16x128xf32>
      %758 = arith.mulf %672, %757 : vector<16x128xf32>
      %759 = arith.addf %756, %758 : vector<16x128xf32>
      %760 = vector.broadcast %158 : f32 to vector<16x128xf32>
      %761 = arith.mulf %704, %760 : vector<16x128xf32>
      %762 = arith.addf %759, %761 : vector<16x128xf32>
      %763 = vector.broadcast %159 : f32 to vector<16x128xf32>
      %764 = arith.mulf %736, %763 : vector<16x128xf32>
      %765 = arith.addf %762, %764 : vector<16x128xf32>
      %766 = vector.broadcast %250 : f32 to vector<16x128xf32>
      %767 = arith.addf %765, %766 : vector<16x128xf32>
      %768 = math.tanh %767 : vector<16x128xf32>
      %769 = vector.broadcast %160 : f32 to vector<16x128xf32>
      %770 = arith.mulf %448, %769 : vector<16x128xf32>
      %771 = vector.broadcast %161 : f32 to vector<16x128xf32>
      %772 = arith.mulf %480, %771 : vector<16x128xf32>
      %773 = arith.addf %770, %772 : vector<16x128xf32>
      %774 = vector.broadcast %162 : f32 to vector<16x128xf32>
      %775 = arith.mulf %512, %774 : vector<16x128xf32>
      %776 = arith.addf %773, %775 : vector<16x128xf32>
      %777 = vector.broadcast %163 : f32 to vector<16x128xf32>
      %778 = arith.mulf %544, %777 : vector<16x128xf32>
      %779 = arith.addf %776, %778 : vector<16x128xf32>
      %780 = vector.broadcast %164 : f32 to vector<16x128xf32>
      %781 = arith.mulf %576, %780 : vector<16x128xf32>
      %782 = arith.addf %779, %781 : vector<16x128xf32>
      %783 = vector.broadcast %165 : f32 to vector<16x128xf32>
      %784 = arith.mulf %608, %783 : vector<16x128xf32>
      %785 = arith.addf %782, %784 : vector<16x128xf32>
      %786 = vector.broadcast %166 : f32 to vector<16x128xf32>
      %787 = arith.mulf %640, %786 : vector<16x128xf32>
      %788 = arith.addf %785, %787 : vector<16x128xf32>
      %789 = vector.broadcast %167 : f32 to vector<16x128xf32>
      %790 = arith.mulf %672, %789 : vector<16x128xf32>
      %791 = arith.addf %788, %790 : vector<16x128xf32>
      %792 = vector.broadcast %168 : f32 to vector<16x128xf32>
      %793 = arith.mulf %704, %792 : vector<16x128xf32>
      %794 = arith.addf %791, %793 : vector<16x128xf32>
      %795 = vector.broadcast %169 : f32 to vector<16x128xf32>
      %796 = arith.mulf %736, %795 : vector<16x128xf32>
      %797 = arith.addf %794, %796 : vector<16x128xf32>
      %798 = vector.broadcast %251 : f32 to vector<16x128xf32>
      %799 = arith.addf %797, %798 : vector<16x128xf32>
      %800 = math.tanh %799 : vector<16x128xf32>
      %801 = vector.broadcast %170 : f32 to vector<16x128xf32>
      %802 = arith.mulf %448, %801 : vector<16x128xf32>
      %803 = vector.broadcast %171 : f32 to vector<16x128xf32>
      %804 = arith.mulf %480, %803 : vector<16x128xf32>
      %805 = arith.addf %802, %804 : vector<16x128xf32>
      %806 = vector.broadcast %172 : f32 to vector<16x128xf32>
      %807 = arith.mulf %512, %806 : vector<16x128xf32>
      %808 = arith.addf %805, %807 : vector<16x128xf32>
      %809 = vector.broadcast %173 : f32 to vector<16x128xf32>
      %810 = arith.mulf %544, %809 : vector<16x128xf32>
      %811 = arith.addf %808, %810 : vector<16x128xf32>
      %812 = vector.broadcast %174 : f32 to vector<16x128xf32>
      %813 = arith.mulf %576, %812 : vector<16x128xf32>
      %814 = arith.addf %811, %813 : vector<16x128xf32>
      %815 = vector.broadcast %175 : f32 to vector<16x128xf32>
      %816 = arith.mulf %608, %815 : vector<16x128xf32>
      %817 = arith.addf %814, %816 : vector<16x128xf32>
      %818 = vector.broadcast %176 : f32 to vector<16x128xf32>
      %819 = arith.mulf %640, %818 : vector<16x128xf32>
      %820 = arith.addf %817, %819 : vector<16x128xf32>
      %821 = vector.broadcast %177 : f32 to vector<16x128xf32>
      %822 = arith.mulf %672, %821 : vector<16x128xf32>
      %823 = arith.addf %820, %822 : vector<16x128xf32>
      %824 = vector.broadcast %178 : f32 to vector<16x128xf32>
      %825 = arith.mulf %704, %824 : vector<16x128xf32>
      %826 = arith.addf %823, %825 : vector<16x128xf32>
      %827 = vector.broadcast %179 : f32 to vector<16x128xf32>
      %828 = arith.mulf %736, %827 : vector<16x128xf32>
      %829 = arith.addf %826, %828 : vector<16x128xf32>
      %830 = vector.broadcast %252 : f32 to vector<16x128xf32>
      %831 = arith.addf %829, %830 : vector<16x128xf32>
      %832 = math.tanh %831 : vector<16x128xf32>
      %833 = vector.broadcast %180 : f32 to vector<16x128xf32>
      %834 = arith.mulf %448, %833 : vector<16x128xf32>
      %835 = vector.broadcast %181 : f32 to vector<16x128xf32>
      %836 = arith.mulf %480, %835 : vector<16x128xf32>
      %837 = arith.addf %834, %836 : vector<16x128xf32>
      %838 = vector.broadcast %182 : f32 to vector<16x128xf32>
      %839 = arith.mulf %512, %838 : vector<16x128xf32>
      %840 = arith.addf %837, %839 : vector<16x128xf32>
      %841 = vector.broadcast %183 : f32 to vector<16x128xf32>
      %842 = arith.mulf %544, %841 : vector<16x128xf32>
      %843 = arith.addf %840, %842 : vector<16x128xf32>
      %844 = vector.broadcast %184 : f32 to vector<16x128xf32>
      %845 = arith.mulf %576, %844 : vector<16x128xf32>
      %846 = arith.addf %843, %845 : vector<16x128xf32>
      %847 = vector.broadcast %185 : f32 to vector<16x128xf32>
      %848 = arith.mulf %608, %847 : vector<16x128xf32>
      %849 = arith.addf %846, %848 : vector<16x128xf32>
      %850 = vector.broadcast %186 : f32 to vector<16x128xf32>
      %851 = arith.mulf %640, %850 : vector<16x128xf32>
      %852 = arith.addf %849, %851 : vector<16x128xf32>
      %853 = vector.broadcast %187 : f32 to vector<16x128xf32>
      %854 = arith.mulf %672, %853 : vector<16x128xf32>
      %855 = arith.addf %852, %854 : vector<16x128xf32>
      %856 = vector.broadcast %188 : f32 to vector<16x128xf32>
      %857 = arith.mulf %704, %856 : vector<16x128xf32>
      %858 = arith.addf %855, %857 : vector<16x128xf32>
      %859 = vector.broadcast %189 : f32 to vector<16x128xf32>
      %860 = arith.mulf %736, %859 : vector<16x128xf32>
      %861 = arith.addf %858, %860 : vector<16x128xf32>
      %862 = vector.broadcast %253 : f32 to vector<16x128xf32>
      %863 = arith.addf %861, %862 : vector<16x128xf32>
      %864 = math.tanh %863 : vector<16x128xf32>
      %865 = vector.broadcast %190 : f32 to vector<16x128xf32>
      %866 = arith.mulf %448, %865 : vector<16x128xf32>
      %867 = vector.broadcast %191 : f32 to vector<16x128xf32>
      %868 = arith.mulf %480, %867 : vector<16x128xf32>
      %869 = arith.addf %866, %868 : vector<16x128xf32>
      %870 = vector.broadcast %192 : f32 to vector<16x128xf32>
      %871 = arith.mulf %512, %870 : vector<16x128xf32>
      %872 = arith.addf %869, %871 : vector<16x128xf32>
      %873 = vector.broadcast %193 : f32 to vector<16x128xf32>
      %874 = arith.mulf %544, %873 : vector<16x128xf32>
      %875 = arith.addf %872, %874 : vector<16x128xf32>
      %876 = vector.broadcast %194 : f32 to vector<16x128xf32>
      %877 = arith.mulf %576, %876 : vector<16x128xf32>
      %878 = arith.addf %875, %877 : vector<16x128xf32>
      %879 = vector.broadcast %195 : f32 to vector<16x128xf32>
      %880 = arith.mulf %608, %879 : vector<16x128xf32>
      %881 = arith.addf %878, %880 : vector<16x128xf32>
      %882 = vector.broadcast %196 : f32 to vector<16x128xf32>
      %883 = arith.mulf %640, %882 : vector<16x128xf32>
      %884 = arith.addf %881, %883 : vector<16x128xf32>
      %885 = vector.broadcast %197 : f32 to vector<16x128xf32>
      %886 = arith.mulf %672, %885 : vector<16x128xf32>
      %887 = arith.addf %884, %886 : vector<16x128xf32>
      %888 = vector.broadcast %198 : f32 to vector<16x128xf32>
      %889 = arith.mulf %704, %888 : vector<16x128xf32>
      %890 = arith.addf %887, %889 : vector<16x128xf32>
      %891 = vector.broadcast %199 : f32 to vector<16x128xf32>
      %892 = arith.mulf %736, %891 : vector<16x128xf32>
      %893 = arith.addf %890, %892 : vector<16x128xf32>
      %894 = vector.broadcast %254 : f32 to vector<16x128xf32>
      %895 = arith.addf %893, %894 : vector<16x128xf32>
      %896 = math.tanh %895 : vector<16x128xf32>
      %897 = vector.broadcast %200 : f32 to vector<16x128xf32>
      %898 = arith.mulf %448, %897 : vector<16x128xf32>
      %899 = vector.broadcast %201 : f32 to vector<16x128xf32>
      %900 = arith.mulf %480, %899 : vector<16x128xf32>
      %901 = arith.addf %898, %900 : vector<16x128xf32>
      %902 = vector.broadcast %202 : f32 to vector<16x128xf32>
      %903 = arith.mulf %512, %902 : vector<16x128xf32>
      %904 = arith.addf %901, %903 : vector<16x128xf32>
      %905 = vector.broadcast %203 : f32 to vector<16x128xf32>
      %906 = arith.mulf %544, %905 : vector<16x128xf32>
      %907 = arith.addf %904, %906 : vector<16x128xf32>
      %908 = vector.broadcast %204 : f32 to vector<16x128xf32>
      %909 = arith.mulf %576, %908 : vector<16x128xf32>
      %910 = arith.addf %907, %909 : vector<16x128xf32>
      %911 = vector.broadcast %205 : f32 to vector<16x128xf32>
      %912 = arith.mulf %608, %911 : vector<16x128xf32>
      %913 = arith.addf %910, %912 : vector<16x128xf32>
      %914 = vector.broadcast %206 : f32 to vector<16x128xf32>
      %915 = arith.mulf %640, %914 : vector<16x128xf32>
      %916 = arith.addf %913, %915 : vector<16x128xf32>
      %917 = vector.broadcast %207 : f32 to vector<16x128xf32>
      %918 = arith.mulf %672, %917 : vector<16x128xf32>
      %919 = arith.addf %916, %918 : vector<16x128xf32>
      %920 = vector.broadcast %208 : f32 to vector<16x128xf32>
      %921 = arith.mulf %704, %920 : vector<16x128xf32>
      %922 = arith.addf %919, %921 : vector<16x128xf32>
      %923 = vector.broadcast %209 : f32 to vector<16x128xf32>
      %924 = arith.mulf %736, %923 : vector<16x128xf32>
      %925 = arith.addf %922, %924 : vector<16x128xf32>
      %926 = vector.broadcast %255 : f32 to vector<16x128xf32>
      %927 = arith.addf %925, %926 : vector<16x128xf32>
      %928 = math.tanh %927 : vector<16x128xf32>
      %929 = vector.broadcast %210 : f32 to vector<16x128xf32>
      %930 = arith.mulf %448, %929 : vector<16x128xf32>
      %931 = vector.broadcast %211 : f32 to vector<16x128xf32>
      %932 = arith.mulf %480, %931 : vector<16x128xf32>
      %933 = arith.addf %930, %932 : vector<16x128xf32>
      %934 = vector.broadcast %212 : f32 to vector<16x128xf32>
      %935 = arith.mulf %512, %934 : vector<16x128xf32>
      %936 = arith.addf %933, %935 : vector<16x128xf32>
      %937 = vector.broadcast %213 : f32 to vector<16x128xf32>
      %938 = arith.mulf %544, %937 : vector<16x128xf32>
      %939 = arith.addf %936, %938 : vector<16x128xf32>
      %940 = vector.broadcast %214 : f32 to vector<16x128xf32>
      %941 = arith.mulf %576, %940 : vector<16x128xf32>
      %942 = arith.addf %939, %941 : vector<16x128xf32>
      %943 = vector.broadcast %215 : f32 to vector<16x128xf32>
      %944 = arith.mulf %608, %943 : vector<16x128xf32>
      %945 = arith.addf %942, %944 : vector<16x128xf32>
      %946 = vector.broadcast %216 : f32 to vector<16x128xf32>
      %947 = arith.mulf %640, %946 : vector<16x128xf32>
      %948 = arith.addf %945, %947 : vector<16x128xf32>
      %949 = vector.broadcast %217 : f32 to vector<16x128xf32>
      %950 = arith.mulf %672, %949 : vector<16x128xf32>
      %951 = arith.addf %948, %950 : vector<16x128xf32>
      %952 = vector.broadcast %218 : f32 to vector<16x128xf32>
      %953 = arith.mulf %704, %952 : vector<16x128xf32>
      %954 = arith.addf %951, %953 : vector<16x128xf32>
      %955 = vector.broadcast %219 : f32 to vector<16x128xf32>
      %956 = arith.mulf %736, %955 : vector<16x128xf32>
      %957 = arith.addf %954, %956 : vector<16x128xf32>
      %958 = vector.broadcast %256 : f32 to vector<16x128xf32>
      %959 = arith.addf %957, %958 : vector<16x128xf32>
      %960 = math.tanh %959 : vector<16x128xf32>
      %961 = vector.broadcast %220 : f32 to vector<16x128xf32>
      %962 = arith.mulf %448, %961 : vector<16x128xf32>
      %963 = vector.broadcast %221 : f32 to vector<16x128xf32>
      %964 = arith.mulf %480, %963 : vector<16x128xf32>
      %965 = arith.addf %962, %964 : vector<16x128xf32>
      %966 = vector.broadcast %222 : f32 to vector<16x128xf32>
      %967 = arith.mulf %512, %966 : vector<16x128xf32>
      %968 = arith.addf %965, %967 : vector<16x128xf32>
      %969 = vector.broadcast %223 : f32 to vector<16x128xf32>
      %970 = arith.mulf %544, %969 : vector<16x128xf32>
      %971 = arith.addf %968, %970 : vector<16x128xf32>
      %972 = vector.broadcast %224 : f32 to vector<16x128xf32>
      %973 = arith.mulf %576, %972 : vector<16x128xf32>
      %974 = arith.addf %971, %973 : vector<16x128xf32>
      %975 = vector.broadcast %225 : f32 to vector<16x128xf32>
      %976 = arith.mulf %608, %975 : vector<16x128xf32>
      %977 = arith.addf %974, %976 : vector<16x128xf32>
      %978 = vector.broadcast %226 : f32 to vector<16x128xf32>
      %979 = arith.mulf %640, %978 : vector<16x128xf32>
      %980 = arith.addf %977, %979 : vector<16x128xf32>
      %981 = vector.broadcast %227 : f32 to vector<16x128xf32>
      %982 = arith.mulf %672, %981 : vector<16x128xf32>
      %983 = arith.addf %980, %982 : vector<16x128xf32>
      %984 = vector.broadcast %228 : f32 to vector<16x128xf32>
      %985 = arith.mulf %704, %984 : vector<16x128xf32>
      %986 = arith.addf %983, %985 : vector<16x128xf32>
      %987 = vector.broadcast %229 : f32 to vector<16x128xf32>
      %988 = arith.mulf %736, %987 : vector<16x128xf32>
      %989 = arith.addf %986, %988 : vector<16x128xf32>
      %990 = vector.broadcast %257 : f32 to vector<16x128xf32>
      %991 = arith.addf %989, %990 : vector<16x128xf32>
      %992 = math.tanh %991 : vector<16x128xf32>
      %993 = vector.broadcast %230 : f32 to vector<16x128xf32>
      %994 = arith.mulf %448, %993 : vector<16x128xf32>
      %995 = vector.broadcast %231 : f32 to vector<16x128xf32>
      %996 = arith.mulf %480, %995 : vector<16x128xf32>
      %997 = arith.addf %994, %996 : vector<16x128xf32>
      %998 = vector.broadcast %232 : f32 to vector<16x128xf32>
      %999 = arith.mulf %512, %998 : vector<16x128xf32>
      %1000 = arith.addf %997, %999 : vector<16x128xf32>
      %1001 = vector.broadcast %233 : f32 to vector<16x128xf32>
      %1002 = arith.mulf %544, %1001 : vector<16x128xf32>
      %1003 = arith.addf %1000, %1002 : vector<16x128xf32>
      %1004 = vector.broadcast %234 : f32 to vector<16x128xf32>
      %1005 = arith.mulf %576, %1004 : vector<16x128xf32>
      %1006 = arith.addf %1003, %1005 : vector<16x128xf32>
      %1007 = vector.broadcast %235 : f32 to vector<16x128xf32>
      %1008 = arith.mulf %608, %1007 : vector<16x128xf32>
      %1009 = arith.addf %1006, %1008 : vector<16x128xf32>
      %1010 = vector.broadcast %236 : f32 to vector<16x128xf32>
      %1011 = arith.mulf %640, %1010 : vector<16x128xf32>
      %1012 = arith.addf %1009, %1011 : vector<16x128xf32>
      %1013 = vector.broadcast %237 : f32 to vector<16x128xf32>
      %1014 = arith.mulf %672, %1013 : vector<16x128xf32>
      %1015 = arith.addf %1012, %1014 : vector<16x128xf32>
      %1016 = vector.broadcast %238 : f32 to vector<16x128xf32>
      %1017 = arith.mulf %704, %1016 : vector<16x128xf32>
      %1018 = arith.addf %1015, %1017 : vector<16x128xf32>
      %1019 = vector.broadcast %239 : f32 to vector<16x128xf32>
      %1020 = arith.mulf %736, %1019 : vector<16x128xf32>
      %1021 = arith.addf %1018, %1020 : vector<16x128xf32>
      %1022 = vector.broadcast %258 : f32 to vector<16x128xf32>
      %1023 = arith.addf %1021, %1022 : vector<16x128xf32>
      %1024 = math.tanh %1023 : vector<16x128xf32>
      %1025 = vector.broadcast %240 : f32 to vector<16x128xf32>
      %1026 = arith.mulf %448, %1025 : vector<16x128xf32>
      %1027 = vector.broadcast %241 : f32 to vector<16x128xf32>
      %1028 = arith.mulf %480, %1027 : vector<16x128xf32>
      %1029 = arith.addf %1026, %1028 : vector<16x128xf32>
      %1030 = vector.broadcast %242 : f32 to vector<16x128xf32>
      %1031 = arith.mulf %512, %1030 : vector<16x128xf32>
      %1032 = arith.addf %1029, %1031 : vector<16x128xf32>
      %1033 = vector.broadcast %243 : f32 to vector<16x128xf32>
      %1034 = arith.mulf %544, %1033 : vector<16x128xf32>
      %1035 = arith.addf %1032, %1034 : vector<16x128xf32>
      %1036 = vector.broadcast %244 : f32 to vector<16x128xf32>
      %1037 = arith.mulf %576, %1036 : vector<16x128xf32>
      %1038 = arith.addf %1035, %1037 : vector<16x128xf32>
      %1039 = vector.broadcast %245 : f32 to vector<16x128xf32>
      %1040 = arith.mulf %608, %1039 : vector<16x128xf32>
      %1041 = arith.addf %1038, %1040 : vector<16x128xf32>
      %1042 = vector.broadcast %246 : f32 to vector<16x128xf32>
      %1043 = arith.mulf %640, %1042 : vector<16x128xf32>
      %1044 = arith.addf %1041, %1043 : vector<16x128xf32>
      %1045 = vector.broadcast %247 : f32 to vector<16x128xf32>
      %1046 = arith.mulf %672, %1045 : vector<16x128xf32>
      %1047 = arith.addf %1044, %1046 : vector<16x128xf32>
      %1048 = vector.broadcast %248 : f32 to vector<16x128xf32>
      %1049 = arith.mulf %704, %1048 : vector<16x128xf32>
      %1050 = arith.addf %1047, %1049 : vector<16x128xf32>
      %1051 = vector.broadcast %249 : f32 to vector<16x128xf32>
      %1052 = arith.mulf %736, %1051 : vector<16x128xf32>
      %1053 = arith.addf %1050, %1052 : vector<16x128xf32>
      %1054 = vector.broadcast %259 : f32 to vector<16x128xf32>
      %1055 = arith.addf %1053, %1054 : vector<16x128xf32>
      %1056 = math.tanh %1055 : vector<16x128xf32>
      %1057 = vector.broadcast %260 : f32 to vector<16x128xf32>
      %1058 = arith.mulf %768, %1057 : vector<16x128xf32>
      %1059 = vector.broadcast %261 : f32 to vector<16x128xf32>
      %1060 = arith.mulf %800, %1059 : vector<16x128xf32>
      %1061 = arith.addf %1058, %1060 : vector<16x128xf32>
      %1062 = vector.broadcast %262 : f32 to vector<16x128xf32>
      %1063 = arith.mulf %832, %1062 : vector<16x128xf32>
      %1064 = arith.addf %1061, %1063 : vector<16x128xf32>
      %1065 = vector.broadcast %263 : f32 to vector<16x128xf32>
      %1066 = arith.mulf %864, %1065 : vector<16x128xf32>
      %1067 = arith.addf %1064, %1066 : vector<16x128xf32>
      %1068 = vector.broadcast %264 : f32 to vector<16x128xf32>
      %1069 = arith.mulf %896, %1068 : vector<16x128xf32>
      %1070 = arith.addf %1067, %1069 : vector<16x128xf32>
      %1071 = vector.broadcast %265 : f32 to vector<16x128xf32>
      %1072 = arith.mulf %928, %1071 : vector<16x128xf32>
      %1073 = arith.addf %1070, %1072 : vector<16x128xf32>
      %1074 = vector.broadcast %266 : f32 to vector<16x128xf32>
      %1075 = arith.mulf %960, %1074 : vector<16x128xf32>
      %1076 = arith.addf %1073, %1075 : vector<16x128xf32>
      %1077 = vector.broadcast %267 : f32 to vector<16x128xf32>
      %1078 = arith.mulf %992, %1077 : vector<16x128xf32>
      %1079 = arith.addf %1076, %1078 : vector<16x128xf32>
      %1080 = vector.broadcast %268 : f32 to vector<16x128xf32>
      %1081 = arith.mulf %1024, %1080 : vector<16x128xf32>
      %1082 = arith.addf %1079, %1081 : vector<16x128xf32>
      %1083 = vector.broadcast %269 : f32 to vector<16x128xf32>
      %1084 = arith.mulf %1056, %1083 : vector<16x128xf32>
      %1085 = arith.addf %1082, %1084 : vector<16x128xf32>
      %1086 = vector.broadcast %290 : f32 to vector<16x128xf32>
      %1087 = arith.addf %1085, %1086 : vector<16x128xf32>
      %1088 = vector.broadcast %270 : f32 to vector<16x128xf32>
      %1089 = arith.mulf %768, %1088 : vector<16x128xf32>
      %1090 = vector.broadcast %271 : f32 to vector<16x128xf32>
      %1091 = arith.mulf %800, %1090 : vector<16x128xf32>
      %1092 = arith.addf %1089, %1091 : vector<16x128xf32>
      %1093 = vector.broadcast %272 : f32 to vector<16x128xf32>
      %1094 = arith.mulf %832, %1093 : vector<16x128xf32>
      %1095 = arith.addf %1092, %1094 : vector<16x128xf32>
      %1096 = vector.broadcast %273 : f32 to vector<16x128xf32>
      %1097 = arith.mulf %864, %1096 : vector<16x128xf32>
      %1098 = arith.addf %1095, %1097 : vector<16x128xf32>
      %1099 = vector.broadcast %274 : f32 to vector<16x128xf32>
      %1100 = arith.mulf %896, %1099 : vector<16x128xf32>
      %1101 = arith.addf %1098, %1100 : vector<16x128xf32>
      %1102 = vector.broadcast %275 : f32 to vector<16x128xf32>
      %1103 = arith.mulf %928, %1102 : vector<16x128xf32>
      %1104 = arith.addf %1101, %1103 : vector<16x128xf32>
      %1105 = vector.broadcast %276 : f32 to vector<16x128xf32>
      %1106 = arith.mulf %960, %1105 : vector<16x128xf32>
      %1107 = arith.addf %1104, %1106 : vector<16x128xf32>
      %1108 = vector.broadcast %277 : f32 to vector<16x128xf32>
      %1109 = arith.mulf %992, %1108 : vector<16x128xf32>
      %1110 = arith.addf %1107, %1109 : vector<16x128xf32>
      %1111 = vector.broadcast %278 : f32 to vector<16x128xf32>
      %1112 = arith.mulf %1024, %1111 : vector<16x128xf32>
      %1113 = arith.addf %1110, %1112 : vector<16x128xf32>
      %1114 = vector.broadcast %279 : f32 to vector<16x128xf32>
      %1115 = arith.mulf %1056, %1114 : vector<16x128xf32>
      %1116 = arith.addf %1113, %1115 : vector<16x128xf32>
      %1117 = vector.broadcast %291 : f32 to vector<16x128xf32>
      %1118 = arith.addf %1116, %1117 : vector<16x128xf32>
      %1119 = vector.broadcast %280 : f32 to vector<16x128xf32>
      %1120 = arith.mulf %768, %1119 : vector<16x128xf32>
      %1121 = vector.broadcast %281 : f32 to vector<16x128xf32>
      %1122 = arith.mulf %800, %1121 : vector<16x128xf32>
      %1123 = arith.addf %1120, %1122 : vector<16x128xf32>
      %1124 = vector.broadcast %282 : f32 to vector<16x128xf32>
      %1125 = arith.mulf %832, %1124 : vector<16x128xf32>
      %1126 = arith.addf %1123, %1125 : vector<16x128xf32>
      %1127 = vector.broadcast %283 : f32 to vector<16x128xf32>
      %1128 = arith.mulf %864, %1127 : vector<16x128xf32>
      %1129 = arith.addf %1126, %1128 : vector<16x128xf32>
      %1130 = vector.broadcast %284 : f32 to vector<16x128xf32>
      %1131 = arith.mulf %896, %1130 : vector<16x128xf32>
      %1132 = arith.addf %1129, %1131 : vector<16x128xf32>
      %1133 = vector.broadcast %285 : f32 to vector<16x128xf32>
      %1134 = arith.mulf %928, %1133 : vector<16x128xf32>
      %1135 = arith.addf %1132, %1134 : vector<16x128xf32>
      %1136 = vector.broadcast %286 : f32 to vector<16x128xf32>
      %1137 = arith.mulf %960, %1136 : vector<16x128xf32>
      %1138 = arith.addf %1135, %1137 : vector<16x128xf32>
      %1139 = vector.broadcast %287 : f32 to vector<16x128xf32>
      %1140 = arith.mulf %992, %1139 : vector<16x128xf32>
      %1141 = arith.addf %1138, %1140 : vector<16x128xf32>
      %1142 = vector.broadcast %288 : f32 to vector<16x128xf32>
      %1143 = arith.mulf %1024, %1142 : vector<16x128xf32>
      %1144 = arith.addf %1141, %1143 : vector<16x128xf32>
      %1145 = vector.broadcast %289 : f32 to vector<16x128xf32>
      %1146 = arith.mulf %1056, %1145 : vector<16x128xf32>
      %1147 = arith.addf %1144, %1146 : vector<16x128xf32>
      %1148 = vector.broadcast %292 : f32 to vector<16x128xf32>
      %1149 = arith.addf %1147, %1148 : vector<16x128xf32>
      %c0_9 = arith.constant 0 : index
      %1150 = arith.index_cast %297 : i32 to index
      %c0_10 = arith.constant 0 : index
      %1151 = vector.load %arg3[%c0_9, %1150, %c0_10] : memref<3x32x128xf32, #tpu.memory_space<vmem>>, vector<1x16x128xf32>
      %1152 = vector.shape_cast %1151 : vector<1x16x128xf32> to vector<16x128xf32>
      %1153 = vector.shape_cast %1087 : vector<16x128xf32> to vector<1x16x128xf32>
      tpu.vector_store %arg3[%c0_9, %1150, %c0_10], %1153 {strides = array<i32>} : memref<3x32x128xf32, #tpu.memory_space<vmem>>, vector<1x16x128xf32>,
      %c1_11 = arith.constant 1 : index
      %1154 = arith.index_cast %297 : i32 to index
      %c0_12 = arith.constant 0 : index
      %1155 = vector.load %arg3[%c1_11, %1154, %c0_12] : memref<3x32x128xf32, #tpu.memory_space<vmem>>, vector<1x16x128xf32>
      %1156 = vector.shape_cast %1155 : vector<1x16x128xf32> to vector<16x128xf32>
      %1157 = vector.shape_cast %1118 : vector<16x128xf32> to vector<1x16x128xf32>
      tpu.vector_store %arg3[%c1_11, %1154, %c0_12], %1157 {strides = array<i32>} : memref<3x32x128xf32, #tpu.memory_space<vmem>>, vector<1x16x128xf32>,
      %c2_13 = arith.constant 2 : index
      %1158 = arith.index_cast %297 : i32 to index
      %c0_14 = arith.constant 0 : index
      %1159 = vector.load %arg3[%c2_13, %1158, %c0_14] : memref<3x32x128xf32, #tpu.memory_space<vmem>>, vector<1x16x128xf32>
      %1160 = vector.shape_cast %1159 : vector<1x16x128xf32> to vector<16x128xf32>
      %1161 = vector.shape_cast %1149 : vector<16x128xf32> to vector<1x16x128xf32>
      tpu.vector_store %arg3[%c2_13, %1158, %c0_14], %1161 {strides = array<i32>} : memref<3x32x128xf32, #tpu.memory_space<vmem>>, vector<1x16x128xf32>,
    }
    %c2_i32_0 = arith.constant 2 : i32
    return
  }
  func.func @transform_0(%arg0: i32, %arg1: memref<293xf32, #tpu.memory_space<smem>>) -> (i32, i32, i32) {
    %c0_i32 = arith.constant 0 : i32
    %c0_i32_0 = arith.constant 0 : i32
    %c0_i32_1 = arith.constant 0 : i32
    return %c0_i32, %arg0, %c0_i32_0 : i32, i32, i32
  }
  func.func @transform_1(%arg0: i32, %arg1: memref<293xf32, #tpu.memory_space<smem>>) -> (i32, i32, i32) {
    %c0_i32 = arith.constant 0 : i32
    %c0_i32_0 = arith.constant 0 : i32
    %c0_i32_1 = arith.constant 0 : i32
    return %c0_i32, %arg0, %c0_i32_0 : i32, i32, i32
  }
}

</mosaic_0001>

<llo_original>
// kernel: tpu_custom_call.1
$region0: #{tpu_custom_call.1}
  #allocation0 [shape = 'u32[]', space=smem, size = 0x4, offset = 0x4, fixed_abs, tag = 'smem constant byte address 0x4 - core index']
  #allocation1 [shape = 'u32[144,128]{1,0:T(1,128)}', space=vmem, size = 0x12000, scoped, tag = 'internal scratch']
  #allocation2 [shape = 's32[1]{0}', space=sflag, size = 0x4, scoped, tag = 'scoped memory for tpu_custom_call.1']
  #allocation3 [shape = 'u8[1536]{0}', space=smem, size = 0x600, scoped, tag = 'prefetched SMEM operand 0']
  #allocation8 [shape = 's32[]', space=sflag, size = 0x4, offset = 0, fixed_abs, tag = 'sflag constant byte address 0x0 - dummy sync flag']
  #allocation10 [shape = 's32[]', space=sflag, size = 0x4, offset = 0, fixed_abs, tag = 'sflag constant byte address 0x0 - dummy sync flag']
  %s0 = inlined_call_operand.hbm [shape: f32[293], index: 0, kind: input, shape index: {}]
  %s1 = inlined_call_operand.hbm [shape: f32[3,64,128], index: 1, kind: input, shape index: {}]
  %s2 = inlined_call_operand.hbm [shape: f32[3,64,128], index: 2, kind: output, shape index: {}]
  %s3 = sld [smem:[#allocation0]]
  $region48: #{tpu_custom_call.1} parent=0
    _
  %s5 = ssub.s32 1, %s3
  %s6 = scalar_select 0, %s5, %s3
  %8 = dma.hbm_to_smem %s0, 48, [#allocation3], [#allocation2]
  %9 = dma.done [#allocation2], 48
  %10 = sfence
  $region1: #{tpu_custom_call.1} parent=0
    #allocation4 [shape = 'u8[98304]{0}', space=vmem, size = 0x18000, scoped, tag = 'input window, operand 1']
    #allocation5 [shape = 's32[2]{0}', space=sflag, size = 0x8, scoped, tag = 'scoped memory for tpu_custom_call.1']
    #allocation6 [shape = 's32[2]{0}', space=sflag, size = 0x8, scoped, tag = 'scoped memory for tpu_custom_call.1']
    #allocation7 [shape = 'u8[98304]{0}', space=vmem, size = 0x18000, scoped, tag = 'output window, operand 0']
    %11 = vsyncpa [#allocation5], 0
    %s12 = scalar_lea.sflag [#allocation5], 1
    %13 = vsyncpa %s12, 0
    %14 = vsyncpa [#allocation6], 0
    %s15 = scalar_lea.sflag [#allocation6], 1
    %16 = vsyncpa %s15, 0
    loop: start=0, step=1, limit=4
    $region2: #{tpu_custom_call.1} parent=1 // loop_pre_header
      _
    $region3: #{tpu_custom_call.1} parent=1 // loop_header
      %s18 = sphi 0, %s22
      %p19 = scmp.ge.s32.totalorder %s18, 4
      %s28 = sphi 0, %s30
      %s31 = sphi 0, %s28
      %s32 = sphi 0, %s31
      %s48 = sphi 0, %s32
      %s54 = sphi 0, %s56
      %s57 = sphi 0, %s54
      %s58 = sphi 0, %s57
      %s74 = sphi 0, %s58
    $region4: #{tpu_custom_call.1} parent=1 // loop_header_branch
      %21 = sbr.rel (%p19) target = $region8
    $region5: #{tpu_custom_call.1} parent=1 // loop_body
      %s23 = ssub.s32 %s18, 1
      %s24 = ssub.s32 %s18, 2
      %s25 = sadd.s32 %s18, 1
      %s26 = ssub.s32 %s18, %s25
      %p27 = scmp.eq.s32.totalorder %s26, 0
      %s29 = sadd.s32 %s28, 1
      %s30 = scalar_select %p27, %s28, %s29
      %p33 = pneg %p27
      %p34 = scmp.eq.s32.totalorder %s18, 1
      %p35 = por %p33, %p34
      %p36 = scmp.ne.s32.totalorder %s28, %s31
      %p37 = scmp.eq.s32.totalorder %s18, 0
      %p38 = por %p36, %p37
      %p39 = scmp.ne.s32.totalorder %s28, %s31
      %p40 = scmp.eq.s32.totalorder %s23, 1
      %p41 = por %p39, %p40
      %p42 = scmp.ne.s32.totalorder %s31, %s32
      %p43 = scmp.eq.s32.totalorder %s23, 0
      %p44 = por %p42, %p43
      %p45 = scmp.ne.s32.totalorder %s31, %s32
      %p46 = scmp.eq.s32.totalorder %s24, 1
      %p47 = por %p45, %p46
      %p49 = scmp.ne.s32.totalorder %s32, %s48
      %p50 = scmp.eq.s32.totalorder %s24, 0
      %p51 = por %p49, %p50
      %s52 = ssub.s32 %s18, %s25
      %p53 = scmp.eq.s32.totalorder %s52, 0
      %s55 = sadd.s32 %s54, 1
      %s56 = scalar_select %p53, %s54, %s55
      %p59 = pneg %p53
      %p60 = scmp.eq.s32.totalorder %s18, 1
      %p61 = por %p59, %p60
      %p62 = scmp.ne.s32.totalorder %s54, %s57
      %p63 = scmp.eq.s32.totalorder %s18, 0
      %p64 = por %p62, %p63
      %p65 = scmp.ne.s32.totalorder %s54, %s57
      %p66 = scmp.eq.s32.totalorder %s23, 1
      %p67 = por %p65, %p66
      %p68 = scmp.ne.s32.totalorder %s57, %s58
      %p69 = scmp.eq.s32.totalorder %s23, 0
      %p70 = por %p68, %p69
      %p71 = scmp.ne.s32.totalorder %s57, %s58
      %p72 = scmp.eq.s32.totalorder %s24, 1
      %p73 = por %p71, %p72
      %p75 = scmp.ne.s32.totalorder %s58, %s74
      %p76 = scmp.eq.s32.totalorder %s24, 0
      %p77 = por %p75, %p76
      %p78 = scmp.le.s32.totalorder 1, %s18
      %p79 = scmp.lt.s32.totalorder %s18, 3
      %p80 = pnand %p78, %p79
      %p81 = pneg %p80
      // Predicated region
      $region9: #{tpu_custom_call.1} parent=5 // pred_check
        _
      $region10: #{tpu_custom_call.1} parent=5 // pred_check_branch
        %83 = sbr.rel (%p80) target = $region12
      $region11: #{tpu_custom_call.1} parent=5 // pred_region
        %s84 = ssub.s32 %s18, 1
      $region12: #{tpu_custom_call.1} parent=5 // pred_fallthru
        _
      %p85 = scmp.lt.s32.totalorder %s18, 2
      // Predicated region
      $region13: #{tpu_custom_call.1} parent=5 // pred_check
        %p86 = pneg %p85
      $region14: #{tpu_custom_call.1} parent=5 // pred_check_branch
        %88 = sbr.rel (%p86) target = $region16
      $region15: #{tpu_custom_call.1} parent=5 // pred_region
        // Predicated region
        $region17: #{tpu_custom_call.1} parent=15 // pred_check
          %p89 = pneg %p38
        $region18: #{tpu_custom_call.1} parent=15 // pred_check_branch
          %91 = sbr.rel (%p89) target = $region20
        $region19: #{tpu_custom_call.1} parent=15 // pred_region
          #allocation9 [shape = 'u32[6]{0}', space=smem, size = 0x18, scoped, tag = 'DMA stride descriptor']
          %s92 = sand.u32 %s28, 1
          %s93 = scalar_lea.sflag [#allocation5], %s92
          %s94 = sand.u32 %s28, 1
          %s95 = smul.addr %s94, 96
          %s96 = scalar_lea.vmem [#allocation4], %s95
          %s97 = smul.u32 4, %s18
          %s99 = ssub.s32 1536, 1536
          %100 = vsyncadd %s93, %s99
          %s101 = smul.addr %s97, 128
          %s102 = scalar_lea.hbm %s1, %s101
          %s104 = sshll.u32 1, 14
          %s105 = sxor.u32 4294967295, %s104
          %s107 = sld [smem:[#allocation0]]
          %s108 = sadd.s32 2, %s107
          %s110 = sshll.u32 7, 26
          %s111 = sxor.u32 4294967295, %s110
          %s112 = sand.u32 0, %s111
          %s113 = sshll.u32 %s108, 26
          %s114 = sor.u32 %s112, %s113
          %s115 = sshll.u32 %s96, 4
          %s116 = int_to_ptr.vmem [resolvable:$true] %s115
          %122 = sst [smem:[#allocation9]] 1024
          %s123 = scalar_lea.smem [#allocation9], 1
          %124 = sst [smem:[%s123]] 512
          %s125 = scalar_lea.smem [#allocation9], 2
          %126 = sst [smem:[%s125]] 4
          %s127 = scalar_lea.smem [#allocation9], 3
          %128 = sst [smem:[%s127]] 128
          %s129 = scalar_lea.smem [#allocation9], 4
          %130 = sst [smem:[%s129]] 128
          %s131 = scalar_lea.smem [#allocation9], 5
          %132 = sst [smem:[%s131]] 8
          %134 = dma.general %s102, 1536, %s116, %s93, [#allocation8], [#allocation9], %s114, 0
        $region20: #{tpu_custom_call.1} parent=15 // pred_fallthru
          _
      $region16: #{tpu_custom_call.1} parent=5 // pred_fallthru
        _
      %p135 = scmp.le.s32.totalorder 1, %s18
      %p136 = scmp.lt.s32.totalorder %s18, 3
      %p137 = pnand %p135, %p136
      %p138 = pneg %p137
      // Predicated region
      $region21: #{tpu_custom_call.1} parent=5 // pred_check
        _
      $region22: #{tpu_custom_call.1} parent=5 // pred_check_branch
        %140 = sbr.rel (%p137) target = $region24
      $region23: #{tpu_custom_call.1} parent=5 // pred_region
        %s141 = ssub.s32 %s18, 1
        %s142 = sand.u32 %s31, 1
        %s143 = scalar_lea.sflag [#allocation5], %s142
        %s144 = sand.u32 %s31, 1
        %s145 = smul.addr %s144, 96
        %s146 = scalar_lea.vmem [#allocation4], %s145
        // Predicated region
        $region25: #{tpu_custom_call.1} parent=23 // pred_check
          %p147 = pneg %p44
        $region26: #{tpu_custom_call.1} parent=23 // pred_check_branch
          %149 = sbr.rel (%p147) target = $region28
        $region27: #{tpu_custom_call.1} parent=23 // pred_region
          %150 = dma.done %s143, 1536
        $region28: #{tpu_custom_call.1} parent=23 // pred_fallthru
          _
        %s151 = sand.u32 %s31, 1
        %s152 = scalar_lea.sflag [#allocation5], %s151
        %s153 = sand.u32 %s31, 1
        %s154 = smul.addr %s153, 96
        %s155 = scalar_lea.vmem [#allocation4], %s154
        %p156 = pneg %p44
        %p157 = pneg %p41
        %p158 = pneg %p70
        %p159 = pneg %p67
        %s160 = sand.u32 %s57, 1
        %s161 = scalar_lea.sflag [#allocation6], %s160
        %s162 = sand.u32 %s57, 1
        %s163 = smul.addr %s162, 96
        %s164 = scalar_lea.vmem [#allocation7], %s163
        %s165 = smul.u32 4, %s23
        %s166 = smul.u32 4, %s23
        %s167 = sld [smem:[#allocation3]]
        %s168 = sld [smem:[#allocation3 + $0xa]]
        %s169 = sld [smem:[#allocation3 + $0x14]]
        %s170 = sld [smem:[#allocation3 + $0x1]]
        %s171 = sld [smem:[#allocation3 + $0xb]]
        %s172 = sld [smem:[#allocation3 + $0x15]]
        %s173 = sld [smem:[#allocation3 + $0x2]]
        %s174 = sld [smem:[#allocation3 + $0xc]]
        %s175 = sld [smem:[#allocation3 + $0x16]]
        %s176 = sld [smem:[#allocation3 + $0x3]]
        %s177 = sld [smem:[#allocation3 + $0xd]]
        %s178 = sld [smem:[#allocation3 + $0x17]]
        %s179 = sld [smem:[#allocation3 + $0x4]]
        %s180 = sld [smem:[#allocation3 + $0xe]]
        %s181 = sld [smem:[#allocation3 + $0x18]]
        %s182 = sld [smem:[#allocation3 + $0x5]]
        %s183 = sld [smem:[#allocation3 + $0xf]]
        %s184 = sld [smem:[#allocation3 + $0x19]]
        %s185 = sld [smem:[#allocation3 + $0x6]]
        %s186 = sld [smem:[#allocation3 + $0x10]]
        %s187 = sld [smem:[#allocation3 + $0x1a]]
        %s188 = sld [smem:[#allocation3 + $0x7]]
        %s189 = sld [smem:[#allocation3 + $0x11]]
        %s190 = sld [smem:[#allocation3 + $0x1b]]
        %s191 = sld [smem:[#allocation3 + $0x8]]
        %s192 = sld [smem:[#allocation3 + $0x12]]
        %s193 = sld [smem:[#allocation3 + $0x1c]]
        %s194 = sld [smem:[#allocation3 + $0x9]]
        %s195 = sld [smem:[#allocation3 + $0x13]]
        %s196 = sld [smem:[#allocation3 + $0x1d]]
        %s197 = sld [smem:[#allocation3 + $0x1e]]
        %s198 = sld [smem:[#allocation3 + $0x1f]]
        %s199 = sld [smem:[#allocation3 + $0x20]]
        %s200 = sld [smem:[#allocation3 + $0x21]]
        %s201 = sld [smem:[#allocation3 + $0x22]]
        %s202 = sld [smem:[#allocation3 + $0x23]]
        %s203 = sld [smem:[#allocation3 + $0x24]]
        %s204 = sld [smem:[#allocation3 + $0x25]]
        %s205 = sld [smem:[#allocation3 + $0x26]]
        %s206 = sld [smem:[#allocation3 + $0x27]]
        %s207 = sld [smem:[#allocation3 + $0x28]]
        %s208 = sld [smem:[#allocation3 + $0x32]]
        %s209 = sld [smem:[#allocation3 + $0x3c]]
        %s210 = sld [smem:[#allocation3 + $0x46]]
        %s211 = sld [smem:[#allocation3 + $0x50]]
        %s212 = sld [smem:[#allocation3 + $0x5a]]
        %s213 = sld [smem:[#allocation3 + $0x64]]
        %s214 = sld [smem:[#allocation3 + $0x6e]]
        %s215 = sld [smem:[#allocation3 + $0x78]]
        %s216 = sld [smem:[#allocation3 + $0x82]]
        %s217 = sld [smem:[#allocation3 + $0x29]]
        %s218 = sld [smem:[#allocation3 + $0x33]]
        %s219 = sld [smem:[#allocation3 + $0x3d]]
        %s220 = sld [smem:[#allocation3 + $0x47]]
        %s221 = sld [smem:[#allocation3 + $0x51]]
        %s222 = sld [smem:[#allocation3 + $0x5b]]
        %s223 = sld [smem:[#allocation3 + $0x65]]
        %s224 = sld [smem:[#allocation3 + $0x6f]]
        %s225 = sld [smem:[#allocation3 + $0x79]]
        %s226 = sld [smem:[#allocation3 + $0x83]]
        %s227 = sld [smem:[#allocation3 + $0x2a]]
        %s228 = sld [smem:[#allocation3 + $0x34]]
        %s229 = sld [smem:[#allocation3 + $0x3e]]
        %s230 = sld [smem:[#allocation3 + $0x48]]
        %s231 = sld [smem:[#allocation3 + $0x52]]
        %s232 = sld [smem:[#allocation3 + $0x5c]]
        %s233 = sld [smem:[#allocation3 + $0x66]]
        %s234 = sld [smem:[#allocation3 + $0x70]]
        %s235 = sld [smem:[#allocation3 + $0x7a]]
        %s236 = sld [smem:[#allocation3 + $0x84]]
        %s237 = sld [smem:[#allocation3 + $0x2b]]
        %s238 = sld [smem:[#allocation3 + $0x35]]
        %s239 = sld [smem:[#allocation3 + $0x3f]]
        %s240 = sld [smem:[#allocation3 + $0x49]]
        %s241 = sld [smem:[#allocation3 + $0x53]]
        %s242 = sld [smem:[#allocation3 + $0x5d]]
        %s243 = sld [smem:[#allocation3 + $0x67]]
        %s244 = sld [smem:[#allocation3 + $0x71]]
        %s245 = sld [smem:[#allocation3 + $0x7b]]
        %s246 = sld [smem:[#allocation3 + $0x85]]
        %s247 = sld [smem:[#allocation3 + $0x2c]]
        %s248 = sld [smem:[#allocation3 + $0x36]]
        %s249 = sld [smem:[#allocation3 + $0x40]]
        %s250 = sld [smem:[#allocation3 + $0x4a]]
        %s251 = sld [smem:[#allocation3 + $0x54]]
        %s252 = sld [smem:[#allocation3 + $0x5e]]
        %s253 = sld [smem:[#allocation3 + $0x68]]
        %s254 = sld [smem:[#allocation3 + $0x72]]
        %s255 = sld [smem:[#allocation3 + $0x7c]]
        %s256 = sld [smem:[#allocation3 + $0x86]]
        %s257 = sld [smem:[#allocation3 + $0x2d]]
        %s258 = sld [smem:[#allocation3 + $0x37]]
        %s259 = sld [smem:[#allocation3 + $0x41]]
        %s260 = sld [smem:[#allocation3 + $0x4b]]
        %s261 = sld [smem:[#allocation3 + $0x55]]
        %s262 = sld [smem:[#allocation3 + $0x5f]]
        %s263 = sld [smem:[#allocation3 + $0x69]]
        %s264 = sld [smem:[#allocation3 + $0x73]]
        %s265 = sld [smem:[#allocation3 + $0x7d]]
        %s266 = sld [smem:[#allocation3 + $0x87]]
        %s267 = sld [smem:[#allocation3 + $0x2e]]
        %s268 = sld [smem:[#allocation3 + $0x38]]
        %s269 = sld [smem:[#allocation3 + $0x42]]
        %s270 = sld [smem:[#allocation3 + $0x4c]]
        %s271 = sld [smem:[#allocation3 + $0x56]]
        %s272 = sld [smem:[#allocation3 + $0x60]]
        %s273 = sld [smem:[#allocation3 + $0x6a]]
        %s274 = sld [smem:[#allocation3 + $0x74]]
        %s275 = sld [smem:[#allocation3 + $0x7e]]
        %s276 = sld [smem:[#allocation3 + $0x88]]
        %s277 = sld [smem:[#allocation3 + $0x2f]]
        %s278 = sld [smem:[#allocation3 + $0x39]]
        %s279 = sld [smem:[#allocation3 + $0x43]]
        %s280 = sld [smem:[#allocation3 + $0x4d]]
        %s281 = sld [smem:[#allocation3 + $0x57]]
        %s282 = sld [smem:[#allocation3 + $0x61]]
        %s283 = sld [smem:[#allocation3 + $0x6b]]
        %s284 = sld [smem:[#allocation3 + $0x75]]
        %s285 = sld [smem:[#allocation3 + $0x7f]]
        %s286 = sld [smem:[#allocation3 + $0x89]]
        %s287 = sld [smem:[#allocation3 + $0x30]]
        %s288 = sld [smem:[#allocation3 + $0x3a]]
        %s289 = sld [smem:[#allocation3 + $0x44]]
        %s290 = sld [smem:[#allocation3 + $0x4e]]
        %s291 = sld [smem:[#allocation3 + $0x58]]
        %s292 = sld [smem:[#allocation3 + $0x62]]
        %s293 = sld [smem:[#allocation3 + $0x6c]]
        %s294 = sld [smem:[#allocation3 + $0x76]]
        %s295 = sld [smem:[#allocation3 + $0x80]]
        %s296 = sld [smem:[#allocation3 + $0x8a]]
        %s297 = sld [smem:[#allocation3 + $0x31]]
        %s298 = sld [smem:[#allocation3 + $0x3b]]
        %s299 = sld [smem:[#allocation3 + $0x45]]
        %s300 = sld [smem:[#allocation3 + $0x4f]]
        %s301 = sld [smem:[#allocation3 + $0x59]]
        %s302 = sld [smem:[#allocation3 + $0x63]]
        %s303 = sld [smem:[#allocation3 + $0x6d]]
        %s304 = sld [smem:[#allocation3 + $0x77]]
        %s305 = sld [smem:[#allocation3 + $0x81]]
        %s306 = sld [smem:[#allocation3 + $0x8b]]
        %s307 = sld [smem:[#allocation3 + $0x8c]]
        %s308 = sld [smem:[#allocation3 + $0x8d]]
        %s309 = sld [smem:[#allocation3 + $0x8e]]
        %s310 = sld [smem:[#allocation3 + $0x8f]]
        %s311 = sld [smem:[#allocation3 + $0x90]]
        %s312 = sld [smem:[#allocation3 + $0x91]]
        %s313 = sld [smem:[#allocation3 + $0x92]]
        %s314 = sld [smem:[#allocation3 + $0x93]]
        %s315 = sld [smem:[#allocation3 + $0x94]]
        %s316 = sld [smem:[#allocation3 + $0x95]]
        %s317 = sld [smem:[#allocation3 + $0x96]]
        %s318 = sld [smem:[#allocation3 + $0xa0]]
        %s319 = sld [smem:[#allocation3 + $0xaa]]
        %s320 = sld [smem:[#allocation3 + $0xb4]]
        %s321 = sld [smem:[#allocation3 + $0xbe]]
        %s322 = sld [smem:[#allocation3 + $0xc8]]
        %s323 = sld [smem:[#allocation3 + $0xd2]]
        %s324 = sld [smem:[#allocation3 + $0xdc]]
        %s325 = sld [smem:[#allocation3 + $0xe6]]
        %s326 = sld [smem:[#allocation3 + $0xf0]]
        %s327 = sld [smem:[#allocation3 + $0x97]]
        %s328 = sld [smem:[#allocation3 + $0xa1]]
        %s329 = sld [smem:[#allocation3 + $0xab]]
        %s330 = sld [smem:[#allocation3 + $0xb5]]
        %s331 = sld [smem:[#allocation3 + $0xbf]]
        %s332 = sld [smem:[#allocation3 + $0xc9]]
        %s333 = sld [smem:[#allocation3 + $0xd3]]
        %s334 = sld [smem:[#allocation3 + $0xdd]]
        %s335 = sld [smem:[#allocation3 + $0xe7]]
        %s336 = sld [smem:[#allocation3 + $0xf1]]
        %s337 = sld [smem:[#allocation3 + $0x98]]
        %s338 = sld [smem:[#allocation3 + $0xa2]]
        %s339 = sld [smem:[#allocation3 + $0xac]]
        %s340 = sld [smem:[#allocation3 + $0xb6]]
        %s341 = sld [smem:[#allocation3 + $0xc0]]
        %s342 = sld [smem:[#allocation3 + $0xca]]
        %s343 = sld [smem:[#allocation3 + $0xd4]]
        %s344 = sld [smem:[#allocation3 + $0xde]]
        %s345 = sld [smem:[#allocation3 + $0xe8]]
        %s346 = sld [smem:[#allocation3 + $0xf2]]
        %s347 = sld [smem:[#allocation3 + $0x99]]
        %s348 = sld [smem:[#allocation3 + $0xa3]]
        %s349 = sld [smem:[#allocation3 + $0xad]]
        %s350 = sld [smem:[#allocation3 + $0xb7]]
        %s351 = sld [smem:[#allocation3 + $0xc1]]
        %s352 = sld [smem:[#allocation3 + $0xcb]]
        %s353 = sld [smem:[#allocation3 + $0xd5]]
        %s354 = sld [smem:[#allocation3 + $0xdf]]
        %s355 = sld [smem:[#allocation3 + $0xe9]]
        %s356 = sld [smem:[#allocation3 + $0xf3]]
        %s357 = sld [smem:[#allocation3 + $0x9a]]
        %s358 = sld [smem:[#allocation3 + $0xa4]]
        %s359 = sld [smem:[#allocation3 + $0xae]]
        %s360 = sld [smem:[#allocation3 + $0xb8]]
        %s361 = sld [smem:[#allocation3 + $0xc2]]
        %s362 = sld [smem:[#allocation3 + $0xcc]]
        %s363 = sld [smem:[#allocation3 + $0xd6]]
        %s364 = sld [smem:[#allocation3 + $0xe0]]
        %s365 = sld [smem:[#allocation3 + $0xea]]
        %s366 = sld [smem:[#allocation3 + $0xf4]]
        %s367 = sld [smem:[#allocation3 + $0x9b]]
        %s368 = sld [smem:[#allocation3 + $0xa5]]
        %s369 = sld [smem:[#allocation3 + $0xaf]]
        %s370 = sld [smem:[#allocation3 + $0xb9]]
        %s371 = sld [smem:[#allocation3 + $0xc3]]
        %s372 = sld [smem:[#allocation3 + $0xcd]]
        %s373 = sld [smem:[#allocation3 + $0xd7]]
        %s374 = sld [smem:[#allocation3 + $0xe1]]
        %s375 = sld [smem:[#allocation3 + $0xeb]]
        %s376 = sld [smem:[#allocation3 + $0xf5]]
        %s377 = sld [smem:[#allocation3 + $0x9c]]
        %s378 = sld [smem:[#allocation3 + $0xa6]]
        %s379 = sld [smem:[#allocation3 + $0xb0]]
        %s380 = sld [smem:[#allocation3 + $0xba]]
        %s381 = sld [smem:[#allocation3 + $0xc4]]
        %s382 = sld [smem:[#allocation3 + $0xce]]
        %s383 = sld [smem:[#allocation3 + $0xd8]]
        %s384 = sld [smem:[#allocation3 + $0xe2]]
        %s385 = sld [smem:[#allocation3 + $0xec]]
        %s386 = sld [smem:[#allocation3 + $0xf6]]
        %s387 = sld [smem:[#allocation3 + $0x9d]]
        %s388 = sld [smem:[#allocation3 + $0xa7]]
        %s389 = sld [smem:[#allocation3 + $0xb1]]
        %s390 = sld [smem:[#allocation3 + $0xbb]]
        %s391 = sld [smem:[#allocation3 + $0xc5]]
        %s392 = sld [smem:[#allocation3 + $0xcf]]
        %s393 = sld [smem:[#allocation3 + $0xd9]]
        %s394 = sld [smem:[#allocation3 + $0xe3]]
        %s395 = sld [smem:[#allocation3 + $0xed]]
        %s396 = sld [smem:[#allocation3 + $0xf7]]
        %s397 = sld [smem:[#allocation3 + $0x9e]]
        %s398 = sld [smem:[#allocation3 + $0xa8]]
        %s399 = sld [smem:[#allocation3 + $0xb2]]
        %s400 = sld [smem:[#allocation3 + $0xbc]]
        %s401 = sld [smem:[#allocation3 + $0xc6]]
        %s402 = sld [smem:[#allocation3 + $0xd0]]
        %s403 = sld [smem:[#allocation3 + $0xda]]
        %s404 = sld [smem:[#allocation3 + $0xe4]]
        %s405 = sld [smem:[#allocation3 + $0xee]]
        %s406 = sld [smem:[#allocation3 + $0xf8]]
        %s407 = sld [smem:[#allocation3 + $0x9f]]
        %s408 = sld [smem:[#allocation3 + $0xa9]]
        %s409 = sld [smem:[#allocation3 + $0xb3]]
        %s410 = sld [smem:[#allocation3 + $0xbd]]
        %s411 = sld [smem:[#allocation3 + $0xc7]]
        %s412 = sld [smem:[#allocation3 + $0xd1]]
        %s413 = sld [smem:[#allocation3 + $0xdb]]
        %s414 = sld [smem:[#allocation3 + $0xe5]]
        %s415 = sld [smem:[#allocation3 + $0xef]]
        %s416 = sld [smem:[#allocation3 + $0xf9]]
        %s417 = sld [smem:[#allocation3 + $0xfa]]
        %s418 = sld [smem:[#allocation3 + $0xfb]]
        %s419 = sld [smem:[#allocation3 + $0xfc]]
        %s420 = sld [smem:[#allocation3 + $0xfd]]
        %s421 = sld [smem:[#allocation3 + $0xfe]]
        %s422 = sld [smem:[#allocation3 + $0xff]]
        %s423 = sld [smem:[#allocation3 + $0x100]]
        %s424 = sld [smem:[#allocation3 + $0x101]]
        %s425 = sld [smem:[#allocation3 + $0x102]]
        %s426 = sld [smem:[#allocation3 + $0x103]]
        %s427 = sld [smem:[#allocation3 + $0x104]]
        %s428 = sld [smem:[#allocation3 + $0x107]]
        %s429 = sld [smem:[#allocation3 + $0x10a]]
        %s430 = sld [smem:[#allocation3 + $0x10d]]
        %s431 = sld [smem:[#allocation3 + $0x110]]
        %s432 = sld [smem:[#allocation3 + $0x113]]
        %s433 = sld [smem:[#allocation3 + $0x116]]
        %s434 = sld [smem:[#allocation3 + $0x119]]
        %s435 = sld [smem:[#allocation3 + $0x11c]]
        %s436 = sld [smem:[#allocation3 + $0x11f]]
        %s437 = sld [smem:[#allocation3 + $0x105]]
        %s438 = sld [smem:[#allocation3 + $0x108]]
        %s439 = sld [smem:[#allocation3 + $0x10b]]
        %s440 = sld [smem:[#allocation3 + $0x10e]]
        %s441 = sld [smem:[#allocation3 + $0x111]]
        %s442 = sld [smem:[#allocation3 + $0x114]]
        %s443 = sld [smem:[#allocation3 + $0x117]]
        %s444 = sld [smem:[#allocation3 + $0x11a]]
        %s445 = sld [smem:[#allocation3 + $0x11d]]
        %s446 = sld [smem:[#allocation3 + $0x120]]
        %s447 = sld [smem:[#allocation3 + $0x106]]
        %s448 = sld [smem:[#allocation3 + $0x109]]
        %s449 = sld [smem:[#allocation3 + $0x10c]]
        %s450 = sld [smem:[#allocation3 + $0x10f]]
        %s451 = sld [smem:[#allocation3 + $0x112]]
        %s452 = sld [smem:[#allocation3 + $0x115]]
        %s453 = sld [smem:[#allocation3 + $0x118]]
        %s454 = sld [smem:[#allocation3 + $0x11b]]
        %s455 = sld [smem:[#allocation3 + $0x11e]]
        %s456 = sld [smem:[#allocation3 + $0x121]]
        %s457 = sld [smem:[#allocation3 + $0x122]]
        %s458 = sld [smem:[#allocation3 + $0x123]]
        %s459 = sld [smem:[#allocation3 + $0x124]]
        loop: start=0, step=1, limit=2
        $region29: #{tpu_custom_call.1} parent=23 // loop_pre_header
          _
        $region30: #{tpu_custom_call.1} parent=23 // loop_header
          %s461 = sphi 0, %s465
          %p462 = scmp.ge.s32.totalorder %s461, 2
        $region31: #{tpu_custom_call.1} parent=23 // loop_header_branch
          %464 = sbr.rel (%p462) target = $region35
        $region32: #{tpu_custom_call.1} parent=23 // loop_body
          %s466 = smul.u32 %s461, 16
          %s467 = scalar_lea.vmem %s146, %s466 [#allocation4]
          %v468 = vld [vmem:[%s467] sm:$0xff]
          %v469 = vld [vmem:[%s467 + $0x8] sm:$0xff]
          %s470 = sadd.s32 %s466, 32
          %s471 = scalar_lea.vmem %s146, %s470 [#allocation4]
          %v472 = vld [vmem:[%s471] sm:$0xff]
          %v473 = vld [vmem:[%s471 + $0x8] sm:$0xff]
          %s474 = sadd.s32 %s466, 64
          %s475 = scalar_lea.vmem %s146, %s474 [#allocation4]
          %v476 = vld [vmem:[%s475] sm:$0xff]
          %v477 = vld [vmem:[%s475 + $0x8] sm:$0xff]
          %v478 = vstv %s167
          %v479 = vmul.f32 %v468, %v478
          %v480 = vmul.f32 %v469, %v478
          %v481 = vstv %s168
          %v482 = vmul.f32 %v472, %v481
          %v483 = vmul.f32 %v473, %v481
          %v484 = vadd.f32 %v479, %v482
          %v485 = vadd.f32 %v480, %v483
          %v486 = vstv %s169
          %v487 = vmul.f32 %v476, %v486
          %v488 = vmul.f32 %v477, %v486
          %v489 = vadd.f32 %v484, %v487
          %v490 = vadd.f32 %v485, %v488
          %v491 = vstv %s197
          %v492 = vadd.f32 %v489, %v491
          %v493 = vadd.f32 %v490, %v491
          %v494 = vtanh.pop %v492
          %v495 = vtanh.pop %v493
          %v496 = vstv %s170
          %v497 = vmul.f32 %v468, %v496
          %v498 = vmul.f32 %v469, %v496
          %v499 = vstv %s171
          %v500 = vmul.f32 %v472, %v499
          %v501 = vmul.f32 %v473, %v499
          %v502 = vadd.f32 %v497, %v500
          %v503 = vadd.f32 %v498, %v501
          %v504 = vstv %s172
          %v505 = vmul.f32 %v476, %v504
          %v506 = vmul.f32 %v477, %v504
          %v507 = vadd.f32 %v502, %v505
          %v508 = vadd.f32 %v503, %v506
          %v509 = vstv %s198
          %v510 = vadd.f32 %v507, %v509
          %v511 = vadd.f32 %v508, %v509
          %v512 = vtanh.pop %v510
          %v513 = vtanh.pop %v511
          %v514 = vstv %s173
          %v515 = vmul.f32 %v468, %v514
          %v516 = vmul.f32 %v469, %v514
          %v517 = vstv %s174
          %v518 = vmul.f32 %v472, %v517
          %v519 = vmul.f32 %v473, %v517
          %v520 = vadd.f32 %v515, %v518
          %v521 = vadd.f32 %v516, %v519
          %v522 = vstv %s175
          %v523 = vmul.f32 %v476, %v522
          %v524 = vmul.f32 %v477, %v522
          %v525 = vadd.f32 %v520, %v523
          %v526 = vadd.f32 %v521, %v524
          %v527 = vstv %s199
          %v528 = vadd.f32 %v525, %v527
          %v529 = vadd.f32 %v526, %v527
          %v530 = vtanh.pop %v528
          %v531 = vtanh.pop %v529
          %v532 = vstv %s176
          %v533 = vmul.f32 %v468, %v532
          %v534 = vmul.f32 %v469, %v532
          %v535 = vstv %s177
          %v536 = vmul.f32 %v472, %v535
          %v537 = vmul.f32 %v473, %v535
          %v538 = vadd.f32 %v533, %v536
          %v539 = vadd.f32 %v534, %v537
          %v540 = vstv %s178
          %v541 = vmul.f32 %v476, %v540
          %v542 = vmul.f32 %v477, %v540
          %v543 = vadd.f32 %v538, %v541
          %v544 = vadd.f32 %v539, %v542
          %v545 = vstv %s200
          %v546 = vadd.f32 %v543, %v545
          %v547 = vadd.f32 %v544, %v545
          %v548 = vtanh.pop %v546
          %v549 = vtanh.pop %v547
          %v550 = vstv %s179
          %v551 = vmul.f32 %v468, %v550
          %v552 = vmul.f32 %v469, %v550
          %v553 = vstv %s180
          %v554 = vmul.f32 %v472, %v553
          %v555 = vmul.f32 %v473, %v553
          %v556 = vadd.f32 %v551, %v554
          %v557 = vadd.f32 %v552, %v555
          %v558 = vstv %s181
          %v559 = vmul.f32 %v476, %v558
          %v560 = vmul.f32 %v477, %v558
          %v561 = vadd.f32 %v556, %v559
          %v562 = vadd.f32 %v557, %v560
          %v563 = vstv %s201
          %v564 = vadd.f32 %v561, %v563
          %v565 = vadd.f32 %v562, %v563
          %v566 = vtanh.pop %v564
          %v567 = vtanh.pop %v565
          %v568 = vstv %s182
          %v569 = vmul.f32 %v468, %v568
          %v570 = vmul.f32 %v469, %v568
          %v571 = vstv %s183
          %v572 = vmul.f32 %v472, %v571
          %v573 = vmul.f32 %v473, %v571
          %v574 = vadd.f32 %v569, %v572
          %v575 = vadd.f32 %v570, %v573
          %v576 = vstv %s184
          %v577 = vmul.f32 %v476, %v576
          %v578 = vmul.f32 %v477, %v576
          %v579 = vadd.f32 %v574, %v577
          %v580 = vadd.f32 %v575, %v578
          %v581 = vstv %s202
          %v582 = vadd.f32 %v579, %v581
          %v583 = vadd.f32 %v580, %v581
          %v584 = vtanh.pop %v582
          %v585 = vtanh.pop %v583
          %v586 = vstv %s185
          %v587 = vmul.f32 %v468, %v586
          %v588 = vmul.f32 %v469, %v586
          %v589 = vstv %s186
          %v590 = vmul.f32 %v472, %v589
          %v591 = vmul.f32 %v473, %v589
          %v592 = vadd.f32 %v587, %v590
          %v593 = vadd.f32 %v588, %v591
          %v594 = vstv %s187
          %v595 = vmul.f32 %v476, %v594
          %v596 = vmul.f32 %v477, %v594
          %v597 = vadd.f32 %v592, %v595
          %v598 = vadd.f32 %v593, %v596
          %v599 = vstv %s203
          %v600 = vadd.f32 %v597, %v599
          %v601 = vadd.f32 %v598, %v599
          %v602 = vtanh.pop %v600
          %v603 = vtanh.pop %v601
          %v604 = vstv %s188
          %v605 = vmul.f32 %v468, %v604
          %v606 = vmul.f32 %v469, %v604
          %v607 = vstv %s189
          %v608 = vmul.f32 %v472, %v607
          %v609 = vmul.f32 %v473, %v607
          %v610 = vadd.f32 %v605, %v608
          %v611 = vadd.f32 %v606, %v609
          %v612 = vstv %s190
          %v613 = vmul.f32 %v476, %v612
          %v614 = vmul.f32 %v477, %v612
          %v615 = vadd.f32 %v610, %v613
          %v616 = vadd.f32 %v611, %v614
          %v617 = vstv %s204
          %v618 = vadd.f32 %v615, %v617
          %v619 = vadd.f32 %v616, %v617
          %v620 = vtanh.pop %v618
          %v621 = vtanh.pop %v619
          %v622 = vstv %s191
          %v623 = vmul.f32 %v468, %v622
          %v624 = vmul.f32 %v469, %v622
          %v625 = vstv %s192
          %v626 = vmul.f32 %v472, %v625
          %v627 = vmul.f32 %v473, %v625
          %v628 = vadd.f32 %v623, %v626
          %v629 = vadd.f32 %v624, %v627
          %v630 = vstv %s193
          %v631 = vmul.f32 %v476, %v630
          %v632 = vmul.f32 %v477, %v630
          %v633 = vadd.f32 %v628, %v631
          %v634 = vadd.f32 %v629, %v632
          %v635 = vstv %s205
          %v636 = vadd.f32 %v633, %v635
          %v637 = vadd.f32 %v634, %v635
          %v638 = vtanh.pop %v636
          %v639 = vtanh.pop %v637
          %v640 = vstv %s194
          %v641 = vmul.f32 %v468, %v640
          %v642 = vmul.f32 %v469, %v640
          %v643 = vstv %s195
          %v644 = vmul.f32 %v472, %v643
          %v645 = vmul.f32 %v473, %v643
          %v646 = vadd.f32 %v641, %v644
          %v647 = vadd.f32 %v642, %v645
          %v648 = vstv %s196
          %v649 = vmul.f32 %v476, %v648
          %v650 = vmul.f32 %v477, %v648
          %v651 = vadd.f32 %v646, %v649
          %v652 = vadd.f32 %v647, %v650
          %v653 = vstv %s206
          %v654 = vadd.f32 %v651, %v653
          %v655 = vadd.f32 %v652, %v653
          %v656 = vtanh.pop %v654
          %v657 = vtanh.pop %v655
          %v658 = vstv %s207
          %v659 = vmul.f32 %v494, %v658
          %v660 = vmul.f32 %v495, %v658
          %v661 = vstv %s208
          %v662 = vmul.f32 %v512, %v661
          %v663 = vmul.f32 %v513, %v661
          %v664 = vadd.f32 %v659, %v662
          %v665 = vadd.f32 %v660, %v663
          %v666 = vstv %s209
          %v667 = vmul.f32 %v530, %v666
          %v668 = vmul.f32 %v531, %v666
          %v669 = vadd.f32 %v664, %v667
          %v670 = vadd.f32 %v665, %v668
          %v671 = vstv %s210
          %v672 = vmul.f32 %v548, %v671
          %v673 = vmul.f32 %v549, %v671
          %v674 = vadd.f32 %v669, %v672
          %v675 = vadd.f32 %v670, %v673
          %v676 = vstv %s211
          %v677 = vmul.f32 %v566, %v676
          %v678 = vmul.f32 %v567, %v676
          %v679 = vadd.f32 %v674, %v677
          %v680 = vadd.f32 %v675, %v678
          %v681 = vstv %s212
          %v682 = vmul.f32 %v584, %v681
          %v683 = vmul.f32 %v585, %v681
          %v684 = vadd.f32 %v679, %v682
          %v685 = vadd.f32 %v680, %v683
          %v686 = vstv %s213
          %v687 = vmul.f32 %v602, %v686
          %v688 = vmul.f32 %v603, %v686
          %v689 = vadd.f32 %v684, %v687
          %v690 = vadd.f32 %v685, %v688
          %v691 = vstv %s214
          %v692 = vmul.f32 %v620, %v691
          %v693 = vmul.f32 %v621, %v691
          %v694 = vadd.f32 %v689, %v692
          %v695 = vadd.f32 %v690, %v693
          %v696 = vstv %s215
          %v697 = vmul.f32 %v638, %v696
          %v698 = vmul.f32 %v639, %v696
          %v699 = vadd.f32 %v694, %v697
          %v700 = vadd.f32 %v695, %v698
          %v701 = vstv %s216
          %v702 = vmul.f32 %v656, %v701
          %v703 = vmul.f32 %v657, %v701
          %v704 = vadd.f32 %v699, %v702
          %v705 = vadd.f32 %v700, %v703
          %v706 = vstv %s307
          %v707 = vadd.f32 %v704, %v706
          %v708 = vadd.f32 %v705, %v706
          %v709 = vtanh.pop %v707
          %v710 = vtanh.pop %v708
          %v711 = vstv %s217
          %v712 = vmul.f32 %v494, %v711
          %v713 = vmul.f32 %v495, %v711
          %v714 = vstv %s218
          %v715 = vmul.f32 %v512, %v714
          %v716 = vmul.f32 %v513, %v714
          %v717 = vadd.f32 %v712, %v715
          %v718 = vadd.f32 %v713, %v716
          %v719 = vstv %s219
          %v720 = vmul.f32 %v530, %v719
          %v721 = vmul.f32 %v531, %v719
          %v722 = vadd.f32 %v717, %v720
          %v723 = vadd.f32 %v718, %v721
          %v724 = vstv %s220
          %v725 = vmul.f32 %v548, %v724
          %v726 = vmul.f32 %v549, %v724
          %v727 = vadd.f32 %v722, %v725
          %v728 = vadd.f32 %v723, %v726
          %v729 = vstv %s221
          %v730 = vmul.f32 %v566, %v729
          %v731 = vmul.f32 %v567, %v729
          %v732 = vadd.f32 %v727, %v730
          %v733 = vadd.f32 %v728, %v731
          %v734 = vstv %s222
          %v735 = vmul.f32 %v584, %v734
          %v736 = vmul.f32 %v585, %v734
          %v737 = vadd.f32 %v732, %v735
          %v738 = vadd.f32 %v733, %v736
          %v739 = vstv %s223
          %v740 = vmul.f32 %v602, %v739
          %v741 = vmul.f32 %v603, %v739
          %v742 = vadd.f32 %v737, %v740
          %v743 = vadd.f32 %v738, %v741
          %v744 = vstv %s224
          %v745 = vmul.f32 %v620, %v744
          %v746 = vmul.f32 %v621, %v744
          %v747 = vadd.f32 %v742, %v745
          %v748 = vadd.f32 %v743, %v746
          %v749 = vstv %s225
          %v750 = vmul.f32 %v638, %v749
          %v751 = vmul.f32 %v639, %v749
          %v752 = vadd.f32 %v747, %v750
          %v753 = vadd.f32 %v748, %v751
          %v754 = vstv %s226
          %v755 = vmul.f32 %v656, %v754
          %v756 = vmul.f32 %v657, %v754
          %v757 = vadd.f32 %v752, %v755
          %v758 = vadd.f32 %v753, %v756
          %v759 = vstv %s308
          %v760 = vadd.f32 %v757, %v759
          %v761 = vadd.f32 %v758, %v759
          %v762 = vtanh.pop %v760
          %v763 = vtanh.pop %v761
          %v764 = vstv %s227
          %v765 = vmul.f32 %v494, %v764
          %v766 = vmul.f32 %v495, %v764
          %v767 = vstv %s228
          %v768 = vmul.f32 %v512, %v767
          %v769 = vmul.f32 %v513, %v767
          %v770 = vadd.f32 %v765, %v768
          %v771 = vadd.f32 %v766, %v769
          %v772 = vstv %s229
          %v773 = vmul.f32 %v530, %v772
          %v774 = vmul.f32 %v531, %v772
          %v775 = vadd.f32 %v770, %v773
          %v776 = vadd.f32 %v771, %v774
          %v777 = vstv %s230
          %v778 = vmul.f32 %v548, %v777
          %v779 = vmul.f32 %v549, %v777
          %v780 = vadd.f32 %v775, %v778
          %v781 = vadd.f32 %v776, %v779
          %v782 = vstv %s231
          %v783 = vmul.f32 %v566, %v782
          %v784 = vmul.f32 %v567, %v782
          %v785 = vadd.f32 %v780, %v783
          %v786 = vadd.f32 %v781, %v784
          %v787 = vstv %s232
          %v788 = vmul.f32 %v584, %v787
          %v789 = vmul.f32 %v585, %v787
          %v790 = vadd.f32 %v785, %v788
          %v791 = vadd.f32 %v786, %v789
          %v792 = vstv %s233
          %v793 = vmul.f32 %v602, %v792
          %v794 = vmul.f32 %v603, %v792
          %v795 = vadd.f32 %v790, %v793
          %v796 = vadd.f32 %v791, %v794
          %v797 = vstv %s234
          %v798 = vmul.f32 %v620, %v797
          %v799 = vmul.f32 %v621, %v797
          %v800 = vadd.f32 %v795, %v798
          %v801 = vadd.f32 %v796, %v799
          %v802 = vstv %s235
          %v803 = vmul.f32 %v638, %v802
          %v804 = vmul.f32 %v639, %v802
          %v805 = vadd.f32 %v800, %v803
          %v806 = vadd.f32 %v801, %v804
          %v807 = vstv %s236
          %v808 = vmul.f32 %v656, %v807
          %v809 = vmul.f32 %v657, %v807
          %v810 = vadd.f32 %v805, %v808
          %v811 = vadd.f32 %v806, %v809
          %v812 = vstv %s309
          %v813 = vadd.f32 %v810, %v812
          %v814 = vadd.f32 %v811, %v812
          %v815 = vtanh.pop %v813
          %v816 = vtanh.pop %v814
          %v817 = vstv %s237
          %v818 = vmul.f32 %v494, %v817
          %v819 = vmul.f32 %v495, %v817
          %v820 = vstv %s238
          %v821 = vmul.f32 %v512, %v820
          %v822 = vmul.f32 %v513, %v820
          %v823 = vadd.f32 %v818, %v821
          %v824 = vadd.f32 %v819, %v822
          %v825 = vstv %s239
          %v826 = vmul.f32 %v530, %v825
          %v827 = vmul.f32 %v531, %v825
          %v828 = vadd.f32 %v823, %v826
          %v829 = vadd.f32 %v824, %v827
          %v830 = vstv %s240
          %v831 = vmul.f32 %v548, %v830
          %v832 = vmul.f32 %v549, %v830
          %v833 = vadd.f32 %v828, %v831
          %v834 = vadd.f32 %v829, %v832
          %v835 = vstv %s241
          %v836 = vmul.f32 %v566, %v835
          %v837 = vmul.f32 %v567, %v835
          %v838 = vadd.f32 %v833, %v836
          %v839 = vadd.f32 %v834, %v837
          %v840 = vstv %s242
          %v841 = vmul.f32 %v584, %v840
          %v842 = vmul.f32 %v585, %v840
          %v843 = vadd.f32 %v838, %v841
          %v844 = vadd.f32 %v839, %v842
          %v845 = vstv %s243
          %v846 = vmul.f32 %v602, %v845
          %v847 = vmul.f32 %v603, %v845
          %v848 = vadd.f32 %v843, %v846
          %v849 = vadd.f32 %v844, %v847
          %v850 = vstv %s244
          %v851 = vmul.f32 %v620, %v850
          %v852 = vmul.f32 %v621, %v850
          %v853 = vadd.f32 %v848, %v851
          %v854 = vadd.f32 %v849, %v852
          %v855 = vstv %s245
          %v856 = vmul.f32 %v638, %v855
          %v857 = vmul.f32 %v639, %v855
          %v858 = vadd.f32 %v853, %v856
          %v859 = vadd.f32 %v854, %v857
          %v860 = vstv %s246
          %v861 = vmul.f32 %v656, %v860
          %v862 = vmul.f32 %v657, %v860
          %v863 = vadd.f32 %v858, %v861
          %v864 = vadd.f32 %v859, %v862
          %v865 = vstv %s310
          %v866 = vadd.f32 %v863, %v865
          %v867 = vadd.f32 %v864, %v865
          %v868 = vtanh.pop %v866
          %v869 = vtanh.pop %v867
          %v870 = vstv %s247
          %v871 = vmul.f32 %v494, %v870
          %v872 = vmul.f32 %v495, %v870
          %v873 = vstv %s248
          %v874 = vmul.f32 %v512, %v873
          %v875 = vmul.f32 %v513, %v873
          %v876 = vadd.f32 %v871, %v874
          %v877 = vadd.f32 %v872, %v875
          %v878 = vstv %s249
          %v879 = vmul.f32 %v530, %v878
          %v880 = vmul.f32 %v531, %v878
          %v881 = vadd.f32 %v876, %v879
          %v882 = vadd.f32 %v877, %v880
          %v883 = vstv %s250
          %v884 = vmul.f32 %v548, %v883
          %v885 = vmul.f32 %v549, %v883
          %v886 = vadd.f32 %v881, %v884
          %v887 = vadd.f32 %v882, %v885
          %v888 = vstv %s251
          %v889 = vmul.f32 %v566, %v888
          %v890 = vmul.f32 %v567, %v888
          %v891 = vadd.f32 %v886, %v889
          %v892 = vadd.f32 %v887, %v890
          %v893 = vstv %s252
          %v894 = vmul.f32 %v584, %v893
          %v895 = vmul.f32 %v585, %v893
          %v896 = vadd.f32 %v891, %v894
          %v897 = vadd.f32 %v892, %v895
          %v898 = vstv %s253
          %v899 = vmul.f32 %v602, %v898
          %v900 = vmul.f32 %v603, %v898
          %v901 = vadd.f32 %v896, %v899
          %v902 = vadd.f32 %v897, %v900
          %v903 = vstv %s254
          %v904 = vmul.f32 %v620, %v903
          %v905 = vmul.f32 %v621, %v903
          %v906 = vadd.f32 %v901, %v904
          %v907 = vadd.f32 %v902, %v905
          %v908 = vstv %s255
          %v909 = vmul.f32 %v638, %v908
          %v910 = vmul.f32 %v639, %v908
          %v911 = vadd.f32 %v906, %v909
          %v912 = vadd.f32 %v907, %v910
          %v913 = vstv %s256
          %v914 = vmul.f32 %v656, %v913
          %v915 = vmul.f32 %v657, %v913
          %v916 = vadd.f32 %v911, %v914
          %v917 = vadd.f32 %v912, %v915
          %v918 = vstv %s311
          %v919 = vadd.f32 %v916, %v918
          %v920 = vadd.f32 %v917, %v918
          %v921 = vtanh.pop %v919
          %v922 = vtanh.pop %v920
          %v923 = vstv %s257
          %v924 = vmul.f32 %v494, %v923
          %v925 = vmul.f32 %v495, %v923
          %v926 = vstv %s258
          %v927 = vmul.f32 %v512, %v926
          %v928 = vmul.f32 %v513, %v926
          %v929 = vadd.f32 %v924, %v927
          %v930 = vadd.f32 %v925, %v928
          %v931 = vstv %s259
          %v932 = vmul.f32 %v530, %v931
          %v933 = vmul.f32 %v531, %v931
          %v934 = vadd.f32 %v929, %v932
          %v935 = vadd.f32 %v930, %v933
          %v936 = vstv %s260
          %v937 = vmul.f32 %v548, %v936
          %v938 = vmul.f32 %v549, %v936
          %v939 = vadd.f32 %v934, %v937
          %v940 = vadd.f32 %v935, %v938
          %v941 = vstv %s261
          %v942 = vmul.f32 %v566, %v941
          %v943 = vmul.f32 %v567, %v941
          %v944 = vadd.f32 %v939, %v942
          %v945 = vadd.f32 %v940, %v943
          %v946 = vstv %s262
          %v947 = vmul.f32 %v584, %v946
          %v948 = vmul.f32 %v585, %v946
          %v949 = vadd.f32 %v944, %v947
          %v950 = vadd.f32 %v945, %v948
          %v951 = vstv %s263
          %v952 = vmul.f32 %v602, %v951
          %v953 = vmul.f32 %v603, %v951
          %v954 = vadd.f32 %v949, %v952
          %v955 = vadd.f32 %v950, %v953
          %v956 = vstv %s264
          %v957 = vmul.f32 %v620, %v956
          %v958 = vmul.f32 %v621, %v956
          %v959 = vadd.f32 %v954, %v957
          %v960 = vadd.f32 %v955, %v958
          %v961 = vstv %s265
          %v962 = vmul.f32 %v638, %v961
          %v963 = vmul.f32 %v639, %v961
          %v964 = vadd.f32 %v959, %v962
          %v965 = vadd.f32 %v960, %v963
          %v966 = vstv %s266
          %v967 = vmul.f32 %v656, %v966
          %v968 = vmul.f32 %v657, %v966
          %v969 = vadd.f32 %v964, %v967
          %v970 = vadd.f32 %v965, %v968
          %v971 = vstv %s312
          %v972 = vadd.f32 %v969, %v971
          %v973 = vadd.f32 %v970, %v971
          %v974 = vtanh.pop %v972
          %v975 = vtanh.pop %v973
          %v976 = vstv %s267
          %v977 = vmul.f32 %v494, %v976
          %v978 = vmul.f32 %v495, %v976
          %v979 = vstv %s268
          %v980 = vmul.f32 %v512, %v979
          %v981 = vmul.f32 %v513, %v979
          %v982 = vadd.f32 %v977, %v980
          %v983 = vadd.f32 %v978, %v981
          %v984 = vstv %s269
          %v985 = vmul.f32 %v530, %v984
          %v986 = vmul.f32 %v531, %v984
          %v987 = vadd.f32 %v982, %v985
          %v988 = vadd.f32 %v983, %v986
          %v989 = vstv %s270
          %v990 = vmul.f32 %v548, %v989
          %v991 = vmul.f32 %v549, %v989
          %v992 = vadd.f32 %v987, %v990
          %v993 = vadd.f32 %v988, %v991
          %v994 = vstv %s271
          %v995 = vmul.f32 %v566, %v994
          %v996 = vmul.f32 %v567, %v994
          %v997 = vadd.f32 %v992, %v995
          %v998 = vadd.f32 %v993, %v996
          %v999 = vstv %s272
          %v1000 = vmul.f32 %v584, %v999
          %v1001 = vmul.f32 %v585, %v999
          %v1002 = vadd.f32 %v997, %v1000
          %v1003 = vadd.f32 %v998, %v1001
          %v1004 = vstv %s273
          %v1005 = vmul.f32 %v602, %v1004
          %v1006 = vmul.f32 %v603, %v1004
          %v1007 = vadd.f32 %v1002, %v1005
          %v1008 = vadd.f32 %v1003, %v1006
          %v1009 = vstv %s274
          %v1010 = vmul.f32 %v620, %v1009
          %v1011 = vmul.f32 %v621, %v1009
          %v1012 = vadd.f32 %v1007, %v1010
          %v1013 = vadd.f32 %v1008, %v1011
          %v1014 = vstv %s275
          %v1015 = vmul.f32 %v638, %v1014
          %v1016 = vmul.f32 %v639, %v1014
          %v1017 = vadd.f32 %v1012, %v1015
          %v1018 = vadd.f32 %v1013, %v1016
          %v1019 = vstv %s276
          %v1020 = vmul.f32 %v656, %v1019
          %v1021 = vmul.f32 %v657, %v1019
          %v1022 = vadd.f32 %v1017, %v1020
          %v1023 = vadd.f32 %v1018, %v1021
          %v1024 = vstv %s313
          %v1025 = vadd.f32 %v1022, %v1024
          %v1026 = vadd.f32 %v1023, %v1024
          %v1027 = vtanh.pop %v1025
          %v1028 = vtanh.pop %v1026
          %v1029 = vstv %s277
          %v1030 = vmul.f32 %v494, %v1029
          %v1031 = vmul.f32 %v495, %v1029
          %v1032 = vstv %s278
          %v1033 = vmul.f32 %v512, %v1032
          %v1034 = vmul.f32 %v513, %v1032
          %v1035 = vadd.f32 %v1030, %v1033
          %v1036 = vadd.f32 %v1031, %v1034
          %v1037 = vstv %s279
          %v1038 = vmul.f32 %v530, %v1037
          %v1039 = vmul.f32 %v531, %v1037
          %v1040 = vadd.f32 %v1035, %v1038
          %v1041 = vadd.f32 %v1036, %v1039
          %v1042 = vstv %s280
          %v1043 = vmul.f32 %v548, %v1042
          %v1044 = vmul.f32 %v549, %v1042
          %v1045 = vadd.f32 %v1040, %v1043
          %v1046 = vadd.f32 %v1041, %v1044
          %v1047 = vstv %s281
          %v1048 = vmul.f32 %v566, %v1047
          %v1049 = vmul.f32 %v567, %v1047
          %v1050 = vadd.f32 %v1045, %v1048
          %v1051 = vadd.f32 %v1046, %v1049
          %v1052 = vstv %s282
          %v1053 = vmul.f32 %v584, %v1052
          %v1054 = vmul.f32 %v585, %v1052
          %v1055 = vadd.f32 %v1050, %v1053
          %v1056 = vadd.f32 %v1051, %v1054
          %v1057 = vstv %s283
          %v1058 = vmul.f32 %v602, %v1057
          %v1059 = vmul.f32 %v603, %v1057
          %v1060 = vadd.f32 %v1055, %v1058
          %v1061 = vadd.f32 %v1056, %v1059
          %v1062 = vstv %s284
          %v1063 = vmul.f32 %v620, %v1062
          %v1064 = vmul.f32 %v621, %v1062
          %v1065 = vadd.f32 %v1060, %v1063
          %v1066 = vadd.f32 %v1061, %v1064
          %v1067 = vstv %s285
          %v1068 = vmul.f32 %v638, %v1067
          %v1069 = vmul.f32 %v639, %v1067
          %v1070 = vadd.f32 %v1065, %v1068
          %v1071 = vadd.f32 %v1066, %v1069
          %v1072 = vstv %s286
          %v1073 = vmul.f32 %v656, %v1072
          %v1074 = vmul.f32 %v657, %v1072
          %v1075 = vadd.f32 %v1070, %v1073
          %v1076 = vadd.f32 %v1071, %v1074
          %v1077 = vstv %s314
          %v1078 = vadd.f32 %v1075, %v1077
          %v1079 = vadd.f32 %v1076, %v1077
          %v1080 = vtanh.pop %v1078
          %v1081 = vtanh.pop %v1079
          %v1082 = vstv %s287
          %v1083 = vmul.f32 %v494, %v1082
          %v1084 = vmul.f32 %v495, %v1082
          %v1085 = vstv %s288
          %v1086 = vmul.f32 %v512, %v1085
          %v1087 = vmul.f32 %v513, %v1085
          %v1088 = vadd.f32 %v1083, %v1086
          %v1089 = vadd.f32 %v1084, %v1087
          %v1090 = vstv %s289
          %v1091 = vmul.f32 %v530, %v1090
          %v1092 = vmul.f32 %v531, %v1090
          %v1093 = vadd.f32 %v1088, %v1091
          %v1094 = vadd.f32 %v1089, %v1092
          %v1095 = vstv %s290
          %v1096 = vmul.f32 %v548, %v1095
          %v1097 = vmul.f32 %v549, %v1095
          %v1098 = vadd.f32 %v1093, %v1096
          %v1099 = vadd.f32 %v1094, %v1097
          %v1100 = vstv %s291
          %v1101 = vmul.f32 %v566, %v1100
          %v1102 = vmul.f32 %v567, %v1100
          %v1103 = vadd.f32 %v1098, %v1101
          %v1104 = vadd.f32 %v1099, %v1102
          %v1105 = vstv %s292
          %v1106 = vmul.f32 %v584, %v1105
          %v1107 = vmul.f32 %v585, %v1105
          %v1108 = vadd.f32 %v1103, %v1106
          %v1109 = vadd.f32 %v1104, %v1107
          %v1110 = vstv %s293
          %v1111 = vmul.f32 %v602, %v1110
          %v1112 = vmul.f32 %v603, %v1110
          %v1113 = vadd.f32 %v1108, %v1111
          %v1114 = vadd.f32 %v1109, %v1112
          %v1115 = vstv %s294
          %v1116 = vmul.f32 %v620, %v1115
          %v1117 = vmul.f32 %v621, %v1115
          %v1118 = vadd.f32 %v1113, %v1116
          %v1119 = vadd.f32 %v1114, %v1117
          %v1120 = vstv %s295
          %v1121 = vmul.f32 %v638, %v1120
          %v1122 = vmul.f32 %v639, %v1120
          %v1123 = vadd.f32 %v1118, %v1121
          %v1124 = vadd.f32 %v1119, %v1122
          %v1125 = vstv %s296
          %v1126 = vmul.f32 %v656, %v1125
          %v1127 = vmul.f32 %v657, %v1125
          %v1128 = vadd.f32 %v1123, %v1126
          %v1129 = vadd.f32 %v1124, %v1127
          %v1130 = vstv %s315
          %v1131 = vadd.f32 %v1128, %v1130
          %v1132 = vadd.f32 %v1129, %v1130
          %v1133 = vtanh.pop %v1131
          %v1134 = vtanh.pop %v1132
          %v1135 = vstv %s297
          %v1136 = vmul.f32 %v494, %v1135
          %v1137 = vmul.f32 %v495, %v1135
          %v1138 = vstv %s298
          %v1139 = vmul.f32 %v512, %v1138
          %v1140 = vmul.f32 %v513, %v1138
          %v1141 = vadd.f32 %v1136, %v1139
          %v1142 = vadd.f32 %v1137, %v1140
          %v1143 = vstv %s299
          %v1144 = vmul.f32 %v530, %v1143
          %v1145 = vmul.f32 %v531, %v1143
          %v1146 = vadd.f32 %v1141, %v1144
          %v1147 = vadd.f32 %v1142, %v1145
          %v1148 = vstv %s300
          %v1149 = vmul.f32 %v548, %v1148
          %v1150 = vmul.f32 %v549, %v1148
          %v1151 = vadd.f32 %v1146, %v1149
          %v1152 = vadd.f32 %v1147, %v1150
          %v1153 = vstv %s301
          %v1154 = vmul.f32 %v566, %v1153
          %v1155 = vmul.f32 %v567, %v1153
          %v1156 = vadd.f32 %v1151, %v1154
          %v1157 = vadd.f32 %v1152, %v1155
          %v1158 = vstv %s302
          %v1159 = vmul.f32 %v584, %v1158
          %v1160 = vmul.f32 %v585, %v1158
          %v1161 = vadd.f32 %v1156, %v1159
          %v1162 = vadd.f32 %v1157, %v1160
          %v1163 = vstv %s303
          %v1164 = vmul.f32 %v602, %v1163
          %v1165 = vmul.f32 %v603, %v1163
          %v1166 = vadd.f32 %v1161, %v1164
          %v1167 = vadd.f32 %v1162, %v1165
          %v1168 = vstv %s304
          %v1169 = vmul.f32 %v620, %v1168
          %v1170 = vmul.f32 %v621, %v1168
          %v1171 = vadd.f32 %v1166, %v1169
          %v1172 = vadd.f32 %v1167, %v1170
          %v1173 = vstv %s305
          %v1174 = vmul.f32 %v638, %v1173
          %v1175 = vmul.f32 %v639, %v1173
          %v1176 = vadd.f32 %v1171, %v1174
          %v1177 = vadd.f32 %v1172, %v1175
          %v1178 = vstv %s306
          %v1179 = vmul.f32 %v656, %v1178
          %v1180 = vmul.f32 %v657, %v1178
          %v1181 = vadd.f32 %v1176, %v1179
          %v1182 = vadd.f32 %v1177, %v1180
          %v1183 = vstv %s316
          %v1184 = vadd.f32 %v1181, %v1183
          %v1185 = vadd.f32 %v1182, %v1183
          %v1186 = vtanh.pop %v1184
          %v1187 = vtanh.pop %v1185
          %v1188 = vstv %s317
          %v1189 = vmul.f32 %v709, %v1188
          %v1190 = vmul.f32 %v710, %v1188
          %v1191 = vstv %s318
          %v1192 = vmul.f32 %v762, %v1191
          %v1193 = vmul.f32 %v763, %v1191
          %v1194 = vadd.f32 %v1189, %v1192
          %v1195 = vadd.f32 %v1190, %v1193
          %v1196 = vstv %s319
          %v1197 = vmul.f32 %v815, %v1196
          %v1198 = vmul.f32 %v816, %v1196
          %v1199 = vadd.f32 %v1194, %v1197
          %v1200 = vadd.f32 %v1195, %v1198
          %v1201 = vstv %s320
          %v1202 = vmul.f32 %v868, %v1201
          %v1203 = vmul.f32 %v869, %v1201
          %v1204 = vadd.f32 %v1199, %v1202
          %v1205 = vadd.f32 %v1200, %v1203
          %v1206 = vstv %s321
          %v1207 = vmul.f32 %v921, %v1206
          %v1208 = vmul.f32 %v922, %v1206
          %v1209 = vadd.f32 %v1204, %v1207
          %v1210 = vadd.f32 %v1205, %v1208
          %v1211 = vstv %s322
          %v1212 = vmul.f32 %v974, %v1211
          %v1213 = vmul.f32 %v975, %v1211
          %v1214 = vadd.f32 %v1209, %v1212
          %v1215 = vadd.f32 %v1210, %v1213
          %v1216 = vstv %s323
          %v1217 = vmul.f32 %v1027, %v1216
          %v1218 = vmul.f32 %v1028, %v1216
          %v1219 = vadd.f32 %v1214, %v1217
          %v1220 = vadd.f32 %v1215, %v1218
          %v1221 = vstv %s324
          %v1222 = vmul.f32 %v1080, %v1221
          %v1223 = vmul.f32 %v1081, %v1221
          %v1224 = vadd.f32 %v1219, %v1222
          %v1225 = vadd.f32 %v1220, %v1223
          %v1226 = vstv %s325
          %v1227 = vmul.f32 %v1133, %v1226
          %v1228 = vmul.f32 %v1134, %v1226
          %v1229 = vadd.f32 %v1224, %v1227
          %v1230 = vadd.f32 %v1225, %v1228
          %v1231 = vstv %s326
          %v1232 = vmul.f32 %v1186, %v1231
          %v1233 = vmul.f32 %v1187, %v1231
          %v1234 = vadd.f32 %v1229, %v1232
          %v1235 = vadd.f32 %v1230, %v1233
          %v1236 = vstv %s417
          %v1237 = vadd.f32 %v1234, %v1236
          %v1238 = vadd.f32 %v1235, %v1236
          %v1239 = vtanh.pop %v1237
          %v1240 = vtanh.pop %v1238
          %v1241 = vstv %s327
          %v1242 = vmul.f32 %v709, %v1241
          %v1243 = vmul.f32 %v710, %v1241
          %v1244 = vstv %s328
          %v1245 = vmul.f32 %v762, %v1244
          %v1246 = vmul.f32 %v763, %v1244
          %v1247 = vadd.f32 %v1242, %v1245
          %v1248 = vadd.f32 %v1243, %v1246
          %v1249 = vstv %s329
          %v1250 = vmul.f32 %v815, %v1249
          %v1251 = vmul.f32 %v816, %v1249
          %v1252 = vadd.f32 %v1247, %v1250
          %v1253 = vadd.f32 %v1248, %v1251
          %v1254 = vstv %s330
          %v1255 = vmul.f32 %v868, %v1254
          %v1256 = vmul.f32 %v869, %v1254
          %v1257 = vadd.f32 %v1252, %v1255
          %v1258 = vadd.f32 %v1253, %v1256
          %v1259 = vstv %s331
          %v1260 = vmul.f32 %v921, %v1259
          %v1261 = vmul.f32 %v922, %v1259
          %v1262 = vadd.f32 %v1257, %v1260
          %v1263 = vadd.f32 %v1258, %v1261
          %v1264 = vstv %s332
          %v1265 = vmul.f32 %v974, %v1264
          %v1266 = vmul.f32 %v975, %v1264
          %v1267 = vadd.f32 %v1262, %v1265
          %v1268 = vadd.f32 %v1263, %v1266
          %v1269 = vstv %s333
          %v1270 = vmul.f32 %v1027, %v1269
          %v1271 = vmul.f32 %v1028, %v1269
          %v1272 = vadd.f32 %v1267, %v1270
          %v1273 = vadd.f32 %v1268, %v1271
          %v1274 = vstv %s334
          %v1275 = vmul.f32 %v1080, %v1274
          %v1276 = vmul.f32 %v1081, %v1274
          %v1277 = vadd.f32 %v1272, %v1275
          %v1278 = vadd.f32 %v1273, %v1276
          %v1279 = vstv %s335
          %v1280 = vmul.f32 %v1133, %v1279
          %v1281 = vmul.f32 %v1134, %v1279
          %v1282 = vadd.f32 %v1277, %v1280
          %v1283 = vadd.f32 %v1278, %v1281
          %v1284 = vstv %s336
          %v1285 = vmul.f32 %v1186, %v1284
          %v1286 = vmul.f32 %v1187, %v1284
          %v1287 = vadd.f32 %v1282, %v1285
          %v1288 = vadd.f32 %v1283, %v1286
          %v1289 = vstv %s418
          %v1290 = vadd.f32 %v1287, %v1289
          %v1291 = vadd.f32 %v1288, %v1289
          %v1292 = vtanh.pop %v1290
          %v1293 = vtanh.pop %v1291
          %v1294 = vstv %s337
          %v1295 = vmul.f32 %v709, %v1294
          %v1296 = vmul.f32 %v710, %v1294
          %v1297 = vstv %s338
          %v1298 = vmul.f32 %v762, %v1297
          %v1299 = vmul.f32 %v763, %v1297
          %v1300 = vadd.f32 %v1295, %v1298
          %v1301 = vadd.f32 %v1296, %v1299
          %v1302 = vstv %s339
          %v1303 = vmul.f32 %v815, %v1302
          %v1304 = vmul.f32 %v816, %v1302
          %v1305 = vadd.f32 %v1300, %v1303
          %v1306 = vadd.f32 %v1301, %v1304
          %v1307 = vstv %s340
          %v1308 = vmul.f32 %v868, %v1307
          %v1309 = vmul.f32 %v869, %v1307
          %v1310 = vadd.f32 %v1305, %v1308
          %v1311 = vadd.f32 %v1306, %v1309
          %v1312 = vstv %s341
          %v1313 = vmul.f32 %v921, %v1312
          %v1314 = vmul.f32 %v922, %v1312
          %v1315 = vadd.f32 %v1310, %v1313
          %v1316 = vadd.f32 %v1311, %v1314
          %v1317 = vstv %s342
          %v1318 = vmul.f32 %v974, %v1317
          %v1319 = vmul.f32 %v975, %v1317
          %v1320 = vadd.f32 %v1315, %v1318
          %v1321 = vadd.f32 %v1316, %v1319
          %v1322 = vstv %s343
          %v1323 = vmul.f32 %v1027, %v1322
          %v1324 = vmul.f32 %v1028, %v1322
          %v1325 = vadd.f32 %v1320, %v1323
          %v1326 = vadd.f32 %v1321, %v1324
          %v1327 = vstv %s344
          %v1328 = vmul.f32 %v1080, %v1327
          %v1329 = vmul.f32 %v1081, %v1327
          %v1330 = vadd.f32 %v1325, %v1328
          %v1331 = vadd.f32 %v1326, %v1329
          %v1332 = vstv %s345
          %v1333 = vmul.f32 %v1133, %v1332
          %v1334 = vmul.f32 %v1134, %v1332
          %v1335 = vadd.f32 %v1330, %v1333
          %v1336 = vadd.f32 %v1331, %v1334
          %v1337 = vstv %s346
          %v1338 = vmul.f32 %v1186, %v1337
          %v1339 = vmul.f32 %v1187, %v1337
          %v1340 = vadd.f32 %v1335, %v1338
          %v1341 = vadd.f32 %v1336, %v1339
          %v1342 = vstv %s419
          %v1343 = vadd.f32 %v1340, %v1342
          %v1344 = vadd.f32 %v1341, %v1342
          %v1345 = vtanh.pop %v1343
          %v1346 = vtanh.pop %v1344
          %v1347 = vstv %s347
          %v1348 = vmul.f32 %v709, %v1347
          %v1349 = vmul.f32 %v710, %v1347
          %v1350 = vstv %s348
          %v1351 = vmul.f32 %v762, %v1350
          %v1352 = vmul.f32 %v763, %v1350
          %v1353 = vadd.f32 %v1348, %v1351
          %v1354 = vadd.f32 %v1349, %v1352
          %v1355 = vstv %s349
          %v1356 = vmul.f32 %v815, %v1355
          %v1357 = vmul.f32 %v816, %v1355
          %v1358 = vadd.f32 %v1353, %v1356
          %v1359 = vadd.f32 %v1354, %v1357
          %v1360 = vstv %s350
          %v1361 = vmul.f32 %v868, %v1360
          %v1362 = vmul.f32 %v869, %v1360
          %v1363 = vadd.f32 %v1358, %v1361
          %v1364 = vadd.f32 %v1359, %v1362
          %v1365 = vstv %s351
          %v1366 = vmul.f32 %v921, %v1365
          %v1367 = vmul.f32 %v922, %v1365
          %v1368 = vadd.f32 %v1363, %v1366
          %v1369 = vadd.f32 %v1364, %v1367
          %v1370 = vstv %s352
          %v1371 = vmul.f32 %v974, %v1370
          %v1372 = vmul.f32 %v975, %v1370
          %v1373 = vadd.f32 %v1368, %v1371
          %v1374 = vadd.f32 %v1369, %v1372
          %v1375 = vstv %s353
          %v1376 = vmul.f32 %v1027, %v1375
          %v1377 = vmul.f32 %v1028, %v1375
          %v1378 = vadd.f32 %v1373, %v1376
          %v1379 = vadd.f32 %v1374, %v1377
          %v1380 = vstv %s354
          %v1381 = vmul.f32 %v1080, %v1380
          %v1382 = vmul.f32 %v1081, %v1380
          %v1383 = vadd.f32 %v1378, %v1381
          %v1384 = vadd.f32 %v1379, %v1382
          %v1385 = vstv %s355
          %v1386 = vmul.f32 %v1133, %v1385
          %v1387 = vmul.f32 %v1134, %v1385
          %v1388 = vadd.f32 %v1383, %v1386
          %v1389 = vadd.f32 %v1384, %v1387
          %v1390 = vstv %s356
          %v1391 = vmul.f32 %v1186, %v1390
          %v1392 = vmul.f32 %v1187, %v1390
          %v1393 = vadd.f32 %v1388, %v1391
          %v1394 = vadd.f32 %v1389, %v1392
          %v1395 = vstv %s420
          %v1396 = vadd.f32 %v1393, %v1395
          %v1397 = vadd.f32 %v1394, %v1395
          %v1398 = vtanh.pop %v1396
          %v1399 = vtanh.pop %v1397
          %v1400 = vstv %s357
          %v1401 = vmul.f32 %v709, %v1400
          %v1402 = vmul.f32 %v710, %v1400
          %v1403 = vstv %s358
          %v1404 = vmul.f32 %v762, %v1403
          %v1405 = vmul.f32 %v763, %v1403
          %v1406 = vadd.f32 %v1401, %v1404
          %v1407 = vadd.f32 %v1402, %v1405
          %v1408 = vstv %s359
          %v1409 = vmul.f32 %v815, %v1408
          %v1410 = vmul.f32 %v816, %v1408
          %v1411 = vadd.f32 %v1406, %v1409
          %v1412 = vadd.f32 %v1407, %v1410
          %v1413 = vstv %s360
          %v1414 = vmul.f32 %v868, %v1413
          %v1415 = vmul.f32 %v869, %v1413
          %v1416 = vadd.f32 %v1411, %v1414
          %v1417 = vadd.f32 %v1412, %v1415
          %v1418 = vstv %s361
          %v1419 = vmul.f32 %v921, %v1418
          %v1420 = vmul.f32 %v922, %v1418
          %v1421 = vadd.f32 %v1416, %v1419
          %v1422 = vadd.f32 %v1417, %v1420
          %v1423 = vstv %s362
          %v1424 = vmul.f32 %v974, %v1423
          %v1425 = vmul.f32 %v975, %v1423
          %v1426 = vadd.f32 %v1421, %v1424
          %v1427 = vadd.f32 %v1422, %v1425
          %v1428 = vstv %s363
          %v1429 = vmul.f32 %v1027, %v1428
          %v1430 = vmul.f32 %v1028, %v1428
          %v1431 = vadd.f32 %v1426, %v1429
          %v1432 = vadd.f32 %v1427, %v1430
          %v1433 = vstv %s364
          %v1434 = vmul.f32 %v1080, %v1433
          %v1435 = vmul.f32 %v1081, %v1433
          %v1436 = vadd.f32 %v1431, %v1434
          %v1437 = vadd.f32 %v1432, %v1435
          %v1438 = vstv %s365
          %v1439 = vmul.f32 %v1133, %v1438
          %v1440 = vmul.f32 %v1134, %v1438
          %v1441 = vadd.f32 %v1436, %v1439
          %v1442 = vadd.f32 %v1437, %v1440
          %v1443 = vstv %s366
          %v1444 = vmul.f32 %v1186, %v1443
          %v1445 = vmul.f32 %v1187, %v1443
          %v1446 = vadd.f32 %v1441, %v1444
          %v1447 = vadd.f32 %v1442, %v1445
          %v1448 = vstv %s421
          %v1449 = vadd.f32 %v1446, %v1448
          %v1450 = vadd.f32 %v1447, %v1448
          %v1451 = vtanh.pop %v1449
          %v1452 = vtanh.pop %v1450
          %v1453 = vstv %s367
          %v1454 = vmul.f32 %v709, %v1453
          %v1455 = vmul.f32 %v710, %v1453
          %v1456 = vstv %s368
          %v1457 = vmul.f32 %v762, %v1456
          %v1458 = vmul.f32 %v763, %v1456
          %v1459 = vadd.f32 %v1454, %v1457
          %v1460 = vadd.f32 %v1455, %v1458
          %v1461 = vstv %s369
          %v1462 = vmul.f32 %v815, %v1461
          %v1463 = vmul.f32 %v816, %v1461
          %v1464 = vadd.f32 %v1459, %v1462
          %v1465 = vadd.f32 %v1460, %v1463
          %v1466 = vstv %s370
          %v1467 = vmul.f32 %v868, %v1466
          %v1468 = vmul.f32 %v869, %v1466
          %v1469 = vadd.f32 %v1464, %v1467
          %v1470 = vadd.f32 %v1465, %v1468
          %v1471 = vstv %s371
          %v1472 = vmul.f32 %v921, %v1471
          %v1473 = vmul.f32 %v922, %v1471
          %v1474 = vadd.f32 %v1469, %v1472
          %v1475 = vadd.f32 %v1470, %v1473
          %v1476 = vstv %s372
          %v1477 = vmul.f32 %v974, %v1476
          %v1478 = vmul.f32 %v975, %v1476
          %v1479 = vadd.f32 %v1474, %v1477
          %v1480 = vadd.f32 %v1475, %v1478
          %v1481 = vstv %s373
          %v1482 = vmul.f32 %v1027, %v1481
          %v1483 = vmul.f32 %v1028, %v1481
          %v1484 = vadd.f32 %v1479, %v1482
          %v1485 = vadd.f32 %v1480, %v1483
          %v1486 = vstv %s374
          %v1487 = vmul.f32 %v1080, %v1486
          %v1488 = vmul.f32 %v1081, %v1486
          %v1489 = vadd.f32 %v1484, %v1487
          %v1490 = vadd.f32 %v1485, %v1488
          %v1491 = vstv %s375
          %v1492 = vmul.f32 %v1133, %v1491
          %v1493 = vmul.f32 %v1134, %v1491
          %v1494 = vadd.f32 %v1489, %v1492
          %v1495 = vadd.f32 %v1490, %v1493
          %v1496 = vstv %s376
          %v1497 = vmul.f32 %v1186, %v1496
          %v1498 = vmul.f32 %v1187, %v1496
          %v1499 = vadd.f32 %v1494, %v1497
          %v1500 = vadd.f32 %v1495, %v1498
          %v1501 = vstv %s422
          %v1502 = vadd.f32 %v1499, %v1501
          %v1503 = vadd.f32 %v1500, %v1501
          %v1504 = vtanh.pop %v1502
          %v1505 = vtanh.pop %v1503
          %v1506 = vstv %s377
          %v1507 = vmul.f32 %v709, %v1506
          %v1508 = vmul.f32 %v710, %v1506
          %v1509 = vstv %s378
          %v1510 = vmul.f32 %v762, %v1509
          %v1511 = vmul.f32 %v763, %v1509
          %v1512 = vadd.f32 %v1507, %v1510
          %v1513 = vadd.f32 %v1508, %v1511
          %v1514 = vstv %s379
          %v1515 = vmul.f32 %v815, %v1514
          %v1516 = vmul.f32 %v816, %v1514
          %v1517 = vadd.f32 %v1512, %v1515
          %v1518 = vadd.f32 %v1513, %v1516
          %v1519 = vstv %s380
          %v1520 = vmul.f32 %v868, %v1519
          %v1521 = vmul.f32 %v869, %v1519
          %v1522 = vadd.f32 %v1517, %v1520
          %v1523 = vadd.f32 %v1518, %v1521
          %v1524 = vstv %s381
          %v1525 = vmul.f32 %v921, %v1524
          %v1526 = vmul.f32 %v922, %v1524
          %v1527 = vadd.f32 %v1522, %v1525
          %v1528 = vadd.f32 %v1523, %v1526
          %v1529 = vstv %s382
          %v1530 = vmul.f32 %v974, %v1529
          %v1531 = vmul.f32 %v975, %v1529
          %v1532 = vadd.f32 %v1527, %v1530
          %v1533 = vadd.f32 %v1528, %v1531
          %v1534 = vstv %s383
          %v1535 = vmul.f32 %v1027, %v1534
          %v1536 = vmul.f32 %v1028, %v1534
          %v1537 = vadd.f32 %v1532, %v1535
          %v1538 = vadd.f32 %v1533, %v1536
          %v1539 = vstv %s384
          %v1540 = vmul.f32 %v1080, %v1539
          %v1541 = vmul.f32 %v1081, %v1539
          %v1542 = vadd.f32 %v1537, %v1540
          %v1543 = vadd.f32 %v1538, %v1541
          %v1544 = vstv %s385
          %v1545 = vmul.f32 %v1133, %v1544
          %v1546 = vmul.f32 %v1134, %v1544
          %v1547 = vadd.f32 %v1542, %v1545
          %v1548 = vadd.f32 %v1543, %v1546
          %v1549 = vstv %s386
          %v1550 = vmul.f32 %v1186, %v1549
          %v1551 = vmul.f32 %v1187, %v1549
          %v1552 = vadd.f32 %v1547, %v1550
          %v1553 = vadd.f32 %v1548, %v1551
          %v1554 = vstv %s423
          %v1555 = vadd.f32 %v1552, %v1554
          %v1556 = vadd.f32 %v1553, %v1554
          %v1557 = vtanh.pop %v1555
          %v1558 = vtanh.pop %v1556
          %v1559 = vstv %s387
          %v1560 = vmul.f32 %v709, %v1559
          %v1561 = vmul.f32 %v710, %v1559
          %v1562 = vstv %s388
          %v1563 = vmul.f32 %v762, %v1562
          %v1564 = vmul.f32 %v763, %v1562
          %v1565 = vadd.f32 %v1560, %v1563
          %v1566 = vadd.f32 %v1561, %v1564
          %v1567 = vstv %s389
          %v1568 = vmul.f32 %v815, %v1567
          %v1569 = vmul.f32 %v816, %v1567
          %v1570 = vadd.f32 %v1565, %v1568
          %v1571 = vadd.f32 %v1566, %v1569
          %v1572 = vstv %s390
          %v1573 = vmul.f32 %v868, %v1572
          %v1574 = vmul.f32 %v869, %v1572
          %v1575 = vadd.f32 %v1570, %v1573
          %v1576 = vadd.f32 %v1571, %v1574
          %v1577 = vstv %s391
          %v1578 = vmul.f32 %v921, %v1577
          %v1579 = vmul.f32 %v922, %v1577
          %v1580 = vadd.f32 %v1575, %v1578
          %v1581 = vadd.f32 %v1576, %v1579
          %v1582 = vstv %s392
          %v1583 = vmul.f32 %v974, %v1582
          %v1584 = vmul.f32 %v975, %v1582
          %v1585 = vadd.f32 %v1580, %v1583
          %v1586 = vadd.f32 %v1581, %v1584
          %v1587 = vstv %s393
          %v1588 = vmul.f32 %v1027, %v1587
          %v1589 = vmul.f32 %v1028, %v1587
          %v1590 = vadd.f32 %v1585, %v1588
          %v1591 = vadd.f32 %v1586, %v1589
          %v1592 = vstv %s394
          %v1593 = vmul.f32 %v1080, %v1592
          %v1594 = vmul.f32 %v1081, %v1592
          %v1595 = vadd.f32 %v1590, %v1593
          %v1596 = vadd.f32 %v1591, %v1594
          %v1597 = vstv %s395
          %v1598 = vmul.f32 %v1133, %v1597
          %v1599 = vmul.f32 %v1134, %v1597
          %v1600 = vadd.f32 %v1595, %v1598
          %v1601 = vadd.f32 %v1596, %v1599
          %v1602 = vstv %s396
          %v1603 = vmul.f32 %v1186, %v1602
          %v1604 = vmul.f32 %v1187, %v1602
          %v1605 = vadd.f32 %v1600, %v1603
          %v1606 = vadd.f32 %v1601, %v1604
          %v1607 = vstv %s424
          %v1608 = vadd.f32 %v1605, %v1607
          %v1609 = vadd.f32 %v1606, %v1607
          %v1610 = vtanh.pop %v1608
          %v1611 = vtanh.pop %v1609
          %v1612 = vstv %s397
          %v1613 = vmul.f32 %v709, %v1612
          %v1614 = vmul.f32 %v710, %v1612
          %v1615 = vstv %s398
          %v1616 = vmul.f32 %v762, %v1615
          %v1617 = vmul.f32 %v763, %v1615
          %v1618 = vadd.f32 %v1613, %v1616
          %v1619 = vadd.f32 %v1614, %v1617
          %v1620 = vstv %s399
          %v1621 = vmul.f32 %v815, %v1620
          %v1622 = vmul.f32 %v816, %v1620
          %v1623 = vadd.f32 %v1618, %v1621
          %v1624 = vadd.f32 %v1619, %v1622
          %v1625 = vstv %s400
          %v1626 = vmul.f32 %v868, %v1625
          %v1627 = vmul.f32 %v869, %v1625
          %v1628 = vadd.f32 %v1623, %v1626
          %v1629 = vadd.f32 %v1624, %v1627
          %v1630 = vstv %s401
          %v1631 = vmul.f32 %v921, %v1630
          %v1632 = vmul.f32 %v922, %v1630
          %v1633 = vadd.f32 %v1628, %v1631
          %v1634 = vadd.f32 %v1629, %v1632
          %v1635 = vstv %s402
          %v1636 = vmul.f32 %v974, %v1635
          %v1637 = vmul.f32 %v975, %v1635
          %v1638 = vadd.f32 %v1633, %v1636
          %v1639 = vadd.f32 %v1634, %v1637
          %v1640 = vstv %s403
          %v1641 = vmul.f32 %v1027, %v1640
          %v1642 = vmul.f32 %v1028, %v1640
          %v1643 = vadd.f32 %v1638, %v1641
          %v1644 = vadd.f32 %v1639, %v1642
          %v1645 = vstv %s404
          %v1646 = vmul.f32 %v1080, %v1645
          %v1647 = vmul.f32 %v1081, %v1645
          %v1648 = vadd.f32 %v1643, %v1646
          %v1649 = vadd.f32 %v1644, %v1647
          %v1650 = vstv %s405
          %v1651 = vmul.f32 %v1133, %v1650
          %v1652 = vmul.f32 %v1134, %v1650
          %v1653 = vadd.f32 %v1648, %v1651
          %v1654 = vadd.f32 %v1649, %v1652
          %v1655 = vstv %s406
          %v1656 = vmul.f32 %v1186, %v1655
          %v1657 = vmul.f32 %v1187, %v1655
          %v1658 = vadd.f32 %v1653, %v1656
          %v1659 = vadd.f32 %v1654, %v1657
          %v1660 = vstv %s425
          %v1661 = vadd.f32 %v1658, %v1660
          %v1662 = vadd.f32 %v1659, %v1660
          %v1663 = vtanh.pop %v1661
          %v1664 = vtanh.pop %v1662
          %v1665 = vstv %s407
          %v1666 = vmul.f32 %v709, %v1665
          %v1667 = vmul.f32 %v710, %v1665
          %v1668 = vstv %s408
          %v1669 = vmul.f32 %v762, %v1668
          %v1670 = vmul.f32 %v763, %v1668
          %v1671 = vadd.f32 %v1666, %v1669
          %v1672 = vadd.f32 %v1667, %v1670
          %v1673 = vstv %s409
          %v1674 = vmul.f32 %v815, %v1673
          %v1675 = vmul.f32 %v816, %v1673
          %v1676 = vadd.f32 %v1671, %v1674
          %v1677 = vadd.f32 %v1672, %v1675
          %v1678 = vstv %s410
          %v1679 = vmul.f32 %v868, %v1678
          %v1680 = vmul.f32 %v869, %v1678
          %v1681 = vadd.f32 %v1676, %v1679
          %v1682 = vadd.f32 %v1677, %v1680
          %v1683 = vstv %s411
          %v1684 = vmul.f32 %v921, %v1683
          %v1685 = vmul.f32 %v922, %v1683
          %v1686 = vadd.f32 %v1681, %v1684
          %v1687 = vadd.f32 %v1682, %v1685
          %v1688 = vstv %s412
          %v1689 = vmul.f32 %v974, %v1688
          %v1690 = vmul.f32 %v975, %v1688
          %v1691 = vadd.f32 %v1686, %v1689
          %v1692 = vadd.f32 %v1687, %v1690
          %v1693 = vstv %s413
          %v1694 = vmul.f32 %v1027, %v1693
          %v1695 = vmul.f32 %v1028, %v1693
          %v1696 = vadd.f32 %v1691, %v1694
          %v1697 = vadd.f32 %v1692, %v1695
          %v1698 = vstv %s414
          %v1699 = vmul.f32 %v1080, %v1698
          %v1700 = vmul.f32 %v1081, %v1698
          %v1701 = vadd.f32 %v1696, %v1699
          %v1702 = vadd.f32 %v1697, %v1700
          %v1703 = vstv %s415
          %v1704 = vmul.f32 %v1133, %v1703
          %v1705 = vmul.f32 %v1134, %v1703
          %v1706 = vadd.f32 %v1701, %v1704
          %v1707 = vadd.f32 %v1702, %v1705
          %v1708 = vstv %s416
          %v1709 = vmul.f32 %v1186, %v1708
          %v1710 = vmul.f32 %v1187, %v1708
          %v1711 = vadd.f32 %v1706, %v1709
          %v1712 = vadd.f32 %v1707, %v1710
          %v1713 = vstv %s426
          %v1714 = vadd.f32 %v1711, %v1713
          %v1715 = vadd.f32 %v1712, %v1713
          %v1716 = vtanh.pop %v1714
          %v1717 = vtanh.pop %v1715
          %v1718 = vstv %s427
          %v1719 = vmul.f32 %v1239, %v1718
          %v1720 = vmul.f32 %v1240, %v1718
          %v1721 = vstv %s428
          %v1722 = vmul.f32 %v1292, %v1721
          %v1723 = vmul.f32 %v1293, %v1721
          %v1724 = vadd.f32 %v1719, %v1722
          %v1725 = vadd.f32 %v1720, %v1723
          %v1726 = vstv %s429
          %v1727 = vmul.f32 %v1345, %v1726
          %v1728 = vmul.f32 %v1346, %v1726
          %v1729 = vadd.f32 %v1724, %v1727
          %v1730 = vadd.f32 %v1725, %v1728
          %v1731 = vstv %s430
          %v1732 = vmul.f32 %v1398, %v1731
          %v1733 = vmul.f32 %v1399, %v1731
          %v1734 = vadd.f32 %v1729, %v1732
          %v1735 = vadd.f32 %v1730, %v1733
          %v1736 = vstv %s431
          %v1737 = vmul.f32 %v1451, %v1736
          %v1738 = vmul.f32 %v1452, %v1736
          %v1739 = vadd.f32 %v1734, %v1737
          %v1740 = vadd.f32 %v1735, %v1738
          %v1741 = vstv %s432
          %v1742 = vmul.f32 %v1504, %v1741
          %v1743 = vmul.f32 %v1505, %v1741
          %v1744 = vadd.f32 %v1739, %v1742
          %v1745 = vadd.f32 %v1740, %v1743
          %v1746 = vstv %s433
          %v1747 = vmul.f32 %v1557, %v1746
          %v1748 = vmul.f32 %v1558, %v1746
          %v1749 = vadd.f32 %v1744, %v1747
          %v1750 = vadd.f32 %v1745, %v1748
          %v1751 = vstv %s434
          %v1752 = vmul.f32 %v1610, %v1751
          %v1753 = vmul.f32 %v1611, %v1751
          %v1754 = vadd.f32 %v1749, %v1752
          %v1755 = vadd.f32 %v1750, %v1753
          %v1756 = vstv %s435
          %v1757 = vmul.f32 %v1663, %v1756
          %v1758 = vmul.f32 %v1664, %v1756
          %v1759 = vadd.f32 %v1754, %v1757
          %v1760 = vadd.f32 %v1755, %v1758
          %v1761 = vstv %s436
          %v1762 = vmul.f32 %v1716, %v1761
          %v1763 = vmul.f32 %v1717, %v1761
          %v1764 = vadd.f32 %v1759, %v1762
          %v1765 = vadd.f32 %v1760, %v1763
          %v1766 = vstv %s457
          %v1767 = vadd.f32 %v1764, %v1766
          %v1768 = vadd.f32 %v1765, %v1766
          %v1769 = vstv %s437
          %v1770 = vmul.f32 %v1239, %v1769
          %v1771 = vmul.f32 %v1240, %v1769
          %v1772 = vstv %s438
          %v1773 = vmul.f32 %v1292, %v1772
          %v1774 = vmul.f32 %v1293, %v1772
          %v1775 = vadd.f32 %v1770, %v1773
          %v1776 = vadd.f32 %v1771, %v1774
          %v1777 = vstv %s439
          %v1778 = vmul.f32 %v1345, %v1777
          %v1779 = vmul.f32 %v1346, %v1777
          %v1780 = vadd.f32 %v1775, %v1778
          %v1781 = vadd.f32 %v1776, %v1779
          %v1782 = vstv %s440
          %v1783 = vmul.f32 %v1398, %v1782
          %v1784 = vmul.f32 %v1399, %v1782
          %v1785 = vadd.f32 %v1780, %v1783
          %v1786 = vadd.f32 %v1781, %v1784
          %v1787 = vstv %s441
          %v1788 = vmul.f32 %v1451, %v1787
          %v1789 = vmul.f32 %v1452, %v1787
          %v1790 = vadd.f32 %v1785, %v1788
          %v1791 = vadd.f32 %v1786, %v1789
          %v1792 = vstv %s442
          %v1793 = vmul.f32 %v1504, %v1792
          %v1794 = vmul.f32 %v1505, %v1792
          %v1795 = vadd.f32 %v1790, %v1793
          %v1796 = vadd.f32 %v1791, %v1794
          %v1797 = vstv %s443
          %v1798 = vmul.f32 %v1557, %v1797
          %v1799 = vmul.f32 %v1558, %v1797
          %v1800 = vadd.f32 %v1795, %v1798
          %v1801 = vadd.f32 %v1796, %v1799
          %v1802 = vstv %s444
          %v1803 = vmul.f32 %v1610, %v1802
          %v1804 = vmul.f32 %v1611, %v1802
          %v1805 = vadd.f32 %v1800, %v1803
          %v1806 = vadd.f32 %v1801, %v1804
          %v1807 = vstv %s445
          %v1808 = vmul.f32 %v1663, %v1807
          %v1809 = vmul.f32 %v1664, %v1807
          %v1810 = vadd.f32 %v1805, %v1808
          %v1811 = vadd.f32 %v1806, %v1809
          %v1812 = vstv %s446
          %v1813 = vmul.f32 %v1716, %v1812
          %v1814 = vmul.f32 %v1717, %v1812
          %v1815 = vadd.f32 %v1810, %v1813
          %v1816 = vadd.f32 %v1811, %v1814
          %v1817 = vstv %s458
          %v1818 = vadd.f32 %v1815, %v1817
          %v1819 = vadd.f32 %v1816, %v1817
          %v1820 = vstv %s447
          %v1821 = vmul.f32 %v1239, %v1820
          %v1822 = vmul.f32 %v1240, %v1820
          %v1823 = vstv %s448
          %v1824 = vmul.f32 %v1292, %v1823
          %v1825 = vmul.f32 %v1293, %v1823
          %v1826 = vadd.f32 %v1821, %v1824
          %v1827 = vadd.f32 %v1822, %v1825
          %v1828 = vstv %s449
          %v1829 = vmul.f32 %v1345, %v1828
          %v1830 = vmul.f32 %v1346, %v1828
          %v1831 = vadd.f32 %v1826, %v1829
          %v1832 = vadd.f32 %v1827, %v1830
          %v1833 = vstv %s450
          %v1834 = vmul.f32 %v1398, %v1833
          %v1835 = vmul.f32 %v1399, %v1833
          %v1836 = vadd.f32 %v1831, %v1834
          %v1837 = vadd.f32 %v1832, %v1835
          %v1838 = vstv %s451
          %v1839 = vmul.f32 %v1451, %v1838
          %v1840 = vmul.f32 %v1452, %v1838
          %v1841 = vadd.f32 %v1836, %v1839
          %v1842 = vadd.f32 %v1837, %v1840
          %v1843 = vstv %s452
          %v1844 = vmul.f32 %v1504, %v1843
          %v1845 = vmul.f32 %v1505, %v1843
          %v1846 = vadd.f32 %v1841, %v1844
          %v1847 = vadd.f32 %v1842, %v1845
          %v1848 = vstv %s453
          %v1849 = vmul.f32 %v1557, %v1848
          %v1850 = vmul.f32 %v1558, %v1848
          %v1851 = vadd.f32 %v1846, %v1849
          %v1852 = vadd.f32 %v1847, %v1850
          %v1853 = vstv %s454
          %v1854 = vmul.f32 %v1610, %v1853
          %v1855 = vmul.f32 %v1611, %v1853
          %v1856 = vadd.f32 %v1851, %v1854
          %v1857 = vadd.f32 %v1852, %v1855
          %v1858 = vstv %s455
          %v1859 = vmul.f32 %v1663, %v1858
          %v1860 = vmul.f32 %v1664, %v1858
          %v1861 = vadd.f32 %v1856, %v1859
          %v1862 = vadd.f32 %v1857, %v1860
          %v1863 = vstv %s456
          %v1864 = vmul.f32 %v1716, %v1863
          %v1865 = vmul.f32 %v1717, %v1863
          %v1866 = vadd.f32 %v1861, %v1864
          %v1867 = vadd.f32 %v1862, %v1865
          %v1868 = vstv %s459
          %v1869 = vadd.f32 %v1866, %v1868
          %v1870 = vadd.f32 %v1867, %v1868
          %s1871 = scalar_lea.vmem %s164, %s466 [#allocation7]
          %1872 = vst [vmem:[%s1871] sm:$0xff] %v1767
          %1873 = vst [vmem:[%s1871 + $0x8] sm:$0xff] %v1768
          %s1874 = scalar_lea.vmem %s164, %s470 [#allocation7]
          %1875 = vst [vmem:[%s1874] sm:$0xff] %v1818
          %1876 = vst [vmem:[%s1874 + $0x8] sm:$0xff] %v1819
          %s1877 = scalar_lea.vmem %s164, %s474 [#allocation7]
          %1878 = vst [vmem:[%s1877] sm:$0xff] %v1869
          %1879 = vst [vmem:[%s1877 + $0x8] sm:$0xff] %v1870
        $region33: #{tpu_custom_call.1} parent=23 // loop_footer
          %s465 = sadd.s32 1, %s461
        $region34: #{tpu_custom_call.1} parent=23 // loop_footer_branch
          %460 = sbr.rel target = $region30
        $region35: #{tpu_custom_call.1} parent=23 // loop_exit
          _
        %s1880 = sand.u32 %s57, 1
        %s1881 = scalar_lea.sflag [#allocation6], %s1880
        %s1882 = sand.u32 %s57, 1
        %s1883 = smul.addr %s1882, 96
        %s1884 = scalar_lea.vmem [#allocation7], %s1883
        // Predicated region
        $region36: #{tpu_custom_call.1} parent=23 // pred_check
          %p1885 = pneg %p67
        $region37: #{tpu_custom_call.1} parent=23 // pred_check_branch
          %1887 = sbr.rel (%p1885) target = $region39
        $region38: #{tpu_custom_call.1} parent=23 // pred_region
          #allocation11 [shape = 'u32[6]{0}', space=smem, size = 0x18, scoped, tag = 'DMA stride descriptor']
          %s1888 = smul.u32 4, %s23
          %s1890 = ssub.s32 1536, 1536
          %1891 = vsyncadd %s1881, %s1890
          %s1892 = smul.addr %s1888, 128
          %s1893 = scalar_lea.hbm %s2, %s1892
          %s1895 = sshll.u32 1, 14
          %s1896 = sxor.u32 4294967295, %s1895
          %s1899 = sshll.u32 7, 18
          %s1900 = sxor.u32 4294967295, %s1899
          %s1901 = sand.u32 0, %s1900
          %s1903 = sor.u32 %s1901, 0
          %s1905 = sshll.u32 3, 24
          %s1906 = sxor.u32 4294967295, %s1905
          %s1907 = sand.u32 %s1903, %s1906
          %s1909 = sor.u32 %s1907, 0
          %s1910 = sshll.u32 %s1884, 4
          %s1911 = int_to_ptr.vmem [resolvable:$true] %s1910
          %1917 = sst [smem:[#allocation11]] 512
          %s1918 = scalar_lea.smem [#allocation11], 1
          %1919 = sst [smem:[%s1918]] 1024
          %s1920 = scalar_lea.smem [#allocation11], 2
          %1921 = sst [smem:[%s1920]] 4
          %s1922 = scalar_lea.smem [#allocation11], 3
          %1923 = sst [smem:[%s1922]] 128
          %s1924 = scalar_lea.smem [#allocation11], 4
          %1925 = sst [smem:[%s1924]] 128
          %s1926 = scalar_lea.smem [#allocation11], 5
          %1927 = sst [smem:[%s1926]] 8
          %1929 = dma.general %s1911, 1536, %s1893, %s1881, [#allocation10], [#allocation11], %s1909, 0
        $region39: #{tpu_custom_call.1} parent=23 // pred_fallthru
          _
      $region24: #{tpu_custom_call.1} parent=5 // pred_fallthru
        _
      %p1930 = scmp.le.s32.totalorder 2, %s18
      // Predicated region
      $region40: #{tpu_custom_call.1} parent=5 // pred_check
        %p1931 = pneg %p1930
      $region41: #{tpu_custom_call.1} parent=5 // pred_check_branch
        %1933 = sbr.rel (%p1931) target = $region43
      $region42: #{tpu_custom_call.1} parent=5 // pred_region
        %s1934 = ssub.s32 %s18, 2
        // Predicated region
        $region44: #{tpu_custom_call.1} parent=42 // pred_check
          %p1935 = pneg %p73
        $region45: #{tpu_custom_call.1} parent=42 // pred_check_branch
          %1937 = sbr.rel (%p1935) target = $region47
        $region46: #{tpu_custom_call.1} parent=42 // pred_region
          %s1938 = sand.u32 %s58, 1
          %s1939 = scalar_lea.sflag [#allocation6], %s1938
          %s1940 = sand.u32 %s58, 1
          %s1941 = smul.addr %s1940, 96
          %s1942 = scalar_lea.vmem [#allocation7], %s1941
          %1943 = dma.done %s1939, 1536
        $region47: #{tpu_custom_call.1} parent=42 // pred_fallthru
          _
      $region43: #{tpu_custom_call.1} parent=5 // pred_fallthru
        _
    $region6: #{tpu_custom_call.1} parent=1 // loop_footer
      %s22 = sadd.s32 1, %s18
    $region7: #{tpu_custom_call.1} parent=1 // loop_footer_branch
      %17 = sbr.rel target = $region3
    $region8: #{tpu_custom_call.1} parent=1 // loop_exit
      _
    %1944 = vsyncpa [#allocation5], 1
    %s1945 = scalar_lea.sflag [#allocation5], 1
    %1946 = vsyncpa %s1945, 1
    %1947 = vsyncpa [#allocation6], 1
    %s1948 = scalar_lea.sflag [#allocation6], 1
    %1949 = vsyncpa %s1948, 1

</llo_original>
